<compile_context>
chip_gen: v7x
topology: tpu7x:2x2x1
jax: 0.10.0
libtpu: 0.0.40
codegen_flags: <defaults>
</compile_context>

<pallas_src>
import functools

import jax
import jax.numpy as jnp
from jax import lax
from jax.experimental import pallas as pl
from jax.experimental.pallas import tpu as pltpu

EPS = 1e-5
VMEM_LIMIT = 32 * 1024 * 1024


def _select_tiles():
    """Per-generation tile preferences (TM, TK, TN)."""
    try:
        kind = jax.devices()[0].device_kind.lower()
    except Exception:
        kind = ""
    if "v5 lite" in kind or "v5e" in kind or "v5litepod" in kind:
        # v5e MXU is 4x128x128 -> 128-wide N already fills it; lowest HBM BW,
        # so lean on traffic reduction rather than tile enlargement.
        return 512, 1024, 128
    # v6e / v7x MXU is 2x256x256 -> 256-wide N tiles fill the array.
    return 512, 1024, 256


TM, TK, TN = _select_tiles()


# ------------------------------ small helpers -------------------------------

def _round_up(x, m):
    return ((x + m - 1) // m) * m


def _tile(dim, pref, mult):
    """Return (padded_dim, block) with block | padded_dim, TPU-friendly."""
    if dim <= pref:
        p = _round_up(dim, mult)
        return p, p
    return _round_up(dim, pref), pref


def _pad2(x, mp, np_):
    m, n = x.shape
    if (m, n) == (mp, np_):
        return x
    return jnp.pad(x, ((0, mp - m), (0, np_ - n)))


def _act(y, act):
    if act == "relu":
        return jnp.maximum(y, 0.0)
    if act == "leaky":
        return jnp.where(y >= 0.0, y, 0.2 * y)
    if act == "tanh":
        return jnp.tanh(y)
    return y


# ----------------------------- Pallas kernels -------------------------------
# NOTE: pl.program_id / pl.num_programs only appear at kernel top level (as
# pl.when *conditions*), never inside pl.when bodies.

def _mm_act_kernel(a_ref, b_ref, o_ref, acc_ref, *, act):
    """Tiled matmul, f32 VMEM accumulator, fused activation, bf16 store."""
    k = pl.program_id(2)

    @pl.when(k == 0)
    def _():
        acc_ref[...] = jnp.zeros_like(acc_ref)

    acc_ref[...] += jnp.dot(a_ref[...], b_ref[...],
                            preferred_element_type=jnp.float32)

    @pl.when(k == pl.num_programs(2) - 1)
    def _():
        o_ref[...] = _act(acc_ref[...], act).astype(o_ref.dtype)


def _mm_act_add_kernel(a_ref, b_ref, add_ref, o_ref, acc_ref, *, act):
    """As _mm_act_kernel, plus a post-activation add of a (bm, 128) slab whose
    columns 1..127 are zero (fused reconstruct(x) into global column 0)."""
    k = pl.program_id(2)

    @pl.when(k == 0)
    def _():
        acc_ref[...] = jnp.zeros_like(acc_ref)

    acc_ref[...] += jnp.dot(a_ref[...], b_ref[...],
                            preferred_element_type=jnp.float32)

    @pl.when(k == pl.num_programs(2) - 1)
    def _():
        y = _act(acc_ref[...], act) + add_ref[...]
        o_ref[...] = y.astype(o_ref.dtype)


def _mm_stats_kernel(a_ref, b_ref, o_ref, st_ref, acc_ref):
    """Tiled matmul; epilogue stores bf16 tile + f32 per-channel sum / sum-sq
    partials (rows 0 and 1 of an (8, bn) stats block, rest zero)."""
    k = pl.program_id(2)

    @pl.when(k == 0)
    def _():
        acc_ref[...] = jnp.zeros_like(acc_ref)

    acc_ref[...] += jnp.dot(a_ref[...], b_ref[...],
                            preferred_element_type=jnp.float32)

    @pl.when(k == pl.num_programs(2) - 1)
    def _():
        y = acc_ref[...]
        o_ref[...] = y.astype(o_ref.dtype)
        s1 = jnp.sum(y, axis=0, keepdims=True)
        s2 = jnp.sum(y * y, axis=0, keepdims=True)
        pad = jnp.zeros((6, s1.shape[-1]), jnp.float32)
        st_ref[...] = jnp.concatenate([s1, s2, pad], axis=0)


def _affine_act_kernel(y_ref, s_ref, t_ref, o_ref, *, act):
    """BatchNorm apply (pre-folded scale/shift) + activation; bf16 in/out."""
    y = y_ref[...].astype(jnp.float32)
    o_ref[...] = _act(y * s_ref[...] + t_ref[...], act).astype(o_ref.dtype)


# --------------------------- fused matmul wrapper ---------------------------

def fused_matmul(a, b, *, act="none", gamma=None, beta=None, add_col=None):
    """(M,K)@(K,N) conv-as-matmul with fused epilogue.  Returns bf16 (M,N).

    add_col: optional (M,) f32 vector added to output column 0 *after* the
    activation (fuses reconstruct(x) into the final 1-D decoder layer).
    """
    M, K = a.shape
    _, N = b.shape
    Mp, bm = _tile(M, TM, 16)
    Kp, bk = _tile(K, TK, 128)
    Np, bn = _tile(N, TN, 128)
    # v7x has 2 TensorCores; give the second one a tile when the layer would
    # otherwise compile to a (1, 1, k) grid.
    if Mp // bm == 1 and Np // bn == 1 and bm % 32 == 0 and bm >= 256:
        bm //= 2

    a_p = _pad2(a.astype(jnp.bfloat16), Mp, Kp)
    b_p = _pad2(b.astype(jnp.bfloat16), Kp, Np)
    grid = (Mp // bm, Np // bn, Kp // bk)
    nmt = grid[0]

    a_spec = pl.BlockSpec((bm, bk), lambda i, j, k: (i, k))
    b_spec = pl.BlockSpec((bk, bn), lambda i, j, k: (k, j))
    o_spec = pl.BlockSpec((bm, bn), lambda i, j, k: (i, j))
    mm_params = pltpu.CompilerParams(
        dimension_semantics=("parallel", "parallel", "arbitrary"),
        vmem_limit_bytes=VMEM_LIMIT)
    mm_cost = pl.CostEstimate(
        flops=2 * Mp * Np * Kp,
        transcendentals=Mp * Np if act == "tanh" else 0,
        bytes_accessed=(Mp * Kp + Kp * Np) * 2 + Mp * Np * 2)

    add_fused = False
    if gamma is None:
        if add_col is not None and Np == 128:
            # reconstruct(x) lives in global column 0 only -> lane-dense
            # (Mp, 128) slab, fetched once per M tile, plain add in epilogue.
            addm = jnp.zeros((Mp, 128), jnp.float32)
            addm = addm.at[:M, 0].set(add_col.astype(jnp.float32))
            out = pl.pallas_call(
                functools.partial(_mm_act_add_kernel, act=act),
                out_shape=jax.ShapeDtypeStruct((Mp, Np), jnp.bfloat16),
                grid=grid,
                in_specs=[a_spec, b_spec,
                          pl.BlockSpec((bm, 128), lambda i, j, k: (i, 0))],
                out_specs=o_spec,
                scratch_shapes=[pltpu.VMEM((bm, bn), jnp.float32)],
                compiler_params=mm_params, cost_estimate=mm_cost,
            )(a_p, b_p, addm)
            add_fused = True
        else:
            out = pl.pallas_call(
                functools.partial(_mm_act_kernel, act=act),
                out_shape=jax.ShapeDtypeStruct((Mp, Np), jnp.bfloat16),
                grid=grid, in_specs=[a_spec, b_spec], out_specs=o_spec,
                scratch_shapes=[pltpu.VMEM((bm, bn), jnp.float32)],
                compiler_params=mm_params, cost_estimate=mm_cost,
            )(a_p, b_p)
    else:
        # BatchNorm path: pass 1 = matmul + exact per-channel sum / sum-sq
        # partials from the f32 accumulator (grid M axis stays parallel);
        # tiny XLA fold with gamma/beta; pass 2 = bf16 normalize+affine+act.
        # TODO(synk): could fold scale/shift+act into the next layer's A-tile
        # load to remove one full activation write+read.
        y_p, stats = pl.pallas_call(
            _mm_stats_kernel,
            out_shape=(jax.ShapeDtypeStruct((Mp, Np), jnp.bfloat16),
                       jax.ShapeDtypeStruct((nmt * 8, Np), jnp.float32)),
            grid=grid, in_specs=[a_spec, b_spec],
            out_specs=(o_spec, pl.BlockSpec((8, bn), lambda i, j, k: (i, j))),
            scratch_shapes=[pltpu.VMEM((bm, bn), jnp.float32)],
            compiler_params=mm_params, cost_estimate=mm_cost,
        )(a_p, b_p)

        st = stats.reshape(nmt, 8, Np)
        s1 = jnp.sum(st[:, 0, :], axis=0)
        s2 = jnp.sum(st[:, 1, :], axis=0)
        mean = s1 / M                                  # padded rows are zeros
        var = jnp.maximum(s2 / M - mean * mean, 0.0)   # biased var (training)
        g = jnp.pad(gamma.astype(jnp.float32), (0, Np - N))   # pad gamma = 0
        bt = jnp.pad(beta.astype(jnp.float32), (0, Np - N))
        scale = g * lax.rsqrt(var + EPS)
        shift = bt - mean * scale

        out = pl.pallas_call(
            functools.partial(_affine_act_kernel, act=act),
            out_shape=jax.ShapeDtypeStruct((Mp, Np), jnp.bfloat16),
            grid=(grid[0], grid[1]),
            in_specs=[pl.BlockSpec((bm, bn), lambda i, j: (i, j)),
                      pl.BlockSpec((1, bn), lambda i, j: (0, j)),
                      pl.BlockSpec((1, bn), lambda i, j: (0, j))],
            out_specs=pl.BlockSpec((bm, bn), lambda i, j: (i, j)),
            compiler_params=pltpu.CompilerParams(
                dimension_semantics=("parallel", "parallel"),
                vmem_limit_bytes=VMEM_LIMIT),
        )(y_p, scale.reshape(1, Np), shift.reshape(1, Np))

    out = out[:M, :N]
    if add_col is not None and not add_fused:
        out = out.at[:, 0].add(add_col.astype(out.dtype))
    return out


# ----------------------- conv lowering (channels-last) ----------------------
# Activations are carried channels-last: (B, L, C) / (B, H, W, C).
# Patches come from lax.conv_general_dilated_patches (single copy; its output
# feature ordering is channel-major = (c, tap), matching the weight reshapes).
# TODO(synk): in-kernel strided patch gather would remove the remaining K-fold
# HBM amplification of the patches tensor.

def conv1d_cl(x, W, stride, pad, gamma=None, beta=None, act="none",
              add_col=None):
    B, _, Cin = x.shape
    Cout, _, K = W.shape
    patches = lax.conv_general_dilated_patches(
        x.astype(jnp.bfloat16), (K,), (stride,), [(pad, pad)],
        dimension_numbers=("NWC", "WIO", "NWC"))          # (B, Lout, Cin*K)
    _, Lout, _ = patches.shape
    Wm = W.transpose(1, 2, 0).reshape(Cin * K, Cout)
    y = fused_matmul(patches.reshape(B * Lout, Cin * K), Wm,
                     act=act, gamma=gamma, beta=beta, add_col=add_col)
    return y.reshape(B, Lout, Cout)


def convtranspose1d_cl(x, W, stride, pad, gamma=None, beta=None, act="none",
                       add_col=None):
    # transposed conv == lhs-dilated, (K-1-pad)-padded, stride-1 conv with the
    # spatially flipped, channel-transposed weight (handled by lhs_dilation).
    B, _, Cin = x.shape
    _, Cout, K = W.shape
    p = K - 1 - pad
    patches = lax.conv_general_dilated_patches(
        x.astype(jnp.bfloat16), (K,), (1,), [(p, p)],
        lhs_dilation=(stride,),
        dimension_numbers=("NWC", "WIO", "NWC"))          # (B, Lout, Cin*K)
    _, Lout, _ = patches.shape
    Wm = jnp.flip(W, axis=-1).transpose(0, 2, 1).reshape(Cin * K, Cout)
    y = fused_matmul(patches.reshape(B * Lout, Cin * K), Wm,
                     act=act, gamma=gamma, beta=beta, add_col=add_col)
    return y.reshape(B, Lout, Cout)


def conv2d_cl(x, W, stride, pad, gamma=None, beta=None, act="none"):
    B, _, _, Cin = x.shape
    Cout, _, KH, KW = W.shape
    patches = lax.conv_general_dilated_patches(
        x.astype(jnp.bfloat16), (KH, KW), (stride, stride),
        [(pad, pad), (pad, pad)],
        dimension_numbers=("NHWC", "HWIO", "NHWC"))   # (B, OH, OW, Cin*KH*KW)
    _, OH, OW, _ = patches.shape
    Wm = W.transpose(1, 2, 3, 0).reshape(Cin * KH * KW, Cout)
    y = fused_matmul(patches.reshape(B * OH * OW, Cin * KH * KW), Wm,
                     act=act, gamma=gamma, beta=beta)
    return y.reshape(B, OH, OW, Cout)


def convtranspose2d_cl(x, W, stride, pad, gamma=None, beta=None, act="none"):
    B, _, _, Cin = x.shape
    _, Cout, KH, KW = W.shape
    ph, pw = KH - 1 - pad, KW - 1 - pad
    patches = lax.conv_general_dilated_patches(
        x.astype(jnp.bfloat16), (KH, KW), (1, 1), [(ph, ph), (pw, pw)],
        lhs_dilation=(stride, stride),
        dimension_numbers=("NHWC", "HWIO", "NHWC"))   # (B, OH, OW, Cin*KH*KW)
    _, OH, OW, _ = patches.shape
    Wm = jnp.flip(W, axis=(-2, -1)).transpose(0, 2, 3, 1).reshape(
        Cin * KH * KW, Cout)
    y = fused_matmul(patches.reshape(B * OH * OW, Cin * KH * KW), Wm,
                     act=act, gamma=gamma, beta=beta)
    return y.reshape(B, OH, OW, Cout)


# ------------------------- parameter construction ---------------------------

def _w(key, shape):
    return 0.02 * jax.random.normal(key, shape, jnp.float32)


def build_encoder_1d(key, isize, nz, nc, ndf, n_extra):
    layers = []
    key, k = jax.random.split(key)
    layers.append(dict(type="conv", W=_w(k, (ndf, nc, 4)), stride=2, pad=1,
                       act="leaky"))
    csize, cndf = isize // 2, ndf
    for _ in range(n_extra):
        key, k = jax.random.split(key)
        layers.append(dict(type="conv", W=_w(k, (cndf, cndf, 3)), stride=1,
                           pad=1, act="leaky", gamma=jnp.ones((cndf,)),
                           beta=jnp.zeros((cndf,))))
    while csize > 4:
        in_f, out_f = cndf, cndf * 2
        key, k = jax.random.split(key)
        layers.append(dict(type="conv", W=_w(k, (out_f, in_f, 4)), stride=2,
                           pad=1, act="leaky", gamma=jnp.ones((out_f,)),
                           beta=jnp.zeros((out_f,))))
        cndf, csize = cndf * 2, csize // 2
    key, k = jax.random.split(key)
    layers.append(dict(type="conv", W=_w(k, (nz, cndf, 4)), stride=1, pad=0,
                       act="none"))
    return layers, key


def build_decoder(key, isize, nz, nc, ngf, n_extra, dims):
    layers = []
    cngf, tisize = ngf // 2, 4
    while tisize != isize:
        cngf, tisize = cngf * 2, tisize * 2

    def tshape(cin, cout, k):
        return (cin, cout) + (k,) * dims

    key, k = jax.random.split(key)
    layers.append(dict(type="convt", W=_w(k, tshape(nz, cngf, 4)), stride=1,
                       pad=0, act="relu", gamma=jnp.ones((cngf,)),
                       beta=jnp.zeros((cngf,))))
    csize = 4
    while csize < isize // 2:
        key, k = jax.random.split(key)
        layers.append(dict(type="convt", W=_w(k, tshape(cngf, cngf // 2, 4)),
                           stride=2, pad=1, act="relu",
                           gamma=jnp.ones((cngf // 2,)),
                           beta=jnp.zeros((cngf // 2,))))
        cngf, csize = cngf // 2, csize * 2
    for _ in range(n_extra):
        key, k = jax.random.split(key)
        layers.append(dict(type="conv", W=_w(k, (cngf, cngf) + (3,) * dims),
                           stride=1, pad=1, act="relu",
                           gamma=jnp.ones((cngf,)), beta=jnp.zeros((cngf,))))
    key, k = jax.random.split(key)
    layers.append(dict(type="convt", W=_w(k, tshape(cngf, nc, 4)), stride=2,
                       pad=1, act="tanh"))
    return layers, key


def init_bivi_params(key, opt):
    enc, key = build_encoder_1d(key, opt.z_size, opt.feature_ch, opt.z_ch,
                                opt.ndf, opt.extralayers)
    dec1, key = build_decoder(key, opt.img_size, opt.feature_ch, opt.img_ch,
                              opt.ngf, opt.extralayers, dims=2)
    dec2, key = build_decoder(key, opt.signal_size, opt.feature_ch,
                              opt.signal_ch, opt.ngf, opt.extralayers, dims=1)
    return {"enc": enc, "dec1": dec1, "dec2": dec2}, key


# ------------------------------ forward pass --------------------------------

def _apply_1d(x_cl, layers, final_add_col=None):
    n = len(layers)
    for idx, ly in enumerate(layers):
        g, b = ly.get("gamma"), ly.get("beta")
        add = final_add_col if idx == n - 1 else None
        fn = conv1d_cl if ly["type"] == "conv" else convtranspose1d_cl
        x_cl = fn(x_cl, ly["W"], ly["stride"], ly["pad"], g, b, ly["act"],
                  add_col=add)
    return x_cl


def _apply_2d(x_cl, layers):
    for ly in layers:
        g, b = ly.get("gamma"), ly.get("beta")
        fn = conv2d_cl if ly["type"] == "conv" else convtranspose2d_cl
        x_cl = fn(x_cl, ly["W"], ly["stride"], ly["pad"], g, b, ly["act"])
    return x_cl


def bivi_netg_forward(params, z, x):
    # Channels-last carry between layers; only 3 boundary transposes total.
    z_cl = z.transpose(0, 2, 1)                        # (B, L, z_ch)
    feat_cl = _apply_1d(z_cl, params["enc"])           # (B, 1, feature_ch)

    # extract_and_reconstruct(x): fft over time, zero channels 1:, ifft().real.
    # Zeroing the channel axis commutes with the FFT over time and
    # ifft(fft(.)) is the identity, so reconstruct(x) == x with channels >= 1
    # zeroed.  Fused as a column-0 add into the final ConvTranspose1d epilogue
    # (applied after tanh, matching the PyTorch forward).
    # TODO(synk): no Pallas FFT primitive; realized via this exact identity.
    B, C, L = x.shape
    add_col = x[:, 0, :].reshape(B * L)                # (b, l) row order

    xh_cl = _apply_1d(feat_cl, params["dec2"], final_add_col=add_col)
    x_hat = xh_cl.transpose(0, 2, 1).astype(jnp.float32)

    feat4_cl = feat_cl.reshape(B, 1, 1, -1)            # (B, 1, 1, feature_ch)
    cwt_cl = _apply_2d(feat4_cl, params["dec1"])       # (B, H, W, img_ch)
    cwt_hat = cwt_cl.transpose(0, 3, 1, 2).astype(jnp.float32)
    return x_hat, cwt_hat


# ---------------------------------- main -------------------------------------

if __name__ == "__main__":
    class Opt:
        pass

    opt = Opt()
    opt.z_size, opt.z_ch, opt.feature_ch = 16, 2, 8
    opt.img_size, opt.img_ch = 16, 1
    opt.signal_size, opt.signal_ch = 16, 1
    opt.ndf, opt.ngf, opt.ngpu, opt.extralayers = 8, 8, 1, 0

    key = jax.random.PRNGKey(0)
    params, key = init_bivi_params(key, opt)
    kz, kx = jax.random.split(key)

    B = 2
    z = jax.random.normal(kz, (B, opt.z_ch, opt.z_size), jnp.float32)
    x = jax.random.normal(kx, (B, opt.signal_ch, opt.signal_size), jnp.float32)

    fwd = jax.jit(lambda z_, x_: bivi_netg_forward(params, z_, x_))
    x_hat, cwt_hat = fwd(z, x)
    jax.block_until_ready((x_hat, cwt_hat))

    assert x_hat.shape == (B, opt.signal_ch, opt.signal_size)
    assert cwt_hat.shape == (B, opt.img_ch, opt.img_size, opt.img_size)
    assert jnp.all(jnp.isfinite(x_hat)) and jnp.all(jnp.isfinite(cwt_hat))
    print("KERNEL_OK")
</pallas_src>

<mosaic_0001>
module attributes {stable_mosaic.version = 11 : i64} {
  func.func @_mm_stats_kernel(%arg0: i32, %arg1: i32, %arg2: i32, %arg3: memref<16x128xbf16, #tpu.memory_space<vmem>>, %arg4: memref<128x128xbf16, #tpu.memory_space<vmem>>, %arg5: memref<16x128xbf16, #tpu.memory_space<vmem>>, %arg6: memref<8x128xf32, #tpu.memory_space<vmem>>, %arg7: memref<16x128xf32, #tpu.memory_space<vmem>>) attributes {dimension_semantics = [#tpu.dimension_semantics<parallel>, #tpu.dimension_semantics<parallel>, #tpu.dimension_semantics<arbitrary>], iteration_bounds = array<i64: 1, 1, 1>, scalar_prefetch = 0 : i64, scratch_operands = 1 : i64, tpu.core_type = #tpu.core_type<tc>, window_params = [{transform_indices = @transform_0, window_bounds = array<i64: 16, 128>}, {transform_indices = @transform_1, window_bounds = array<i64: 128, 128>}, {transform_indices = @transform_2, window_bounds = array<i64: 16, 128>}, {transform_indices = @transform_3, window_bounds = array<i64: 8, 128>}]} {
    %c0_i32 = arith.constant 0 : i32
    %0 = arith.cmpi eq, %arg2, %c0_i32 : i32
    %1 = arith.extui %0 : i1 to i32
    %c0_i32_0 = arith.constant 0 : i32
    %2 = arith.cmpi ne, %1, %c0_i32_0 : i32
    scf.if %2 {
      %cst_10 = arith.constant 0.000000e+00 : f32
      %12 = vector.broadcast %cst_10 : f32 to vector<16x128xf32>
      %c0_11 = arith.constant 0 : index
      %c0_12 = arith.constant 0 : index
      %13 = vector.load %arg7[%c0_11, %c0_12] : memref<16x128xf32, #tpu.memory_space<vmem>>, vector<16x128xf32>
      tpu.vector_store %arg7[%c0_11, %c0_12], %12 {strides = array<i32>} : memref<16x128xf32, #tpu.memory_space<vmem>>, vector<16x128xf32>,
    } else {
    }
    %c0 = arith.constant 0 : index
    %c0_1 = arith.constant 0 : index
    %3 = vector.load %arg7[%c0, %c0_1] : memref<16x128xf32, #tpu.memory_space<vmem>>, vector<16x128xf32>
    %c0_2 = arith.constant 0 : index
    %c0_3 = arith.constant 0 : index
    %4 = vector.load %arg3[%c0_2, %c0_3] : memref<16x128xbf16, #tpu.memory_space<vmem>>, vector<16x128xbf16>
    %c0_4 = arith.constant 0 : index
    %c0_5 = arith.constant 0 : index
    %5 = vector.load %arg4[%c0_4, %c0_5] : memref<128x128xbf16, #tpu.memory_space<vmem>>, vector<128x128xbf16>
    %cst = arith.constant dense<0.000000e+00> : vector<16x128xf32>
    %6 = tpu.matmul %4, %5, %cst {dimension_numbers = #tpu.dot_dimension_numbers<[1], [0], [0], [1], [0, 0, 1, 1], [], []>} : vector<16x128xbf16>, vector<128x128xbf16>, vector<16x128xf32> -> vector<16x128xf32>
    %7 = arith.addf %3, %6 : vector<16x128xf32>
    %c0_6 = arith.constant 0 : index
    %c0_7 = arith.constant 0 : index
    %8 = vector.load %arg7[%c0_6, %c0_7] : memref<16x128xf32, #tpu.memory_space<vmem>>, vector<16x128xf32>
    tpu.vector_store %arg7[%c0_6, %c0_7], %7 {strides = array<i32>} : memref<16x128xf32, #tpu.memory_space<vmem>>, vector<16x128xf32>,
    %c0_i32_8 = arith.constant 0 : i32
    %9 = arith.cmpi eq, %arg2, %c0_i32_8 : i32
    %10 = arith.extui %9 : i1 to i32
    %c0_i32_9 = arith.constant 0 : i32
    %11 = arith.cmpi ne, %10, %c0_i32_9 : i32
    scf.if %11 {
      %c0_10 = arith.constant 0 : index
      %c0_11 = arith.constant 0 : index
      %12 = vector.load %arg7[%c0_10, %c0_11] : memref<16x128xf32, #tpu.memory_space<vmem>>, vector<16x128xf32>
      %13 = arith.truncf %12 : vector<16x128xf32> to vector<16x128xbf16>
      %c0_12 = arith.constant 0 : index
      %c0_13 = arith.constant 0 : index
      %14 = vector.load %arg5[%c0_12, %c0_13] : memref<16x128xbf16, #tpu.memory_space<vmem>>, vector<16x128xbf16>
      tpu.vector_store %arg5[%c0_12, %c0_13], %13 {strides = array<i32>} : memref<16x128xbf16, #tpu.memory_space<vmem>>, vector<16x128xbf16>,
      %cst_14 = arith.constant dense<0.000000e+00> : vector<128xf32>
      %15 = vector.multi_reduction <add>, %12, %cst_14 [0] : vector<16x128xf32> to vector<128xf32>
      %16 = vector.shape_cast %15 : vector<128xf32> to vector<1x128xf32>
      %17 = arith.mulf %12, %12 : vector<16x128xf32>
      %cst_15 = arith.constant dense<0.000000e+00> : vector<128xf32>
      %18 = vector.multi_reduction <add>, %17, %cst_15 [0] : vector<16x128xf32> to vector<128xf32>
      %19 = vector.shape_cast %18 : vector<128xf32> to vector<1x128xf32>
      %cst_16 = arith.constant 0.000000e+00 : f32
      %20 = vector.broadcast %cst_16 : f32 to vector<6x128xf32>
      %21 = tpu.concatenate %16, %19, %20 in 0 : vector<1x128xf32>, vector<1x128xf32>, vector<6x128xf32> -> vector<8x128xf32>
      %c0_17 = arith.constant 0 : index
      %c0_18 = arith.constant 0 : index
      %22 = vector.load %arg6[%c0_17, %c0_18] : memref<8x128xf32, #tpu.memory_space<vmem>>, vector<8x128xf32>
      tpu.vector_store %arg6[%c0_17, %c0_18], %21 {strides = array<i32>} : memref<8x128xf32, #tpu.memory_space<vmem>>, vector<8x128xf32>,
    } else {
    }
    return
  }
  func.func @transform_0(%arg0: i32, %arg1: i32, %arg2: i32) -> (i32, i32) {
    %c0_i32 = arith.constant 0 : i32
    return %arg0, %arg2 : i32, i32
  }
  func.func @transform_1(%arg0: i32, %arg1: i32, %arg2: i32) -> (i32, i32) {
    %c0_i32 = arith.constant 0 : i32
    return %arg2, %arg1 : i32, i32
  }
  func.func @transform_2(%arg0: i32, %arg1: i32, %arg2: i32) -> (i32, i32) {
    %c0_i32 = arith.constant 0 : i32
    return %arg0, %arg1 : i32, i32
  }
  func.func @transform_3(%arg0: i32, %arg1: i32, %arg2: i32) -> (i32, i32) {
    %c0_i32 = arith.constant 0 : i32
    return %arg0, %arg1 : i32, i32
  }
}

module attributes {stable_mosaic.version = 11 : i64} {
  func.func @_mm_act_kernel(%arg0: i32, %arg1: i32, %arg2: i32, %arg3: memref<16x128xbf16, #tpu.memory_space<vmem>>, %arg4: memref<128x128xbf16, #tpu.memory_space<vmem>>, %arg5: memref<16x128xbf16, #tpu.memory_space<vmem>>, %arg6: memref<16x128xf32, #tpu.memory_space<vmem>>) attributes {dimension_semantics = [#tpu.dimension_semantics<parallel>, #tpu.dimension_semantics<parallel>, #tpu.dimension_semantics<arbitrary>], iteration_bounds = array<i64: 1, 1, 1>, scalar_prefetch = 0 : i64, scratch_operands = 1 : i64, tpu.core_type = #tpu.core_type<tc>, window_params = [{transform_indices = @transform_0, window_bounds = array<i64: 16, 128>}, {transform_indices = @transform_1, window_bounds = array<i64: 128, 128>}, {transform_indices = @transform_2, window_bounds = array<i64: 16, 128>}]} {
    %c0_i32 = arith.constant 0 : i32
    %0 = arith.cmpi eq, %arg2, %c0_i32 : i32
    %1 = arith.extui %0 : i1 to i32
    %c0_i32_0 = arith.constant 0 : i32
    %2 = arith.cmpi ne, %1, %c0_i32_0 : i32
    scf.if %2 {
      %cst_10 = arith.constant 0.000000e+00 : f32
      %12 = vector.broadcast %cst_10 : f32 to vector<16x128xf32>
      %c0_11 = arith.constant 0 : index
      %c0_12 = arith.constant 0 : index
      %13 = vector.load %arg6[%c0_11, %c0_12] : memref<16x128xf32, #tpu.memory_space<vmem>>, vector<16x128xf32>
      tpu.vector_store %arg6[%c0_11, %c0_12], %12 {strides = array<i32>} : memref<16x128xf32, #tpu.memory_space<vmem>>, vector<16x128xf32>,
    } else {
    }
    %c0 = arith.constant 0 : index
    %c0_1 = arith.constant 0 : index
    %3 = vector.load %arg6[%c0, %c0_1] : memref<16x128xf32, #tpu.memory_space<vmem>>, vector<16x128xf32>
    %c0_2 = arith.constant 0 : index
    %c0_3 = arith.constant 0 : index
    %4 = vector.load %arg3[%c0_2, %c0_3] : memref<16x128xbf16, #tpu.memory_space<vmem>>, vector<16x128xbf16>
    %c0_4 = arith.constant 0 : index
    %c0_5 = arith.constant 0 : index
    %5 = vector.load %arg4[%c0_4, %c0_5] : memref<128x128xbf16, #tpu.memory_space<vmem>>, vector<128x128xbf16>
    %cst = arith.constant dense<0.000000e+00> : vector<16x128xf32>
    %6 = tpu.matmul %4, %5, %cst {dimension_numbers = #tpu.dot_dimension_numbers<[1], [0], [0], [1], [0, 0, 1, 1], [], []>} : vector<16x128xbf16>, vector<128x128xbf16>, vector<16x128xf32> -> vector<16x128xf32>
    %7 = arith.addf %3, %6 : vector<16x128xf32>
    %c0_6 = arith.constant 0 : index
    %c0_7 = arith.constant 0 : index
    %8 = vector.load %arg6[%c0_6, %c0_7] : memref<16x128xf32, #tpu.memory_space<vmem>>, vector<16x128xf32>
    tpu.vector_store %arg6[%c0_6, %c0_7], %7 {strides = array<i32>} : memref<16x128xf32, #tpu.memory_space<vmem>>, vector<16x128xf32>,
    %c0_i32_8 = arith.constant 0 : i32
    %9 = arith.cmpi eq, %arg2, %c0_i32_8 : i32
    %10 = arith.extui %9 : i1 to i32
    %c0_i32_9 = arith.constant 0 : i32
    %11 = arith.cmpi ne, %10, %c0_i32_9 : i32
    scf.if %11 {
      %c0_10 = arith.constant 0 : index
      %c0_11 = arith.constant 0 : index
      %12 = vector.load %arg6[%c0_10, %c0_11] : memref<16x128xf32, #tpu.memory_space<vmem>>, vector<16x128xf32>
      %cst_12 = arith.constant 0.000000e+00 : f32
      %13 = vector.broadcast %cst_12 : f32 to vector<16x128xf32>
      %14 = arith.cmpf oge, %12, %13 : vector<16x128xf32>
      %cst_13 = arith.constant 2.000000e-01 : f32
      %15 = vector.broadcast %cst_13 : f32 to vector<16x128xf32>
      %16 = arith.mulf %15, %12 : vector<16x128xf32>
      %17 = arith.select %14, %12, %16 : vector<16x128xi1>, vector<16x128xf32>
      %18 = arith.truncf %17 : vector<16x128xf32> to vector<16x128xbf16>
      %c0_14 = arith.constant 0 : index
      %c0_15 = arith.constant 0 : index
      %19 = vector.load %arg5[%c0_14, %c0_15] : memref<16x128xbf16, #tpu.memory_space<vmem>>, vector<16x128xbf16>
      tpu.vector_store %arg5[%c0_14, %c0_15], %18 {strides = array<i32>} : memref<16x128xbf16, #tpu.memory_space<vmem>>, vector<16x128xbf16>,
    } else {
    }
    return
  }
  func.func @transform_0(%arg0: i32, %arg1: i32, %arg2: i32) -> (i32, i32) {
    %c0_i32 = arith.constant 0 : i32
    return %arg0, %arg2 : i32, i32
  }
  func.func @transform_1(%arg0: i32, %arg1: i32, %arg2: i32) -> (i32, i32) {
    %c0_i32 = arith.constant 0 : i32
    return %arg2, %arg1 : i32, i32
  }
  func.func @transform_2(%arg0: i32, %arg1: i32, %arg2: i32) -> (i32, i32) {
    %c0_i32 = arith.constant 0 : i32
    return %arg0, %arg1 : i32, i32
  }
}

module attributes {stable_mosaic.version = 11 : i64} {
  func.func @_affine_act_kernel(%arg0: i32, %arg1: i32, %arg2: memref<16x128xbf16, #tpu.memory_space<vmem>>, %arg3: memref<1x128xf32, #tpu.memory_space<vmem>>, %arg4: memref<1x128xf32, #tpu.memory_space<vmem>>, %arg5: memref<16x128xbf16, #tpu.memory_space<vmem>>) attributes {dimension_semantics = [#tpu.dimension_semantics<parallel>, #tpu.dimension_semantics<parallel>], iteration_bounds = array<i64: 1, 1>, scalar_prefetch = 0 : i64, scratch_operands = 0 : i64, tpu.core_type = #tpu.core_type<tc>, window_params = [{transform_indices = @transform_0, window_bounds = array<i64: 16, 128>}, {transform_indices = @transform_1, window_bounds = array<i64: 1, 128>}, {transform_indices = @transform_2, window_bounds = array<i64: 1, 128>}, {transform_indices = @transform_3, window_bounds = array<i64: 16, 128>}]} {
    %c0 = arith.constant 0 : index
    %c0_0 = arith.constant 0 : index
    %0 = vector.load %arg2[%c0, %c0_0] : memref<16x128xbf16, #tpu.memory_space<vmem>>, vector<16x128xbf16>
    %1 = arith.extf %0 : vector<16x128xbf16> to vector<16x128xf32>
    %c0_1 = arith.constant 0 : index
    %c0_2 = arith.constant 0 : index
    %2 = vector.load %arg3[%c0_1, %c0_2] : memref<1x128xf32, #tpu.memory_space<vmem>>, vector<1x128xf32>
    %3 = vector.broadcast %2 : vector<1x128xf32> to vector<16x128xf32>
    %4 = arith.mulf %1, %3 : vector<16x128xf32>
    %c0_3 = arith.constant 0 : index
    %c0_4 = arith.constant 0 : index
    %5 = vector.load %arg4[%c0_3, %c0_4] : memref<1x128xf32, #tpu.memory_space<vmem>>, vector<1x128xf32>
    %6 = vector.broadcast %5 : vector<1x128xf32> to vector<16x128xf32>
    %7 = arith.addf %4, %6 : vector<16x128xf32>
    %cst = arith.constant 0.000000e+00 : f32
    %8 = vector.broadcast %cst : f32 to vector<16x128xf32>
    %9 = arith.cmpf oge, %7, %8 : vector<16x128xf32>
    %cst_5 = arith.constant 2.000000e-01 : f32
    %10 = vector.broadcast %cst_5 : f32 to vector<16x128xf32>
    %11 = arith.mulf %10, %7 : vector<16x128xf32>
    %12 = arith.select %9, %7, %11 : vector<16x128xi1>, vector<16x128xf32>
    %13 = arith.truncf %12 : vector<16x128xf32> to vector<16x128xbf16>
    %c0_6 = arith.constant 0 : index
    %c0_7 = arith.constant 0 : index
    %14 = vector.load %arg5[%c0_6, %c0_7] : memref<16x128xbf16, #tpu.memory_space<vmem>>, vector<16x128xbf16>
    tpu.vector_store %arg5[%c0_6, %c0_7], %13 {strides = array<i32>} : memref<16x128xbf16, #tpu.memory_space<vmem>>, vector<16x128xbf16>,
    return
  }
  func.func @transform_0(%arg0: i32, %arg1: i32) -> (i32, i32) {
    %c0_i32 = arith.constant 0 : i32
    return %arg0, %arg1 : i32, i32
  }
  func.func @transform_1(%arg0: i32, %arg1: i32) -> (i32, i32) {
    %c0_i32 = arith.constant 0 : i32
    %c0_i32_0 = arith.constant 0 : i32
    return %c0_i32, %arg1 : i32, i32
  }
  func.func @transform_2(%arg0: i32, %arg1: i32) -> (i32, i32) {
    %c0_i32 = arith.constant 0 : i32
    %c0_i32_0 = arith.constant 0 : i32
    return %c0_i32, %arg1 : i32, i32
  }
  func.func @transform_3(%arg0: i32, %arg1: i32) -> (i32, i32) {
    %c0_i32 = arith.constant 0 : i32
    return %arg0, %arg1 : i32, i32
  }
}

module attributes {stable_mosaic.version = 11 : i64} {
  func.func @_mm_act_kernel(%arg0: i32, %arg1: i32, %arg2: i32, %arg3: memref<16x128xbf16, #tpu.memory_space<vmem>>, %arg4: memref<128x128xbf16, #tpu.memory_space<vmem>>, %arg5: memref<16x128xbf16, #tpu.memory_space<vmem>>, %arg6: memref<16x128xf32, #tpu.memory_space<vmem>>) attributes {dimension_semantics = [#tpu.dimension_semantics<parallel>, #tpu.dimension_semantics<parallel>, #tpu.dimension_semantics<arbitrary>], iteration_bounds = array<i64: 1, 1, 1>, scalar_prefetch = 0 : i64, scratch_operands = 1 : i64, tpu.core_type = #tpu.core_type<tc>, window_params = [{transform_indices = @transform_0, window_bounds = array<i64: 16, 128>}, {transform_indices = @transform_1, window_bounds = array<i64: 128, 128>}, {transform_indices = @transform_2, window_bounds = array<i64: 16, 128>}]} {
    %c0_i32 = arith.constant 0 : i32
    %0 = arith.cmpi eq, %arg2, %c0_i32 : i32
    %1 = arith.extui %0 : i1 to i32
    %c0_i32_0 = arith.constant 0 : i32
    %2 = arith.cmpi ne, %1, %c0_i32_0 : i32
    scf.if %2 {
      %cst_10 = arith.constant 0.000000e+00 : f32
      %12 = vector.broadcast %cst_10 : f32 to vector<16x128xf32>
      %c0_11 = arith.constant 0 : index
      %c0_12 = arith.constant 0 : index
      %13 = vector.load %arg6[%c0_11, %c0_12] : memref<16x128xf32, #tpu.memory_space<vmem>>, vector<16x128xf32>
      tpu.vector_store %arg6[%c0_11, %c0_12], %12 {strides = array<i32>} : memref<16x128xf32, #tpu.memory_space<vmem>>, vector<16x128xf32>,
    } else {
    }
    %c0 = arith.constant 0 : index
    %c0_1 = arith.constant 0 : index
    %3 = vector.load %arg6[%c0, %c0_1] : memref<16x128xf32, #tpu.memory_space<vmem>>, vector<16x128xf32>
    %c0_2 = arith.constant 0 : index
    %c0_3 = arith.constant 0 : index
    %4 = vector.load %arg3[%c0_2, %c0_3] : memref<16x128xbf16, #tpu.memory_space<vmem>>, vector<16x128xbf16>
    %c0_4 = arith.constant 0 : index
    %c0_5 = arith.constant 0 : index
    %5 = vector.load %arg4[%c0_4, %c0_5] : memref<128x128xbf16, #tpu.memory_space<vmem>>, vector<128x128xbf16>
    %cst = arith.constant dense<0.000000e+00> : vector<16x128xf32>
    %6 = tpu.matmul %4, %5, %cst {dimension_numbers = #tpu.dot_dimension_numbers<[1], [0], [0], [1], [0, 0, 1, 1], [], []>} : vector<16x128xbf16>, vector<128x128xbf16>, vector<16x128xf32> -> vector<16x128xf32>
    %7 = arith.addf %3, %6 : vector<16x128xf32>
    %c0_6 = arith.constant 0 : index
    %c0_7 = arith.constant 0 : index
    %8 = vector.load %arg6[%c0_6, %c0_7] : memref<16x128xf32, #tpu.memory_space<vmem>>, vector<16x128xf32>
    tpu.vector_store %arg6[%c0_6, %c0_7], %7 {strides = array<i32>} : memref<16x128xf32, #tpu.memory_space<vmem>>, vector<16x128xf32>,
    %c0_i32_8 = arith.constant 0 : i32
    %9 = arith.cmpi eq, %arg2, %c0_i32_8 : i32
    %10 = arith.extui %9 : i1 to i32
    %c0_i32_9 = arith.constant 0 : i32
    %11 = arith.cmpi ne, %10, %c0_i32_9 : i32
    scf.if %11 {
      %c0_10 = arith.constant 0 : index
      %c0_11 = arith.constant 0 : index
      %12 = vector.load %arg6[%c0_10, %c0_11] : memref<16x128xf32, #tpu.memory_space<vmem>>, vector<16x128xf32>
      %13 = arith.truncf %12 : vector<16x128xf32> to vector<16x128xbf16>
      %c0_12 = arith.constant 0 : index
      %c0_13 = arith.constant 0 : index
      %14 = vector.load %arg5[%c0_12, %c0_13] : memref<16x128xbf16, #tpu.memory_space<vmem>>, vector<16x128xbf16>
      tpu.vector_store %arg5[%c0_12, %c0_13], %13 {strides = array<i32>} : memref<16x128xbf16, #tpu.memory_space<vmem>>, vector<16x128xbf16>,
    } else {
    }
    return
  }
  func.func @transform_0(%arg0: i32, %arg1: i32, %arg2: i32) -> (i32, i32) {
    %c0_i32 = arith.constant 0 : i32
    return %arg0, %arg2 : i32, i32
  }
  func.func @transform_1(%arg0: i32, %arg1: i32, %arg2: i32) -> (i32, i32) {
    %c0_i32 = arith.constant 0 : i32
    return %arg2, %arg1 : i32, i32
  }
  func.func @transform_2(%arg0: i32, %arg1: i32, %arg2: i32) -> (i32, i32) {
    %c0_i32 = arith.constant 0 : i32
    return %arg0, %arg1 : i32, i32
  }
}

module attributes {stable_mosaic.version = 11 : i64} {
  func.func @_affine_act_kernel(%arg0: i32, %arg1: i32, %arg2: memref<32x128xbf16, #tpu.memory_space<vmem>>, %arg3: memref<1x128xf32, #tpu.memory_space<vmem>>, %arg4: memref<1x128xf32, #tpu.memory_space<vmem>>, %arg5: memref<32x128xbf16, #tpu.memory_space<vmem>>) attributes {dimension_semantics = [#tpu.dimension_semantics<parallel>, #tpu.dimension_semantics<parallel>], iteration_bounds = array<i64: 1, 1>, scalar_prefetch = 0 : i64, scratch_operands = 0 : i64, tpu.core_type = #tpu.core_type<tc>, window_params = [{transform_indices = @transform_0, window_bounds = array<i64: 32, 128>}, {transform_indices = @transform_1, window_bounds = array<i64: 1, 128>}, {transform_indices = @transform_2, window_bounds = array<i64: 1, 128>}, {transform_indices = @transform_3, window_bounds = array<i64: 32, 128>}]} {
    %c0 = arith.constant 0 : index
    %c0_0 = arith.constant 0 : index
    %0 = vector.load %arg2[%c0, %c0_0] : memref<32x128xbf16, #tpu.memory_space<vmem>>, vector<32x128xbf16>
    %1 = arith.extf %0 : vector<32x128xbf16> to vector<32x128xf32>
    %c0_1 = arith.constant 0 : index
    %c0_2 = arith.constant 0 : index
    %2 = vector.load %arg3[%c0_1, %c0_2] : memref<1x128xf32, #tpu.memory_space<vmem>>, vector<1x128xf32>
    %3 = vector.broadcast %2 : vector<1x128xf32> to vector<32x128xf32>
    %4 = arith.mulf %1, %3 : vector<32x128xf32>
    %c0_3 = arith.constant 0 : index
    %c0_4 = arith.constant 0 : index
    %5 = vector.load %arg4[%c0_3, %c0_4] : memref<1x128xf32, #tpu.memory_space<vmem>>, vector<1x128xf32>
    %6 = vector.broadcast %5 : vector<1x128xf32> to vector<32x128xf32>
    %7 = arith.addf %4, %6 : vector<32x128xf32>
    %cst = arith.constant 0.000000e+00 : f32
    %8 = vector.broadcast %cst : f32 to vector<32x128xf32>
    %9 = arith.maximumf %7, %8 : vector<32x128xf32>
    %10 = arith.truncf %9 : vector<32x128xf32> to vector<32x128xbf16>
    %c0_5 = arith.constant 0 : index
    %c0_6 = arith.constant 0 : index
    %11 = vector.load %arg5[%c0_5, %c0_6] : memref<32x128xbf16, #tpu.memory_space<vmem>>, vector<32x128xbf16>
    tpu.vector_store %arg5[%c0_5, %c0_6], %10 {strides = array<i32>} : memref<32x128xbf16, #tpu.memory_space<vmem>>, vector<32x128xbf16>,
    return
  }
  func.func @transform_0(%arg0: i32, %arg1: i32) -> (i32, i32) {
    %c0_i32 = arith.constant 0 : i32
    return %arg0, %arg1 : i32, i32
  }
  func.func @transform_1(%arg0: i32, %arg1: i32) -> (i32, i32) {
    %c0_i32 = arith.constant 0 : i32
    %c0_i32_0 = arith.constant 0 : i32
    return %c0_i32, %arg1 : i32, i32
  }
  func.func @transform_2(%arg0: i32, %arg1: i32) -> (i32, i32) {
    %c0_i32 = arith.constant 0 : i32
    %c0_i32_0 = arith.constant 0 : i32
    return %c0_i32, %arg1 : i32, i32
  }
  func.func @transform_3(%arg0: i32, %arg1: i32) -> (i32, i32) {
    %c0_i32 = arith.constant 0 : i32
    return %arg0, %arg1 : i32, i32
  }
}

module attributes {stable_mosaic.version = 11 : i64} {
  func.func @_affine_act_kernel(%arg0: i32, %arg1: i32, %arg2: memref<16x128xbf16, #tpu.memory_space<vmem>>, %arg3: memref<1x128xf32, #tpu.memory_space<vmem>>, %arg4: memref<1x128xf32, #tpu.memory_space<vmem>>, %arg5: memref<16x128xbf16, #tpu.memory_space<vmem>>) attributes {dimension_semantics = [#tpu.dimension_semantics<parallel>, #tpu.dimension_semantics<parallel>], iteration_bounds = array<i64: 1, 1>, scalar_prefetch = 0 : i64, scratch_operands = 0 : i64, tpu.core_type = #tpu.core_type<tc>, window_params = [{transform_indices = @transform_0, window_bounds = array<i64: 16, 128>}, {transform_indices = @transform_1, window_bounds = array<i64: 1, 128>}, {transform_indices = @transform_2, window_bounds = array<i64: 1, 128>}, {transform_indices = @transform_3, window_bounds = array<i64: 16, 128>}]} {
    %c0 = arith.constant 0 : index
    %c0_0 = arith.constant 0 : index
    %0 = vector.load %arg2[%c0, %c0_0] : memref<16x128xbf16, #tpu.memory_space<vmem>>, vector<16x128xbf16>
    %1 = arith.extf %0 : vector<16x128xbf16> to vector<16x128xf32>
    %c0_1 = arith.constant 0 : index
    %c0_2 = arith.constant 0 : index
    %2 = vector.load %arg3[%c0_1, %c0_2] : memref<1x128xf32, #tpu.memory_space<vmem>>, vector<1x128xf32>
    %3 = vector.broadcast %2 : vector<1x128xf32> to vector<16x128xf32>
    %4 = arith.mulf %1, %3 : vector<16x128xf32>
    %c0_3 = arith.constant 0 : index
    %c0_4 = arith.constant 0 : index
    %5 = vector.load %arg4[%c0_3, %c0_4] : memref<1x128xf32, #tpu.memory_space<vmem>>, vector<1x128xf32>
    %6 = vector.broadcast %5 : vector<1x128xf32> to vector<16x128xf32>
    %7 = arith.addf %4, %6 : vector<16x128xf32>
    %cst = arith.constant 0.000000e+00 : f32
    %8 = vector.broadcast %cst : f32 to vector<16x128xf32>
    %9 = arith.maximumf %7, %8 : vector<16x128xf32>
    %10 = arith.truncf %9 : vector<16x128xf32> to vector<16x128xbf16>
    %c0_5 = arith.constant 0 : index
    %c0_6 = arith.constant 0 : index
    %11 = vector.load %arg5[%c0_5, %c0_6] : memref<16x128xbf16, #tpu.memory_space<vmem>>, vector<16x128xbf16>
    tpu.vector_store %arg5[%c0_5, %c0_6], %10 {strides = array<i32>} : memref<16x128xbf16, #tpu.memory_space<vmem>>, vector<16x128xbf16>,
    return
  }
  func.func @transform_0(%arg0: i32, %arg1: i32) -> (i32, i32) {
    %c0_i32 = arith.constant 0 : i32
    return %arg0, %arg1 : i32, i32
  }
  func.func @transform_1(%arg0: i32, %arg1: i32) -> (i32, i32) {
    %c0_i32 = arith.constant 0 : i32
    %c0_i32_0 = arith.constant 0 : i32
    return %c0_i32, %arg1 : i32, i32
  }
  func.func @transform_2(%arg0: i32, %arg1: i32) -> (i32, i32) {
    %c0_i32 = arith.constant 0 : i32
    %c0_i32_0 = arith.constant 0 : i32
    return %c0_i32, %arg1 : i32, i32
  }
  func.func @transform_3(%arg0: i32, %arg1: i32) -> (i32, i32) {
    %c0_i32 = arith.constant 0 : i32
    return %arg0, %arg1 : i32, i32
  }
}

module attributes {stable_mosaic.version = 11 : i64} {
  func.func @_mm_stats_kernel(%arg0: i32, %arg1: i32, %arg2: i32, %arg3: memref<32x128xbf16, #tpu.memory_space<vmem>>, %arg4: memref<128x128xbf16, #tpu.memory_space<vmem>>, %arg5: memref<32x128xbf16, #tpu.memory_space<vmem>>, %arg6: memref<8x128xf32, #tpu.memory_space<vmem>>, %arg7: memref<32x128xf32, #tpu.memory_space<vmem>>) attributes {dimension_semantics = [#tpu.dimension_semantics<parallel>, #tpu.dimension_semantics<parallel>, #tpu.dimension_semantics<arbitrary>], iteration_bounds = array<i64: 1, 1, 1>, scalar_prefetch = 0 : i64, scratch_operands = 1 : i64, tpu.core_type = #tpu.core_type<tc>, window_params = [{transform_indices = @transform_0, window_bounds = array<i64: 32, 128>}, {transform_indices = @transform_1, window_bounds = array<i64: 128, 128>}, {transform_indices = @transform_2, window_bounds = array<i64: 32, 128>}, {transform_indices = @transform_3, window_bounds = array<i64: 8, 128>}]} {
    %c0_i32 = arith.constant 0 : i32
    %0 = arith.cmpi eq, %arg2, %c0_i32 : i32
    %1 = arith.extui %0 : i1 to i32
    %c0_i32_0 = arith.constant 0 : i32
    %2 = arith.cmpi ne, %1, %c0_i32_0 : i32
    scf.if %2 {
      %cst_10 = arith.constant 0.000000e+00 : f32
      %12 = vector.broadcast %cst_10 : f32 to vector<32x128xf32>
      %c0_11 = arith.constant 0 : index
      %c0_12 = arith.constant 0 : index
      %13 = vector.load %arg7[%c0_11, %c0_12] : memref<32x128xf32, #tpu.memory_space<vmem>>, vector<32x128xf32>
      tpu.vector_store %arg7[%c0_11, %c0_12], %12 {strides = array<i32>} : memref<32x128xf32, #tpu.memory_space<vmem>>, vector<32x128xf32>,
    } else {
    }
    %c0 = arith.constant 0 : index
    %c0_1 = arith.constant 0 : index
    %3 = vector.load %arg7[%c0, %c0_1] : memref<32x128xf32, #tpu.memory_space<vmem>>, vector<32x128xf32>
    %c0_2 = arith.constant 0 : index
    %c0_3 = arith.constant 0 : index
    %4 = vector.load %arg3[%c0_2, %c0_3] : memref<32x128xbf16, #tpu.memory_space<vmem>>, vector<32x128xbf16>
    %c0_4 = arith.constant 0 : index
    %c0_5 = arith.constant 0 : index
    %5 = vector.load %arg4[%c0_4, %c0_5] : memref<128x128xbf16, #tpu.memory_space<vmem>>, vector<128x128xbf16>
    %cst = arith.constant dense<0.000000e+00> : vector<32x128xf32>
    %6 = tpu.matmul %4, %5, %cst {dimension_numbers = #tpu.dot_dimension_numbers<[1], [0], [0], [1], [0, 0, 1, 1], [], []>} : vector<32x128xbf16>, vector<128x128xbf16>, vector<32x128xf32> -> vector<32x128xf32>
    %7 = arith.addf %3, %6 : vector<32x128xf32>
    %c0_6 = arith.constant 0 : index
    %c0_7 = arith.constant 0 : index
    %8 = vector.load %arg7[%c0_6, %c0_7] : memref<32x128xf32, #tpu.memory_space<vmem>>, vector<32x128xf32>
    tpu.vector_store %arg7[%c0_6, %c0_7], %7 {strides = array<i32>} : memref<32x128xf32, #tpu.memory_space<vmem>>, vector<32x128xf32>,
    %c0_i32_8 = arith.constant 0 : i32
    %9 = arith.cmpi eq, %arg2, %c0_i32_8 : i32
    %10 = arith.extui %9 : i1 to i32
    %c0_i32_9 = arith.constant 0 : i32
    %11 = arith.cmpi ne, %10, %c0_i32_9 : i32
    scf.if %11 {
      %c0_10 = arith.constant 0 : index
      %c0_11 = arith.constant 0 : index
      %12 = vector.load %arg7[%c0_10, %c0_11] : memref<32x128xf32, #tpu.memory_space<vmem>>, vector<32x128xf32>
      %13 = arith.truncf %12 : vector<32x128xf32> to vector<32x128xbf16>
      %c0_12 = arith.constant 0 : index
      %c0_13 = arith.constant 0 : index
      %14 = vector.load %arg5[%c0_12, %c0_13] : memref<32x128xbf16, #tpu.memory_space<vmem>>, vector<32x128xbf16>
      tpu.vector_store %arg5[%c0_12, %c0_13], %13 {strides = array<i32>} : memref<32x128xbf16, #tpu.memory_space<vmem>>, vector<32x128xbf16>,
      %cst_14 = arith.constant dense<0.000000e+00> : vector<128xf32>
      %15 = vector.multi_reduction <add>, %12, %cst_14 [0] : vector<32x128xf32> to vector<128xf32>
      %16 = vector.shape_cast %15 : vector<128xf32> to vector<1x128xf32>
      %17 = arith.mulf %12, %12 : vector<32x128xf32>
      %cst_15 = arith.constant dense<0.000000e+00> : vector<128xf32>
      %18 = vector.multi_reduction <add>, %17, %cst_15 [0] : vector<32x128xf32> to vector<128xf32>
      %19 = vector.shape_cast %18 : vector<128xf32> to vector<1x128xf32>
      %cst_16 = arith.constant 0.000000e+00 : f32
      %20 = vector.broadcast %cst_16 : f32 to vector<6x128xf32>
      %21 = tpu.concatenate %16, %19, %20 in 0 : vector<1x128xf32>, vector<1x128xf32>, vector<6x128xf32> -> vector<8x128xf32>
      %c0_17 = arith.constant 0 : index
      %c0_18 = arith.constant 0 : index
      %22 = vector.load %arg6[%c0_17, %c0_18] : memref<8x128xf32, #tpu.memory_space<vmem>>, vector<8x128xf32>
      tpu.vector_store %arg6[%c0_17, %c0_18], %21 {strides = array<i32>} : memref<8x128xf32, #tpu.memory_space<vmem>>, vector<8x128xf32>,
    } else {
    }
    return
  }
  func.func @transform_0(%arg0: i32, %arg1: i32, %arg2: i32) -> (i32, i32) {
    %c0_i32 = arith.constant 0 : i32
    return %arg0, %arg2 : i32, i32
  }
  func.func @transform_1(%arg0: i32, %arg1: i32, %arg2: i32) -> (i32, i32) {
    %c0_i32 = arith.constant 0 : i32
    return %arg2, %arg1 : i32, i32
  }
  func.func @transform_2(%arg0: i32, %arg1: i32, %arg2: i32) -> (i32, i32) {
    %c0_i32 = arith.constant 0 : i32
    return %arg0, %arg1 : i32, i32
  }
  func.func @transform_3(%arg0: i32, %arg1: i32, %arg2: i32) -> (i32, i32) {
    %c0_i32 = arith.constant 0 : i32
    return %arg0, %arg1 : i32, i32
  }
}

module attributes {stable_mosaic.version = 11 : i64} {
  func.func @_mm_stats_kernel(%arg0: i32, %arg1: i32, %arg2: i32, %arg3: memref<128x256xbf16, #tpu.memory_space<vmem>>, %arg4: memref<256x128xbf16, #tpu.memory_space<vmem>>, %arg5: memref<128x128xbf16, #tpu.memory_space<vmem>>, %arg6: memref<8x128xf32, #tpu.memory_space<vmem>>, %arg7: memref<128x128xf32, #tpu.memory_space<vmem>>) attributes {dimension_semantics = [#tpu.dimension_semantics<parallel>, #tpu.dimension_semantics<parallel>, #tpu.dimension_semantics<arbitrary>], iteration_bounds = array<i64: 1, 1, 1>, scalar_prefetch = 0 : i64, scratch_operands = 1 : i64, tpu.core_type = #tpu.core_type<tc>, window_params = [{transform_indices = @transform_0, window_bounds = array<i64: 128, 256>}, {transform_indices = @transform_1, window_bounds = array<i64: 256, 128>}, {transform_indices = @transform_2, window_bounds = array<i64: 128, 128>}, {transform_indices = @transform_3, window_bounds = array<i64: 8, 128>}]} {
    %c0_i32 = arith.constant 0 : i32
    %0 = arith.cmpi eq, %arg2, %c0_i32 : i32
    %1 = arith.extui %0 : i1 to i32
    %c0_i32_0 = arith.constant 0 : i32
    %2 = arith.cmpi ne, %1, %c0_i32_0 : i32
    scf.if %2 {
      %cst_10 = arith.constant 0.000000e+00 : f32
      %12 = vector.broadcast %cst_10 : f32 to vector<128x128xf32>
      %c0_11 = arith.constant 0 : index
      %c0_12 = arith.constant 0 : index
      %13 = vector.load %arg7[%c0_11, %c0_12] : memref<128x128xf32, #tpu.memory_space<vmem>>, vector<128x128xf32>
      tpu.vector_store %arg7[%c0_11, %c0_12], %12 {strides = array<i32>} : memref<128x128xf32, #tpu.memory_space<vmem>>, vector<128x128xf32>,
    } else {
    }
    %c0 = arith.constant 0 : index
    %c0_1 = arith.constant 0 : index
    %3 = vector.load %arg7[%c0, %c0_1] : memref<128x128xf32, #tpu.memory_space<vmem>>, vector<128x128xf32>
    %c0_2 = arith.constant 0 : index
    %c0_3 = arith.constant 0 : index
    %4 = vector.load %arg3[%c0_2, %c0_3] : memref<128x256xbf16, #tpu.memory_space<vmem>>, vector<128x256xbf16>
    %c0_4 = arith.constant 0 : index
    %c0_5 = arith.constant 0 : index
    %5 = vector.load %arg4[%c0_4, %c0_5] : memref<256x128xbf16, #tpu.memory_space<vmem>>, vector<256x128xbf16>
    %cst = arith.constant dense<0.000000e+00> : vector<128x128xf32>
    %6 = tpu.matmul %4, %5, %cst {dimension_numbers = #tpu.dot_dimension_numbers<[1], [0], [0], [1], [0, 0, 1, 1], [], []>} : vector<128x256xbf16>, vector<256x128xbf16>, vector<128x128xf32> -> vector<128x128xf32>
    %7 = arith.addf %3, %6 : vector<128x128xf32>
    %c0_6 = arith.constant 0 : index
    %c0_7 = arith.constant 0 : index
    %8 = vector.load %arg7[%c0_6, %c0_7] : memref<128x128xf32, #tpu.memory_space<vmem>>, vector<128x128xf32>
    tpu.vector_store %arg7[%c0_6, %c0_7], %7 {strides = array<i32>} : memref<128x128xf32, #tpu.memory_space<vmem>>, vector<128x128xf32>,
    %c0_i32_8 = arith.constant 0 : i32
    %9 = arith.cmpi eq, %arg2, %c0_i32_8 : i32
    %10 = arith.extui %9 : i1 to i32
    %c0_i32_9 = arith.constant 0 : i32
    %11 = arith.cmpi ne, %10, %c0_i32_9 : i32
    scf.if %11 {
      %c0_10 = arith.constant 0 : index
      %c0_11 = arith.constant 0 : index
      %12 = vector.load %arg7[%c0_10, %c0_11] : memref<128x128xf32, #tpu.memory_space<vmem>>, vector<128x128xf32>
      %13 = arith.truncf %12 : vector<128x128xf32> to vector<128x128xbf16>
      %c0_12 = arith.constant 0 : index
      %c0_13 = arith.constant 0 : index
      %14 = vector.load %arg5[%c0_12, %c0_13] : memref<128x128xbf16, #tpu.memory_space<vmem>>, vector<128x128xbf16>
      tpu.vector_store %arg5[%c0_12, %c0_13], %13 {strides = array<i32>} : memref<128x128xbf16, #tpu.memory_space<vmem>>, vector<128x128xbf16>,
      %cst_14 = arith.constant dense<0.000000e+00> : vector<128xf32>
      %15 = vector.multi_reduction <add>, %12, %cst_14 [0] : vector<128x128xf32> to vector<128xf32>
      %16 = vector.shape_cast %15 : vector<128xf32> to vector<1x128xf32>
      %17 = arith.mulf %12, %12 : vector<128x128xf32>
      %cst_15 = arith.constant dense<0.000000e+00> : vector<128xf32>
      %18 = vector.multi_reduction <add>, %17, %cst_15 [0] : vector<128x128xf32> to vector<128xf32>
      %19 = vector.shape_cast %18 : vector<128xf32> to vector<1x128xf32>
      %cst_16 = arith.constant 0.000000e+00 : f32
      %20 = vector.broadcast %cst_16 : f32 to vector<6x128xf32>
      %21 = tpu.concatenate %16, %19, %20 in 0 : vector<1x128xf32>, vector<1x128xf32>, vector<6x128xf32> -> vector<8x128xf32>
      %c0_17 = arith.constant 0 : index
      %c0_18 = arith.constant 0 : index
      %22 = vector.load %arg6[%c0_17, %c0_18] : memref<8x128xf32, #tpu.memory_space<vmem>>, vector<8x128xf32>
      tpu.vector_store %arg6[%c0_17, %c0_18], %21 {strides = array<i32>} : memref<8x128xf32, #tpu.memory_space<vmem>>, vector<8x128xf32>,
    } else {
    }
    return
  }
  func.func @transform_0(%arg0: i32, %arg1: i32, %arg2: i32) -> (i32, i32) {
    %c0_i32 = arith.constant 0 : i32
    return %arg0, %arg2 : i32, i32
  }
  func.func @transform_1(%arg0: i32, %arg1: i32, %arg2: i32) -> (i32, i32) {
    %c0_i32 = arith.constant 0 : i32
    return %arg2, %arg1 : i32, i32
  }
  func.func @transform_2(%arg0: i32, %arg1: i32, %arg2: i32) -> (i32, i32) {
    %c0_i32 = arith.constant 0 : i32
    return %arg0, %arg1 : i32, i32
  }
  func.func @transform_3(%arg0: i32, %arg1: i32, %arg2: i32) -> (i32, i32) {
    %c0_i32 = arith.constant 0 : i32
    return %arg0, %arg1 : i32, i32
  }
}

module attributes {stable_mosaic.version = 11 : i64} {
  func.func @_affine_act_kernel(%arg0: i32, %arg1: i32, %arg2: memref<128x128xbf16, #tpu.memory_space<vmem>>, %arg3: memref<1x128xf32, #tpu.memory_space<vmem>>, %arg4: memref<1x128xf32, #tpu.memory_space<vmem>>, %arg5: memref<128x128xbf16, #tpu.memory_space<vmem>>) attributes {dimension_semantics = [#tpu.dimension_semantics<parallel>, #tpu.dimension_semantics<parallel>], iteration_bounds = array<i64: 1, 1>, scalar_prefetch = 0 : i64, scratch_operands = 0 : i64, tpu.core_type = #tpu.core_type<tc>, window_params = [{transform_indices = @transform_0, window_bounds = array<i64: 128, 128>}, {transform_indices = @transform_1, window_bounds = array<i64: 1, 128>}, {transform_indices = @transform_2, window_bounds = array<i64: 1, 128>}, {transform_indices = @transform_3, window_bounds = array<i64: 128, 128>}]} {
    %c0 = arith.constant 0 : index
    %c0_0 = arith.constant 0 : index
    %0 = vector.load %arg2[%c0, %c0_0] : memref<128x128xbf16, #tpu.memory_space<vmem>>, vector<128x128xbf16>
    %1 = arith.extf %0 : vector<128x128xbf16> to vector<128x128xf32>
    %c0_1 = arith.constant 0 : index
    %c0_2 = arith.constant 0 : index
    %2 = vector.load %arg3[%c0_1, %c0_2] : memref<1x128xf32, #tpu.memory_space<vmem>>, vector<1x128xf32>
    %3 = vector.broadcast %2 : vector<1x128xf32> to vector<128x128xf32>
    %4 = arith.mulf %1, %3 : vector<128x128xf32>
    %c0_3 = arith.constant 0 : index
    %c0_4 = arith.constant 0 : index
    %5 = vector.load %arg4[%c0_3, %c0_4] : memref<1x128xf32, #tpu.memory_space<vmem>>, vector<1x128xf32>
    %6 = vector.broadcast %5 : vector<1x128xf32> to vector<128x128xf32>
    %7 = arith.addf %4, %6 : vector<128x128xf32>
    %cst = arith.constant 0.000000e+00 : f32
    %8 = vector.broadcast %cst : f32 to vector<128x128xf32>
    %9 = arith.maximumf %7, %8 : vector<128x128xf32>
    %10 = arith.truncf %9 : vector<128x128xf32> to vector<128x128xbf16>
    %c0_5 = arith.constant 0 : index
    %c0_6 = arith.constant 0 : index
    %11 = vector.load %arg5[%c0_5, %c0_6] : memref<128x128xbf16, #tpu.memory_space<vmem>>, vector<128x128xbf16>
    tpu.vector_store %arg5[%c0_5, %c0_6], %10 {strides = array<i32>} : memref<128x128xbf16, #tpu.memory_space<vmem>>, vector<128x128xbf16>,
    return
  }
  func.func @transform_0(%arg0: i32, %arg1: i32) -> (i32, i32) {
    %c0_i32 = arith.constant 0 : i32
    return %arg0, %arg1 : i32, i32
  }
  func.func @transform_1(%arg0: i32, %arg1: i32) -> (i32, i32) {
    %c0_i32 = arith.constant 0 : i32
    %c0_i32_0 = arith.constant 0 : i32
    return %c0_i32, %arg1 : i32, i32
  }
  func.func @transform_2(%arg0: i32, %arg1: i32) -> (i32, i32) {
    %c0_i32 = arith.constant 0 : i32
    %c0_i32_0 = arith.constant 0 : i32
    return %c0_i32, %arg1 : i32, i32
  }
  func.func @transform_3(%arg0: i32, %arg1: i32) -> (i32, i32) {
    %c0_i32 = arith.constant 0 : i32
    return %arg0, %arg1 : i32, i32
  }
}

module attributes {stable_mosaic.version = 11 : i64} {
  func.func @_mm_act_add_kernel(%arg0: i32, %arg1: i32, %arg2: i32, %arg3: memref<32x128xbf16, #tpu.memory_space<vmem>>, %arg4: memref<128x128xbf16, #tpu.memory_space<vmem>>, %arg5: memref<32x128xf32, #tpu.memory_space<vmem>>, %arg6: memref<32x128xbf16, #tpu.memory_space<vmem>>, %arg7: memref<32x128xf32, #tpu.memory_space<vmem>>) attributes {dimension_semantics = [#tpu.dimension_semantics<parallel>, #tpu.dimension_semantics<parallel>, #tpu.dimension_semantics<arbitrary>], iteration_bounds = array<i64: 1, 1, 1>, scalar_prefetch = 0 : i64, scratch_operands = 1 : i64, tpu.core_type = #tpu.core_type<tc>, window_params = [{transform_indices = @transform_0, window_bounds = array<i64: 32, 128>}, {transform_indices = @transform_1, window_bounds = array<i64: 128, 128>}, {transform_indices = @transform_2, window_bounds = array<i64: 32, 128>}, {transform_indices = @transform_3, window_bounds = array<i64: 32, 128>}]} {
    %c0_i32 = arith.constant 0 : i32
    %0 = arith.cmpi eq, %arg2, %c0_i32 : i32
    %1 = arith.extui %0 : i1 to i32
    %c0_i32_0 = arith.constant 0 : i32
    %2 = arith.cmpi ne, %1, %c0_i32_0 : i32
    scf.if %2 {
      %cst_10 = arith.constant 0.000000e+00 : f32
      %12 = vector.broadcast %cst_10 : f32 to vector<32x128xf32>
      %c0_11 = arith.constant 0 : index
      %c0_12 = arith.constant 0 : index
      %13 = vector.load %arg7[%c0_11, %c0_12] : memref<32x128xf32, #tpu.memory_space<vmem>>, vector<32x128xf32>
      tpu.vector_store %arg7[%c0_11, %c0_12], %12 {strides = array<i32>} : memref<32x128xf32, #tpu.memory_space<vmem>>, vector<32x128xf32>,
    } else {
    }
    %c0 = arith.constant 0 : index
    %c0_1 = arith.constant 0 : index
    %3 = vector.load %arg7[%c0, %c0_1] : memref<32x128xf32, #tpu.memory_space<vmem>>, vector<32x128xf32>
    %c0_2 = arith.constant 0 : index
    %c0_3 = arith.constant 0 : index
    %4 = vector.load %arg3[%c0_2, %c0_3] : memref<32x128xbf16, #tpu.memory_space<vmem>>, vector<32x128xbf16>
    %c0_4 = arith.constant 0 : index
    %c0_5 = arith.constant 0 : index
    %5 = vector.load %arg4[%c0_4, %c0_5] : memref<128x128xbf16, #tpu.memory_space<vmem>>, vector<128x128xbf16>
    %cst = arith.constant dense<0.000000e+00> : vector<32x128xf32>
    %6 = tpu.matmul %4, %5, %cst {dimension_numbers = #tpu.dot_dimension_numbers<[1], [0], [0], [1], [0, 0, 1, 1], [], []>} : vector<32x128xbf16>, vector<128x128xbf16>, vector<32x128xf32> -> vector<32x128xf32>
    %7 = arith.addf %3, %6 : vector<32x128xf32>
    %c0_6 = arith.constant 0 : index
    %c0_7 = arith.constant 0 : index
    %8 = vector.load %arg7[%c0_6, %c0_7] : memref<32x128xf32, #tpu.memory_space<vmem>>, vector<32x128xf32>
    tpu.vector_store %arg7[%c0_6, %c0_7], %7 {strides = array<i32>} : memref<32x128xf32, #tpu.memory_space<vmem>>, vector<32x128xf32>,
    %c0_i32_8 = arith.constant 0 : i32
    %9 = arith.cmpi eq, %arg2, %c0_i32_8 : i32
    %10 = arith.extui %9 : i1 to i32
    %c0_i32_9 = arith.constant 0 : i32
    %11 = arith.cmpi ne, %10, %c0_i32_9 : i32
    scf.if %11 {
      %c0_10 = arith.constant 0 : index
      %c0_11 = arith.constant 0 : index
      %12 = vector.load %arg7[%c0_10, %c0_11] : memref<32x128xf32, #tpu.memory_space<vmem>>, vector<32x128xf32>
      %13 = math.tanh %12 : vector<32x128xf32>
      %c0_12 = arith.constant 0 : index
      %c0_13 = arith.constant 0 : index
      %14 = vector.load %arg5[%c0_12, %c0_13] : memref<32x128xf32, #tpu.memory_space<vmem>>, vector<32x128xf32>
      %15 = arith.addf %13, %14 : vector<32x128xf32>
      %16 = arith.truncf %15 : vector<32x128xf32> to vector<32x128xbf16>
      %c0_14 = arith.constant 0 : index
      %c0_15 = arith.constant 0 : index
      %17 = vector.load %arg6[%c0_14, %c0_15] : memref<32x128xbf16, #tpu.memory_space<vmem>>, vector<32x128xbf16>
      tpu.vector_store %arg6[%c0_14, %c0_15], %16 {strides = array<i32>} : memref<32x128xbf16, #tpu.memory_space<vmem>>, vector<32x128xbf16>,
    } else {
    }
    return
  }
  func.func @transform_0(%arg0: i32, %arg1: i32, %arg2: i32) -> (i32, i32) {
    %c0_i32 = arith.constant 0 : i32
    return %arg0, %arg2 : i32, i32
  }
  func.func @transform_1(%arg0: i32, %arg1: i32, %arg2: i32) -> (i32, i32) {
    %c0_i32 = arith.constant 0 : i32
    return %arg2, %arg1 : i32, i32
  }
  func.func @transform_2(%arg0: i32, %arg1: i32, %arg2: i32) -> (i32, i32) {
    %c0_i32 = arith.constant 0 : i32
    %c0_i32_0 = arith.constant 0 : i32
    return %arg0, %c0_i32 : i32, i32
  }
  func.func @transform_3(%arg0: i32, %arg1: i32, %arg2: i32) -> (i32, i32) {
    %c0_i32 = arith.constant 0 : i32
    return %arg0, %arg1 : i32, i32
  }
}

module attributes {stable_mosaic.version = 11 : i64} {
  func.func @_mm_act_kernel(%arg0: i32, %arg1: i32, %arg2: i32, %arg3: memref<256x128xbf16, #tpu.memory_space<vmem>>, %arg4: memref<128x128xbf16, #tpu.memory_space<vmem>>, %arg5: memref<256x128xbf16, #tpu.memory_space<vmem>>, %arg6: memref<256x128xf32, #tpu.memory_space<vmem>>) attributes {dimension_semantics = [#tpu.dimension_semantics<parallel>, #tpu.dimension_semantics<parallel>, #tpu.dimension_semantics<arbitrary>], iteration_bounds = array<i64: 2, 1, 1>, scalar_prefetch = 0 : i64, scratch_operands = 1 : i64, tpu.core_type = #tpu.core_type<tc>, window_params = [{transform_indices = @transform_0, window_bounds = array<i64: 256, 128>}, {transform_indices = @transform_1, window_bounds = array<i64: 128, 128>}, {transform_indices = @transform_2, window_bounds = array<i64: 256, 128>}]} {
    %c0_i32 = arith.constant 0 : i32
    %0 = arith.cmpi eq, %arg2, %c0_i32 : i32
    %1 = arith.extui %0 : i1 to i32
    %c0_i32_0 = arith.constant 0 : i32
    %2 = arith.cmpi ne, %1, %c0_i32_0 : i32
    scf.if %2 {
      %cst_10 = arith.constant 0.000000e+00 : f32
      %12 = vector.broadcast %cst_10 : f32 to vector<256x128xf32>
      %c0_11 = arith.constant 0 : index
      %c0_12 = arith.constant 0 : index
      %13 = vector.load %arg6[%c0_11, %c0_12] : memref<256x128xf32, #tpu.memory_space<vmem>>, vector<256x128xf32>
      tpu.vector_store %arg6[%c0_11, %c0_12], %12 {strides = array<i32>} : memref<256x128xf32, #tpu.memory_space<vmem>>, vector<256x128xf32>,
    } else {
    }
    %c0 = arith.constant 0 : index
    %c0_1 = arith.constant 0 : index
    %3 = vector.load %arg6[%c0, %c0_1] : memref<256x128xf32, #tpu.memory_space<vmem>>, vector<256x128xf32>
    %c0_2 = arith.constant 0 : index
    %c0_3 = arith.constant 0 : index
    %4 = vector.load %arg3[%c0_2, %c0_3] : memref<256x128xbf16, #tpu.memory_space<vmem>>, vector<256x128xbf16>
    %c0_4 = arith.constant 0 : index
    %c0_5 = arith.constant 0 : index
    %5 = vector.load %arg4[%c0_4, %c0_5] : memref<128x128xbf16, #tpu.memory_space<vmem>>, vector<128x128xbf16>
    %cst = arith.constant dense<0.000000e+00> : vector<256x128xf32>
    %6 = tpu.matmul %4, %5, %cst {dimension_numbers = #tpu.dot_dimension_numbers<[1], [0], [0], [1], [0, 0, 1, 1], [], []>} : vector<256x128xbf16>, vector<128x128xbf16>, vector<256x128xf32> -> vector<256x128xf32>
    %7 = arith.addf %3, %6 : vector<256x128xf32>
    %c0_6 = arith.constant 0 : index
    %c0_7 = arith.constant 0 : index
    %8 = vector.load %arg6[%c0_6, %c0_7] : memref<256x128xf32, #tpu.memory_space<vmem>>, vector<256x128xf32>
    tpu.vector_store %arg6[%c0_6, %c0_7], %7 {strides = array<i32>} : memref<256x128xf32, #tpu.memory_space<vmem>>, vector<256x128xf32>,
    %c0_i32_8 = arith.constant 0 : i32
    %9 = arith.cmpi eq, %arg2, %c0_i32_8 : i32
    %10 = arith.extui %9 : i1 to i32
    %c0_i32_9 = arith.constant 0 : i32
    %11 = arith.cmpi ne, %10, %c0_i32_9 : i32
    scf.if %11 {
      %c0_10 = arith.constant 0 : index
      %c0_11 = arith.constant 0 : index
      %12 = vector.load %arg6[%c0_10, %c0_11] : memref<256x128xf32, #tpu.memory_space<vmem>>, vector<256x128xf32>
      %13 = math.tanh %12 : vector<256x128xf32>
      %14 = arith.truncf %13 : vector<256x128xf32> to vector<256x128xbf16>
      %c0_12 = arith.constant 0 : index
      %c0_13 = arith.constant 0 : index
      %15 = vector.load %arg5[%c0_12, %c0_13] : memref<256x128xbf16, #tpu.memory_space<vmem>>, vector<256x128xbf16>
      tpu.vector_store %arg5[%c0_12, %c0_13], %14 {strides = array<i32>} : memref<256x128xbf16, #tpu.memory_space<vmem>>, vector<256x128xbf16>,
    } else {
    }
    return
  }
  func.func @transform_0(%arg0: i32, %arg1: i32, %arg2: i32) -> (i32, i32) {
    %c0_i32 = arith.constant 0 : i32
    return %arg0, %arg2 : i32, i32
  }
  func.func @transform_1(%arg0: i32, %arg1: i32, %arg2: i32) -> (i32, i32) {
    %c0_i32 = arith.constant 0 : i32
    return %arg2, %arg1 : i32, i32
  }
  func.func @transform_2(%arg0: i32, %arg1: i32, %arg2: i32) -> (i32, i32) {
    %c0_i32 = arith.constant 0 : i32
    return %arg0, %arg1 : i32, i32
  }
}

</mosaic_0001>

<llo_original>
// kernel: _lambda_.15
$region0: #{_lambda_.15}
  #allocation0 [shape = 'u32[]', space=smem, size = 0x4, offset = 0x4, fixed_abs, tag = 'smem constant byte address 0x4 - core index']
  #allocation1 [shape = 'u32[144,128]{1,0:T(1,128)}', space=vmem, size = 0x12000, scoped, tag = 'internal scratch']
  #allocation2 [shape = 'f32[16,128]{1,0:T(8,128)}', space=vmem, size = 0x2000, scoped, tag = 'scratch operand']
  %s0 = inlined_call_operand.vmem [shape: bf16[16,128], index: 0, kind: input, shape index: {}]
  %s1 = inlined_call_operand.vmem [shape: bf16[128,128], index: 1, kind: input, shape index: {}]
  %s2 = inlined_call_operand.vmem [shape: bf16[16,128], index: 2, kind: output, shape index: {0}]
  %s3 = inlined_call_operand.vmem [shape: f32[8,128], index: 3, kind: output, shape index: {1}]
  %4 = xla_tuple %s2, %s3
  %s5 = sld [smem:[#allocation0]]
  $region34: #{_lambda_.15} parent=0
    _
  %s7 = ssub.s32 1, %s5
  %s8 = scalar_select 0, %s7, %s5
  // Predicated region
  $region2: #{_lambda_.15} parent=0 // pred_check
    _
  $region3: #{_lambda_.15} parent=0 // pred_check_branch
    %10 = sbr.rel (0) target = $region5
  $region4: #{_lambda_.15} parent=0 // pred_region
    _
  $region5: #{_lambda_.15} parent=0 // pred_fallthru
    _
  // Predicated region
  $region6: #{_lambda_.15} parent=0 // pred_check
    _
  $region7: #{_lambda_.15} parent=0 // pred_check_branch
    %12 = sbr.rel (0) target = $region9
  $region8: #{_lambda_.15} parent=0 // pred_region
    _
  $region9: #{_lambda_.15} parent=0 // pred_fallthru
    _
  %p14 = scmp.eq.s32.totalorder 0, 0
  // Predicated region
  $region10: #{_lambda_.15} parent=0 // pred_check
    %p15 = pneg %p14
  $region11: #{_lambda_.15} parent=0 // pred_check_branch
    %17 = sbr.rel (%p15) target = $region13
  $region12: #{_lambda_.15} parent=0 // pred_region
    %18 = vst [vmem:[#allocation2] sm:$0xff] 0.0
    %19 = vst [vmem:[#allocation2 + $0x8] sm:$0xff] 0.0
  $region13: #{_lambda_.15} parent=0 // pred_fallthru
    _
  %v20 = vld [vmem:[#allocation2] sm:$0xff]
  %v21 = vld [vmem:[#allocation2 + $0x8] sm:$0xff]
  %v22 = vld [vmem:[%s0] sm:$0xf]
  %v23 = vld [vmem:[%s0 + $0x4] sm:$0xf]
  %v24 = vld [vmem:[%s1] sm:$0xf]
  %v25 = vld [vmem:[%s1 + $0x4] sm:$0xf]
  %v26 = vld [vmem:[%s1 + $0x8] sm:$0xf]
  %v27 = vld [vmem:[%s1 + $0xc] sm:$0xf]
  %v28 = vld [vmem:[%s1 + $0x10] sm:$0xf]
  %v29 = vld [vmem:[%s1 + $0x14] sm:$0xf]
  %v30 = vld [vmem:[%s1 + $0x18] sm:$0xf]
  %v31 = vld [vmem:[%s1 + $0x1c] sm:$0xf]
  %v32 = vld [vmem:[%s1 + $0x20] sm:$0xf]
  %v33 = vld [vmem:[%s1 + $0x24] sm:$0xf]
  %v34 = vld [vmem:[%s1 + $0x28] sm:$0xf]
  %v35 = vld [vmem:[%s1 + $0x2c] sm:$0xf]
  %v36 = vld [vmem:[%s1 + $0x30] sm:$0xf]
  %v37 = vld [vmem:[%s1 + $0x34] sm:$0xf]
  %v38 = vld [vmem:[%s1 + $0x38] sm:$0xf]
  %v39 = vld [vmem:[%s1 + $0x3c] sm:$0xf]
  %v42 = vunpack.c.l.b16 %v22
  %v43 = vunpack.c.l.b16 %v23
  %v44 = vpack.c.b16 %v43, %v42
  %v62 = vunpack.c.l.b16 %v24
  %v63 = vunpack.c.l.b16 %v25
  %v64 = vunpack.c.l.b16 %v26
  %v65 = vunpack.c.l.b16 %v27
  %v66 = vunpack.c.l.b16 %v28
  %v67 = vunpack.c.l.b16 %v29
  %v68 = vunpack.c.l.b16 %v30
  %v69 = vunpack.c.l.b16 %v31
  %v70 = vunpack.c.l.b16 %v32
  %v71 = vunpack.c.l.b16 %v33
  %v72 = vunpack.c.l.b16 %v34
  %v73 = vunpack.c.l.b16 %v35
  %v74 = vunpack.c.l.b16 %v36
  %v75 = vunpack.c.l.b16 %v37
  %v76 = vunpack.c.l.b16 %v38
  %v77 = vunpack.c.l.b16 %v39
  %v78 = vpack.c.b16 %v63, %v62
  %v79 = vpack.c.b16 %v65, %v64
  %v80 = vpack.c.b16 %v67, %v66
  %v81 = vpack.c.b16 %v69, %v68
  %v82 = vpack.c.b16 %v71, %v70
  %v83 = vpack.c.b16 %v73, %v72
  %v84 = vpack.c.b16 %v75, %v74
  %v85 = vpack.c.b16 %v77, %v76
  %94 = vmatprep.subr.bf16.mxu0 0
  %95 = vmatpush1.bf16.msra.mxu0 %v78
  %96 = vmatprep.subr.bf16.mxu0 0
  %97 = vmatpush1.bf16.msra.mxu0 %v79
  %98 = vmatprep.subr.bf16.mxu0 0
  %99 = vmatpush1.bf16.msra.mxu0 %v80
  %100 = vmatprep.subr.bf16.mxu0 0
  %101 = vmatpush1.bf16.msra.mxu0 %v81
  %102 = vmatprep.subr.bf16.mxu0 0
  %103 = vmatpush1.bf16.msra.mxu0 %v82
  %104 = vmatprep.subr.bf16.mxu0 0
  %105 = vmatpush1.bf16.msra.mxu0 %v83
  %106 = vmatprep.subr.bf16.mxu0 0
  %107 = vmatpush1.bf16.msra.mxu0 %v84
  %108 = vmatprep.subr.bf16.mxu0 0
  %109 = vmatpush1.bf16.msra.mxu0 %v85
  %110 = vmatprep.subr.bf16.mxu0 0
  %111 = vmatpush1.bf16.msra.mxu0 0
  %112 = vmatprep.subr.bf16.mxu0 0
  %113 = vmatpush1.bf16.msra.mxu0 0
  %114 = vmatprep.subr.bf16.mxu0 0
  %115 = vmatpush1.bf16.msra.mxu0 0
  %116 = vmatprep.subr.bf16.mxu0 0
  %117 = vmatpush1.bf16.msra.mxu0 0
  %118 = vmatprep.subr.bf16.mxu0 0
  %119 = vmatpush1.bf16.msra.mxu0 0
  %120 = vmatprep.subr.bf16.mxu0 0
  %121 = vmatpush1.bf16.msra.mxu0 0
  %122 = vmatprep.subr.bf16.mxu0 0
  %123 = vmatpush1.bf16.msra.mxu0 0
  %124 = vmatprep.subr.bf16.mxu0 0
  %125 = vmatpush1.bf16.msra.mxu0 0
  %126 = vmatprep.mubr.bf16.mxu0 0
  %127 = vmatmul.mubr.bf16.gmra.mrb[0].mxu0 %v44
  %v128 = vpop.f32.mrb[0].mxu0
  %v129 = vadd.f32 0.0, %v128
  %v130 = vpop.f32.mrb[0].mxu0
  %v131 = vpop.f32.mrb[0].mxu0
  %v132 = vadd.f32 0.0, %v131
  %v133 = vpop.f32.mrb[0].mxu0
  %134 = vdwg.mxu0
  %v135 = vadd.f32 %v20, %v129
  %v136 = vadd.f32 %v21, %v132
  %137 = vst [vmem:[#allocation2] sm:$0xff] %v135
  %138 = vst [vmem:[#allocation2 + $0x8] sm:$0xff] %v136
  // Predicated region
  $region14: #{_lambda_.15} parent=0 // pred_check
    %p139 = pneg %p14
  $region15: #{_lambda_.15} parent=0 // pred_check_branch
    %141 = sbr.rel (%p139) target = $region17
  $region16: #{_lambda_.15} parent=0 // pred_region
    %v142 = vld [vmem:[#allocation2] sm:$0xff]
    %v143 = vld [vmem:[#allocation2 + $0x8] sm:$0xff]
    %v144 = vpack.c.bf16 %v143, %v142
    %v146 = vunpack.c.l.b16 %v144
    %v147 = vunpack.c.h.b16 %v144
    %v148 = vpack.c.b16 %v146, %v146
    %v149 = vpack.c.b16 %v147, %v147
    %152 = vst [vmem:[%s2] sm:$0xf] %v148
    %153 = vst [vmem:[%s2 + $0x4] sm:$0xf] %v149
    %v154 = vadd.f32 %v142, %v143
    %v155 = vrot.slane %v154, 4
    %v156 = vadd.f32 %v154, %v155
    %v157 = vrot.slane %v156, 2
    %v158 = vadd.f32 %v156, %v157
    %v159 = vrot.slane %v158, 1
    %v160 = vadd.f32 %v158, %v159
    %v161 = vmul.f32 %v142, %v142
    %v162 = vmul.f32 %v143, %v143
    %v163 = vadd.f32 %v161, %v162
    %v164 = vrot.slane %v163, 4
    %v165 = vadd.f32 %v163, %v164
    %v166 = vrot.slane %v165, 2
    %v167 = vadd.f32 %v165, %v166
    %v168 = vrot.slane %v167, 1
    %v169 = vadd.f32 %v167, %v168
    %vm170 = vcmask 1040384
    %v171 = vsel %vm170, %v160, %v169
    %vm172 = vcmask 1041408
    %v173 = vsel %vm172, %v171, 0.0
    %174 = vst [vmem:[%s3] sm:$0xff] %v173
  $region17: #{_lambda_.15} parent=0 // pred_fallthru
    _
  // Predicated region
  $region18: #{_lambda_.15} parent=0 // pred_check
    _
  $region19: #{_lambda_.15} parent=0 // pred_check_branch
    %176 = sbr.rel (0) target = $region21
  $region20: #{_lambda_.15} parent=0 // pred_region
    _
  $region21: #{_lambda_.15} parent=0 // pred_fallthru
    _
  // Predicated region
  $region22: #{_lambda_.15} parent=0 // pred_check
    _
  $region23: #{_lambda_.15} parent=0 // pred_check_branch
    %178 = sbr.rel (0) target = $region25
  $region24: #{_lambda_.15} parent=0 // pred_region
    _
  $region25: #{_lambda_.15} parent=0 // pred_fallthru
    _
  // Predicated region
  $region26: #{_lambda_.15} parent=0 // pred_check
    _
  $region27: #{_lambda_.15} parent=0 // pred_check_branch
    %180 = sbr.rel (0) target = $region29
  $region28: #{_lambda_.15} parent=0 // pred_region
    _
  $region29: #{_lambda_.15} parent=0 // pred_fallthru
    _
  // Predicated region
  $region30: #{_lambda_.15} parent=0 // pred_check
    _
  $region31: #{_lambda_.15} parent=0 // pred_check_branch
    %182 = sbr.rel (0) target = $region33
  $region32: #{_lambda_.15} parent=0 // pred_region
    _
  $region33: #{_lambda_.15} parent=0 // pred_fallthru
    _

// kernel: _lambda_.14
$region0: #{_lambda_.14}
  #allocation0 [shape = 'u32[]', space=smem, size = 0x4, offset = 0x4, fixed_abs, tag = 'smem constant byte address 0x4 - core index']
  #allocation1 [shape = 'u32[144,128]{1,0:T(1,128)}', space=vmem, size = 0x12000, scoped, tag = 'internal scratch']
  #allocation2 [shape = 'f32[16,128]{1,0:T(8,128)}', space=vmem, size = 0x2000, scoped, tag = 'scratch operand']
  %s0 = inlined_call_operand.vmem [shape: bf16[16,128], index: 0, kind: input, shape index: {}]
  %s1 = inlined_call_operand.vmem [shape: bf16[128,128], index: 1, kind: input, shape index: {}]
  %s2 = inlined_call_operand.vmem [shape: bf16[16,128], index: 2, kind: output, shape index: {}]
  %s3 = sld [smem:[#allocation0]]
  $region26: #{_lambda_.14} parent=0
    _
  %s5 = ssub.s32 1, %s3
  %s6 = scalar_select 0, %s5, %s3
  // Predicated region
  $region2: #{_lambda_.14} parent=0 // pred_check
    _
  $region3: #{_lambda_.14} parent=0 // pred_check_branch
    %8 = sbr.rel (0) target = $region5
  $region4: #{_lambda_.14} parent=0 // pred_region
    _
  $region5: #{_lambda_.14} parent=0 // pred_fallthru
    _
  // Predicated region
  $region6: #{_lambda_.14} parent=0 // pred_check
    _
  $region7: #{_lambda_.14} parent=0 // pred_check_branch
    %10 = sbr.rel (0) target = $region9
  $region8: #{_lambda_.14} parent=0 // pred_region
    _
  $region9: #{_lambda_.14} parent=0 // pred_fallthru
    _
  %p12 = scmp.eq.s32.totalorder 0, 0
  // Predicated region
  $region10: #{_lambda_.14} parent=0 // pred_check
    %p13 = pneg %p12
  $region11: #{_lambda_.14} parent=0 // pred_check_branch
    %15 = sbr.rel (%p13) target = $region13
  $region12: #{_lambda_.14} parent=0 // pred_region
    %16 = vst [vmem:[#allocation2] sm:$0xff] 0.0
    %17 = vst [vmem:[#allocation2 + $0x8] sm:$0xff] 0.0
  $region13: #{_lambda_.14} parent=0 // pred_fallthru
    _
  %v18 = vld [vmem:[#allocation2] sm:$0xff]
  %v19 = vld [vmem:[#allocation2 + $0x8] sm:$0xff]
  %v20 = vld [vmem:[%s0] sm:$0xf]
  %v21 = vld [vmem:[%s0 + $0x4] sm:$0xf]
  %v22 = vld [vmem:[%s1] sm:$0xf]
  %v23 = vld [vmem:[%s1 + $0x4] sm:$0xf]
  %v24 = vld [vmem:[%s1 + $0x8] sm:$0xf]
  %v25 = vld [vmem:[%s1 + $0xc] sm:$0xf]
  %v26 = vld [vmem:[%s1 + $0x10] sm:$0xf]
  %v27 = vld [vmem:[%s1 + $0x14] sm:$0xf]
  %v28 = vld [vmem:[%s1 + $0x18] sm:$0xf]
  %v29 = vld [vmem:[%s1 + $0x1c] sm:$0xf]
  %v30 = vld [vmem:[%s1 + $0x20] sm:$0xf]
  %v31 = vld [vmem:[%s1 + $0x24] sm:$0xf]
  %v32 = vld [vmem:[%s1 + $0x28] sm:$0xf]
  %v33 = vld [vmem:[%s1 + $0x2c] sm:$0xf]
  %v34 = vld [vmem:[%s1 + $0x30] sm:$0xf]
  %v35 = vld [vmem:[%s1 + $0x34] sm:$0xf]
  %v36 = vld [vmem:[%s1 + $0x38] sm:$0xf]
  %v37 = vld [vmem:[%s1 + $0x3c] sm:$0xf]
  %v40 = vunpack.c.l.b16 %v20
  %v41 = vunpack.c.l.b16 %v21
  %v42 = vpack.c.b16 %v41, %v40
  %v60 = vunpack.c.l.b16 %v22
  %v61 = vunpack.c.l.b16 %v23
  %v62 = vunpack.c.l.b16 %v24
  %v63 = vunpack.c.l.b16 %v25
  %v64 = vunpack.c.l.b16 %v26
  %v65 = vunpack.c.l.b16 %v27
  %v66 = vunpack.c.l.b16 %v28
  %v67 = vunpack.c.l.b16 %v29
  %v68 = vunpack.c.l.b16 %v30
  %v69 = vunpack.c.l.b16 %v31
  %v70 = vunpack.c.l.b16 %v32
  %v71 = vunpack.c.l.b16 %v33
  %v72 = vunpack.c.l.b16 %v34
  %v73 = vunpack.c.l.b16 %v35
  %v74 = vunpack.c.l.b16 %v36
  %v75 = vunpack.c.l.b16 %v37
  %v76 = vpack.c.b16 %v61, %v60
  %v77 = vpack.c.b16 %v63, %v62
  %v78 = vpack.c.b16 %v65, %v64
  %v79 = vpack.c.b16 %v67, %v66
  %v80 = vpack.c.b16 %v69, %v68
  %v81 = vpack.c.b16 %v71, %v70
  %v82 = vpack.c.b16 %v73, %v72
  %v83 = vpack.c.b16 %v75, %v74
  %92 = vmatprep.subr.bf16.mxu0 0
  %93 = vmatpush1.bf16.msra.mxu0 %v76
  %94 = vmatprep.subr.bf16.mxu0 0
  %95 = vmatpush1.bf16.msra.mxu0 %v77
  %96 = vmatprep.subr.bf16.mxu0 0
  %97 = vmatpush1.bf16.msra.mxu0 %v78
  %98 = vmatprep.subr.bf16.mxu0 0
  %99 = vmatpush1.bf16.msra.mxu0 %v79
  %100 = vmatprep.subr.bf16.mxu0 0
  %101 = vmatpush1.bf16.msra.mxu0 %v80
  %102 = vmatprep.subr.bf16.mxu0 0
  %103 = vmatpush1.bf16.msra.mxu0 %v81
  %104 = vmatprep.subr.bf16.mxu0 0
  %105 = vmatpush1.bf16.msra.mxu0 %v82
  %106 = vmatprep.subr.bf16.mxu0 0
  %107 = vmatpush1.bf16.msra.mxu0 %v83
  %108 = vmatprep.subr.bf16.mxu0 0
  %109 = vmatpush1.bf16.msra.mxu0 0
  %110 = vmatprep.subr.bf16.mxu0 0
  %111 = vmatpush1.bf16.msra.mxu0 0
  %112 = vmatprep.subr.bf16.mxu0 0
  %113 = vmatpush1.bf16.msra.mxu0 0
  %114 = vmatprep.subr.bf16.mxu0 0
  %115 = vmatpush1.bf16.msra.mxu0 0
  %116 = vmatprep.subr.bf16.mxu0 0
  %117 = vmatpush1.bf16.msra.mxu0 0
  %118 = vmatprep.subr.bf16.mxu0 0
  %119 = vmatpush1.bf16.msra.mxu0 0
  %120 = vmatprep.subr.bf16.mxu0 0
  %121 = vmatpush1.bf16.msra.mxu0 0
  %122 = vmatprep.subr.bf16.mxu0 0
  %123 = vmatpush1.bf16.msra.mxu0 0
  %124 = vmatprep.mubr.bf16.mxu0 0
  %125 = vmatmul.mubr.bf16.gmra.mrb[0].mxu0 %v42
  %v126 = vpop.f32.mrb[0].mxu0
  %v127 = vadd.f32 0.0, %v126
  %v128 = vpop.f32.mrb[0].mxu0
  %v129 = vpop.f32.mrb[0].mxu0
  %v130 = vadd.f32 0.0, %v129
  %v131 = vpop.f32.mrb[0].mxu0
  %132 = vdwg.mxu0
  %v133 = vadd.f32 %v18, %v127
  %v134 = vadd.f32 %v19, %v130
  %135 = vst [vmem:[#allocation2] sm:$0xff] %v133
  %136 = vst [vmem:[#allocation2 + $0x8] sm:$0xff] %v134
  // Predicated region
  $region14: #{_lambda_.14} parent=0 // pred_check
    %p137 = pneg %p12
  $region15: #{_lambda_.14} parent=0 // pred_check_branch
    %139 = sbr.rel (%p137) target = $region17
  $region16: #{_lambda_.14} parent=0 // pred_region
    %v140 = vld [vmem:[#allocation2] sm:$0xff]
    %v141 = vld [vmem:[#allocation2 + $0x8] sm:$0xff]
    %vm142 = vcmp.ge.f32.partialorder %v140, 0.0
    %vm143 = vcmp.ge.f32.partialorder %v141, 0.0
    %v144 = vmul.f32 %v140, 0.2
    %v145 = vmul.f32 %v141, 0.2
    %v146 = vsel %vm142, %v140, %v144
    %v147 = vsel %vm143, %v141, %v145
    %v148 = vpack.c.bf16 %v147, %v146
    %v150 = vunpack.c.l.b16 %v148
    %v151 = vunpack.c.h.b16 %v148
    %v152 = vpack.c.b16 %v150, %v150
    %v153 = vpack.c.b16 %v151, %v151
    %156 = vst [vmem:[%s2] sm:$0xf] %v152
    %157 = vst [vmem:[%s2 + $0x4] sm:$0xf] %v153
  $region17: #{_lambda_.14} parent=0 // pred_fallthru
    _
  // Predicated region
  $region18: #{_lambda_.14} parent=0 // pred_check
    _
  $region19: #{_lambda_.14} parent=0 // pred_check_branch
    %159 = sbr.rel (0) target = $region21
  $region20: #{_lambda_.14} parent=0 // pred_region
    _
  $region21: #{_lambda_.14} parent=0 // pred_fallthru
    _
  // Predicated region
  $region22: #{_lambda_.14} parent=0 // pred_check
    _
  $region23: #{_lambda_.14} parent=0 // pred_check_branch
    %161 = sbr.rel (0) target = $region25
  $region24: #{_lambda_.14} parent=0 // pred_region
    _
  $region25: #{_lambda_.14} parent=0 // pred_fallthru
    _

// kernel: _lambda_.16
$region0: #{_lambda_.16}
  #allocation0 [shape = 'u32[]', space=smem, size = 0x4, offset = 0x4, fixed_abs, tag = 'smem constant byte address 0x4 - core index']
  #allocation1 [shape = 'u32[144,128]{1,0:T(1,128)}', space=vmem, size = 0x12000, scoped, tag = 'internal scratch']
  %s0 = inlined_call_operand.vmem [shape: bf16[16,128], index: 0, kind: input, shape index: {}]
  %s1 = inlined_call_operand.vmem [shape: f32[1,128], index: 1, kind: input, shape index: {}]
  %s2 = inlined_call_operand.vmem [shape: f32[1,128], index: 2, kind: input, shape index: {}]
  %s3 = inlined_call_operand.vmem [shape: bf16[16,128], index: 3, kind: output, shape index: {}]
  %s4 = sld [smem:[#allocation0]]
  $region22: #{_lambda_.16} parent=0
    _
  %s6 = ssub.s32 1, %s4
  %s7 = scalar_select 0, %s6, %s4
  // Predicated region
  $region2: #{_lambda_.16} parent=0 // pred_check
    _
  $region3: #{_lambda_.16} parent=0 // pred_check_branch
    %9 = sbr.rel (0) target = $region5
  $region4: #{_lambda_.16} parent=0 // pred_region
    _
  $region5: #{_lambda_.16} parent=0 // pred_fallthru
    _
  // Predicated region
  $region6: #{_lambda_.16} parent=0 // pred_check
    _
  $region7: #{_lambda_.16} parent=0 // pred_check_branch
    %11 = sbr.rel (0) target = $region9
  $region8: #{_lambda_.16} parent=0 // pred_region
    _
  $region9: #{_lambda_.16} parent=0 // pred_fallthru
    _
  // Predicated region
  $region10: #{_lambda_.16} parent=0 // pred_check
    _
  $region11: #{_lambda_.16} parent=0 // pred_check_branch
    %13 = sbr.rel (0) target = $region13
  $region12: #{_lambda_.16} parent=0 // pred_region
    _
  $region13: #{_lambda_.16} parent=0 // pred_fallthru
    _
  %v14 = vld [vmem:[%s0] sm:$0xf]
  %v15 = vld [vmem:[%s0 + $0x4] sm:$0xf]
  %v16 = vunpack.c.l.bf16 %v14
  %v17 = vunpack.c.l.bf16 %v15
  %v18 = vld [vmem:[%s1] sm:$0x1]
  %v20 = vlaneseq
  %v21 = vshrl.u32 %v20, 7
  %v22 = vsub.s32 0, %v21
  %v23 = vrot.slane %v18, %v22
  %v25 = vmul.f32 %v16, %v23
  %v26 = vmul.f32 %v17, %v23
  %v27 = vld [vmem:[%s2] sm:$0x1]
  %v29 = vlaneseq
  %v30 = vshrl.u32 %v29, 7
  %v31 = vsub.s32 0, %v30
  %v32 = vrot.slane %v27, %v31
  %v34 = vadd.f32 %v25, %v32
  %v35 = vadd.f32 %v26, %v32
  %vm36 = vcmp.ge.f32.partialorder %v34, 0.0
  %vm37 = vcmp.ge.f32.partialorder %v35, 0.0
  %v38 = vmul.f32 %v34, 0.2
  %v39 = vmul.f32 %v35, 0.2
  %v40 = vsel %vm36, %v34, %v38
  %v41 = vsel %vm37, %v35, %v39
  %v42 = vpack.c.bf16 %v41, %v40
  %v44 = vunpack.c.l.b16 %v42
  %v45 = vunpack.c.h.b16 %v42
  %v46 = vpack.c.b16 %v44, %v44
  %v47 = vpack.c.b16 %v45, %v45
  %50 = vst [vmem:[%s3] sm:$0xf] %v46
  %51 = vst [vmem:[%s3 + $0x4] sm:$0xf] %v47
  // Predicated region
  $region14: #{_lambda_.16} parent=0 // pred_check
    _
  $region15: #{_lambda_.16} parent=0 // pred_check_branch
    %53 = sbr.rel (0) target = $region17
  $region16: #{_lambda_.16} parent=0 // pred_region
    _
  $region17: #{_lambda_.16} parent=0 // pred_fallthru
    _
  // Predicated region
  $region18: #{_lambda_.16} parent=0 // pred_check
    _
  $region19: #{_lambda_.16} parent=0 // pred_check_branch
    %55 = sbr.rel (0) target = $region21
  $region20: #{_lambda_.16} parent=0 // pred_region
    _
  $region21: #{_lambda_.16} parent=0 // pred_fallthru
    _

// kernel: _lambda_.17
$region0: #{_lambda_.17}
  #allocation0 [shape = 'u32[]', space=smem, size = 0x4, offset = 0x4, fixed_abs, tag = 'smem constant byte address 0x4 - core index']
  #allocation1 [shape = 'u32[144,128]{1,0:T(1,128)}', space=vmem, size = 0x12000, scoped, tag = 'internal scratch']
  #allocation2 [shape = 'f32[16,128]{1,0:T(8,128)}', space=vmem, size = 0x2000, scoped, tag = 'scratch operand']
  %s0 = inlined_call_operand.vmem [shape: bf16[16,128], index: 0, kind: input, shape index: {}]
  %s1 = inlined_call_operand.vmem [shape: bf16[128,128], index: 1, kind: input, shape index: {}]
  %s2 = inlined_call_operand.vmem [shape: bf16[16,128], index: 2, kind: output, shape index: {}]
  %s3 = sld [smem:[#allocation0]]
  $region26: #{_lambda_.17} parent=0
    _
  %s5 = ssub.s32 1, %s3
  %s6 = scalar_select 0, %s5, %s3
  // Predicated region
  $region2: #{_lambda_.17} parent=0 // pred_check
    _
  $region3: #{_lambda_.17} parent=0 // pred_check_branch
    %8 = sbr.rel (0) target = $region5
  $region4: #{_lambda_.17} parent=0 // pred_region
    _
  $region5: #{_lambda_.17} parent=0 // pred_fallthru
    _
  // Predicated region
  $region6: #{_lambda_.17} parent=0 // pred_check
    _
  $region7: #{_lambda_.17} parent=0 // pred_check_branch
    %10 = sbr.rel (0) target = $region9
  $region8: #{_lambda_.17} parent=0 // pred_region
    _
  $region9: #{_lambda_.17} parent=0 // pred_fallthru
    _
  %p12 = scmp.eq.s32.totalorder 0, 0
  // Predicated region
  $region10: #{_lambda_.17} parent=0 // pred_check
    %p13 = pneg %p12
  $region11: #{_lambda_.17} parent=0 // pred_check_branch
    %15 = sbr.rel (%p13) target = $region13
  $region12: #{_lambda_.17} parent=0 // pred_region
    %16 = vst [vmem:[#allocation2] sm:$0xff] 0.0
    %17 = vst [vmem:[#allocation2 + $0x8] sm:$0xff] 0.0
  $region13: #{_lambda_.17} parent=0 // pred_fallthru
    _
  %v18 = vld [vmem:[#allocation2] sm:$0xff]
  %v19 = vld [vmem:[#allocation2 + $0x8] sm:$0xff]
  %v20 = vld [vmem:[%s0] sm:$0xf]
  %v21 = vld [vmem:[%s0 + $0x4] sm:$0xf]
  %v22 = vld [vmem:[%s1] sm:$0xf]
  %v23 = vld [vmem:[%s1 + $0x4] sm:$0xf]
  %v24 = vld [vmem:[%s1 + $0x8] sm:$0xf]
  %v25 = vld [vmem:[%s1 + $0xc] sm:$0xf]
  %v26 = vld [vmem:[%s1 + $0x10] sm:$0xf]
  %v27 = vld [vmem:[%s1 + $0x14] sm:$0xf]
  %v28 = vld [vmem:[%s1 + $0x18] sm:$0xf]
  %v29 = vld [vmem:[%s1 + $0x1c] sm:$0xf]
  %v30 = vld [vmem:[%s1 + $0x20] sm:$0xf]
  %v31 = vld [vmem:[%s1 + $0x24] sm:$0xf]
  %v32 = vld [vmem:[%s1 + $0x28] sm:$0xf]
  %v33 = vld [vmem:[%s1 + $0x2c] sm:$0xf]
  %v34 = vld [vmem:[%s1 + $0x30] sm:$0xf]
  %v35 = vld [vmem:[%s1 + $0x34] sm:$0xf]
  %v36 = vld [vmem:[%s1 + $0x38] sm:$0xf]
  %v37 = vld [vmem:[%s1 + $0x3c] sm:$0xf]
  %v40 = vunpack.c.l.b16 %v20
  %v41 = vunpack.c.l.b16 %v21
  %v42 = vpack.c.b16 %v41, %v40
  %v60 = vunpack.c.l.b16 %v22
  %v61 = vunpack.c.l.b16 %v23
  %v62 = vunpack.c.l.b16 %v24
  %v63 = vunpack.c.l.b16 %v25
  %v64 = vunpack.c.l.b16 %v26
  %v65 = vunpack.c.l.b16 %v27
  %v66 = vunpack.c.l.b16 %v28
  %v67 = vunpack.c.l.b16 %v29
  %v68 = vunpack.c.l.b16 %v30
  %v69 = vunpack.c.l.b16 %v31
  %v70 = vunpack.c.l.b16 %v32
  %v71 = vunpack.c.l.b16 %v33
  %v72 = vunpack.c.l.b16 %v34
  %v73 = vunpack.c.l.b16 %v35
  %v74 = vunpack.c.l.b16 %v36
  %v75 = vunpack.c.l.b16 %v37
  %v76 = vpack.c.b16 %v61, %v60
  %v77 = vpack.c.b16 %v63, %v62
  %v78 = vpack.c.b16 %v65, %v64
  %v79 = vpack.c.b16 %v67, %v66
  %v80 = vpack.c.b16 %v69, %v68
  %v81 = vpack.c.b16 %v71, %v70
  %v82 = vpack.c.b16 %v73, %v72
  %v83 = vpack.c.b16 %v75, %v74
  %92 = vmatprep.subr.bf16.mxu0 0
  %93 = vmatpush1.bf16.msra.mxu0 %v76
  %94 = vmatprep.subr.bf16.mxu0 0
  %95 = vmatpush1.bf16.msra.mxu0 %v77
  %96 = vmatprep.subr.bf16.mxu0 0
  %97 = vmatpush1.bf16.msra.mxu0 %v78
  %98 = vmatprep.subr.bf16.mxu0 0
  %99 = vmatpush1.bf16.msra.mxu0 %v79
  %100 = vmatprep.subr.bf16.mxu0 0
  %101 = vmatpush1.bf16.msra.mxu0 %v80
  %102 = vmatprep.subr.bf16.mxu0 0
  %103 = vmatpush1.bf16.msra.mxu0 %v81
  %104 = vmatprep.subr.bf16.mxu0 0
  %105 = vmatpush1.bf16.msra.mxu0 %v82
  %106 = vmatprep.subr.bf16.mxu0 0
  %107 = vmatpush1.bf16.msra.mxu0 %v83
  %108 = vmatprep.subr.bf16.mxu0 0
  %109 = vmatpush1.bf16.msra.mxu0 0
  %110 = vmatprep.subr.bf16.mxu0 0
  %111 = vmatpush1.bf16.msra.mxu0 0
  %112 = vmatprep.subr.bf16.mxu0 0
  %113 = vmatpush1.bf16.msra.mxu0 0
  %114 = vmatprep.subr.bf16.mxu0 0
  %115 = vmatpush1.bf16.msra.mxu0 0
  %116 = vmatprep.subr.bf16.mxu0 0
  %117 = vmatpush1.bf16.msra.mxu0 0
  %118 = vmatprep.subr.bf16.mxu0 0
  %119 = vmatpush1.bf16.msra.mxu0 0
  %120 = vmatprep.subr.bf16.mxu0 0
  %121 = vmatpush1.bf16.msra.mxu0 0
  %122 = vmatprep.subr.bf16.mxu0 0
  %123 = vmatpush1.bf16.msra.mxu0 0
  %124 = vmatprep.mubr.bf16.mxu0 0
  %125 = vmatmul.mubr.bf16.gmra.mrb[0].mxu0 %v42
  %v126 = vpop.f32.mrb[0].mxu0
  %v127 = vadd.f32 0.0, %v126
  %v128 = vpop.f32.mrb[0].mxu0
  %v129 = vpop.f32.mrb[0].mxu0
  %v130 = vadd.f32 0.0, %v129
  %v131 = vpop.f32.mrb[0].mxu0
  %132 = vdwg.mxu0
  %v133 = vadd.f32 %v18, %v127
  %v134 = vadd.f32 %v19, %v130
  %135 = vst [vmem:[#allocation2] sm:$0xff] %v133
  %136 = vst [vmem:[#allocation2 + $0x8] sm:$0xff] %v134
  // Predicated region
  $region14: #{_lambda_.17} parent=0 // pred_check
    %p137 = pneg %p12
  $region15: #{_lambda_.17} parent=0 // pred_check_branch
    %139 = sbr.rel (%p137) target = $region17
  $region16: #{_lambda_.17} parent=0 // pred_region
    %v140 = vld [vmem:[#allocation2] sm:$0xff]
    %v141 = vld [vmem:[#allocation2 + $0x8] sm:$0xff]
    %v142 = vpack.c.bf16 %v141, %v140
    %v144 = vunpack.c.l.b16 %v142
    %v145 = vunpack.c.h.b16 %v142
    %v146 = vpack.c.b16 %v144, %v144
    %v147 = vpack.c.b16 %v145, %v145
    %150 = vst [vmem:[%s2] sm:$0xf] %v146
    %151 = vst [vmem:[%s2 + $0x4] sm:$0xf] %v147
  $region17: #{_lambda_.17} parent=0 // pred_fallthru
    _
  // Predicated region
  $region18: #{_lambda_.17} parent=0 // pred_check
    _
  $region19: #{_lambda_.17} parent=0 // pred_check_branch
    %153 = sbr.rel (0) target = $region21
  $region20: #{_lambda_.17} parent=0 // pred_region
    _
  $region21: #{_lambda_.17} parent=0 // pred_fallthru
    _
  // Predicated region
  $region22: #{_lambda_.17} parent=0 // pred_check
    _
  $region23: #{_lambda_.17} parent=0 // pred_check_branch
    %155 = sbr.rel (0) target = $region25
  $region24: #{_lambda_.17} parent=0 // pred_region
    _
  $region25: #{_lambda_.17} parent=0 // pred_fallthru
    _

// kernel: _lambda_.19
$region0: #{_lambda_.19}
  #allocation0 [shape = 'u32[]', space=smem, size = 0x4, offset = 0x4, fixed_abs, tag = 'smem constant byte address 0x4 - core index']
  #allocation1 [shape = 'u32[144,128]{1,0:T(1,128)}', space=vmem, size = 0x12000, scoped, tag = 'internal scratch']
  %s0 = inlined_call_operand.vmem [shape: bf16[16,128], index: 0, kind: input, shape index: {}]
  %s1 = inlined_call_operand.vmem [shape: f32[1,128], index: 1, kind: input, shape index: {}]
  %s2 = inlined_call_operand.vmem [shape: f32[1,128], index: 2, kind: input, shape index: {}]
  %s3 = inlined_call_operand.vmem [shape: bf16[16,128], index: 3, kind: output, shape index: {}]
  %s4 = sld [smem:[#allocation0]]
  $region22: #{_lambda_.19} parent=0
    _
  %s6 = ssub.s32 1, %s4
  %s7 = scalar_select 0, %s6, %s4
  // Predicated region
  $region2: #{_lambda_.19} parent=0 // pred_check
    _
  $region3: #{_lambda_.19} parent=0 // pred_check_branch
    %9 = sbr.rel (0) target = $region5
  $region4: #{_lambda_.19} parent=0 // pred_region
    _
  $region5: #{_lambda_.19} parent=0 // pred_fallthru
    _
  // Predicated region
  $region6: #{_lambda_.19} parent=0 // pred_check
    _
  $region7: #{_lambda_.19} parent=0 // pred_check_branch
    %11 = sbr.rel (0) target = $region9
  $region8: #{_lambda_.19} parent=0 // pred_region
    _
  $region9: #{_lambda_.19} parent=0 // pred_fallthru
    _
  // Predicated region
  $region10: #{_lambda_.19} parent=0 // pred_check
    _
  $region11: #{_lambda_.19} parent=0 // pred_check_branch
    %13 = sbr.rel (0) target = $region13
  $region12: #{_lambda_.19} parent=0 // pred_region
    _
  $region13: #{_lambda_.19} parent=0 // pred_fallthru
    _
  %v14 = vld [vmem:[%s0] sm:$0xf]
  %v15 = vld [vmem:[%s0 + $0x4] sm:$0xf]
  %v16 = vunpack.c.l.bf16 %v14
  %v17 = vunpack.c.l.bf16 %v15
  %v18 = vld [vmem:[%s1] sm:$0x1]
  %v20 = vlaneseq
  %v21 = vshrl.u32 %v20, 7
  %v22 = vsub.s32 0, %v21
  %v23 = vrot.slane %v18, %v22
  %v25 = vmul.f32 %v16, %v23
  %v26 = vmul.f32 %v17, %v23
  %v27 = vld [vmem:[%s2] sm:$0x1]
  %v29 = vlaneseq
  %v30 = vshrl.u32 %v29, 7
  %v31 = vsub.s32 0, %v30
  %v32 = vrot.slane %v27, %v31
  %v34 = vadd.f32 %v25, %v32
  %v35 = vadd.f32 %v26, %v32
  %v36 = vmax.f32 %v34, 0.0
  %v37 = vmax.f32 %v35, 0.0
  %v38 = vpack.c.bf16 %v37, %v36
  %v40 = vunpack.c.l.b16 %v38
  %v41 = vunpack.c.h.b16 %v38
  %v42 = vpack.c.b16 %v40, %v40
  %v43 = vpack.c.b16 %v41, %v41
  %46 = vst [vmem:[%s3] sm:$0xf] %v42
  %47 = vst [vmem:[%s3 + $0x4] sm:$0xf] %v43
  // Predicated region
  $region14: #{_lambda_.19} parent=0 // pred_check
    _
  $region15: #{_lambda_.19} parent=0 // pred_check_branch
    %49 = sbr.rel (0) target = $region17
  $region16: #{_lambda_.19} parent=0 // pred_region
    _
  $region17: #{_lambda_.19} parent=0 // pred_fallthru
    _
  // Predicated region
  $region18: #{_lambda_.19} parent=0 // pred_check
    _
  $region19: #{_lambda_.19} parent=0 // pred_check_branch
    %51 = sbr.rel (0) target = $region21
  $region20: #{_lambda_.19} parent=0 // pred_region
    _
  $region21: #{_lambda_.19} parent=0 // pred_fallthru
    _

// kernel: _lambda_.24
$region0: #{_lambda_.24}
  #allocation0 [shape = 'u32[]', space=smem, size = 0x4, offset = 0x4, fixed_abs, tag = 'smem constant byte address 0x4 - core index']
  #allocation1 [shape = 'u32[144,128]{1,0:T(1,128)}', space=vmem, size = 0x12000, scoped, tag = 'internal scratch']
  %s0 = inlined_call_operand.vmem [shape: bf16[32,128], index: 0, kind: input, shape index: {}]
  %s1 = inlined_call_operand.vmem [shape: f32[1,128], index: 1, kind: input, shape index: {}]
  %s2 = inlined_call_operand.vmem [shape: f32[1,128], index: 2, kind: input, shape index: {}]
  %s3 = inlined_call_operand.vmem [shape: bf16[32,128], index: 3, kind: output, shape index: {}]
  %s4 = sld [smem:[#allocation0]]
  $region22: #{_lambda_.24} parent=0
    _
  %s6 = ssub.s32 1, %s4
  %s7 = scalar_select 0, %s6, %s4
  // Predicated region
  $region2: #{_lambda_.24} parent=0 // pred_check
    _
  $region3: #{_lambda_.24} parent=0 // pred_check_branch
    %9 = sbr.rel (0) target = $region5
  $region4: #{_lambda_.24} parent=0 // pred_region
    _
  $region5: #{_lambda_.24} parent=0 // pred_fallthru
    _
  // Predicated region
  $region6: #{_lambda_.24} parent=0 // pred_check
    _
  $region7: #{_lambda_.24} parent=0 // pred_check_branch
    %11 = sbr.rel (0) target = $region9
  $region8: #{_lambda_.24} parent=0 // pred_region
    _
  $region9: #{_lambda_.24} parent=0 // pred_fallthru
    _
  // Predicated region
  $region10: #{_lambda_.24} parent=0 // pred_check
    _
  $region11: #{_lambda_.24} parent=0 // pred_check_branch
    %13 = sbr.rel (0) target = $region13
  $region12: #{_lambda_.24} parent=0 // pred_region
    _
  $region13: #{_lambda_.24} parent=0 // pred_fallthru
    _
  %v14 = vld [vmem:[%s0] sm:$0xf]
  %v15 = vld [vmem:[%s0 + $0x4] sm:$0xf]
  %v16 = vld [vmem:[%s0 + $0x8] sm:$0xf]
  %v17 = vld [vmem:[%s0 + $0xc] sm:$0xf]
  %v18 = vunpack.c.l.bf16 %v14
  %v19 = vunpack.c.l.bf16 %v15
  %v20 = vunpack.c.l.bf16 %v16
  %v21 = vunpack.c.l.bf16 %v17
  %v22 = vld [vmem:[%s1] sm:$0x1]
  %v24 = vlaneseq
  %v25 = vshrl.u32 %v24, 7
  %v26 = vsub.s32 0, %v25
  %v27 = vrot.slane %v22, %v26
  %v29 = vmul.f32 %v18, %v27
  %v30 = vmul.f32 %v19, %v27
  %v31 = vmul.f32 %v20, %v27
  %v32 = vmul.f32 %v21, %v27
  %v33 = vld [vmem:[%s2] sm:$0x1]
  %v35 = vlaneseq
  %v36 = vshrl.u32 %v35, 7
  %v37 = vsub.s32 0, %v36
  %v38 = vrot.slane %v33, %v37
  %v40 = vadd.f32 %v29, %v38
  %v41 = vadd.f32 %v30, %v38
  %v42 = vadd.f32 %v31, %v38
  %v43 = vadd.f32 %v32, %v38
  %v44 = vmax.f32 %v40, 0.0
  %v45 = vmax.f32 %v41, 0.0
  %v46 = vmax.f32 %v42, 0.0
  %v47 = vmax.f32 %v43, 0.0
  %v48 = vpack.c.bf16 %v45, %v44
  %v49 = vpack.c.bf16 %v47, %v46
  %v52 = vunpack.c.l.b16 %v48
  %v53 = vunpack.c.h.b16 %v48
  %v54 = vunpack.c.l.b16 %v49
  %v55 = vunpack.c.h.b16 %v49
  %v56 = vpack.c.b16 %v52, %v52
  %v57 = vpack.c.b16 %v53, %v53
  %v58 = vpack.c.b16 %v54, %v54
  %v59 = vpack.c.b16 %v55, %v55
  %64 = vst [vmem:[%s3] sm:$0xf] %v56
  %65 = vst [vmem:[%s3 + $0x4] sm:$0xf] %v57
  %66 = vst [vmem:[%s3 + $0x8] sm:$0xf] %v58
  %67 = vst [vmem:[%s3 + $0xc] sm:$0xf] %v59
  // Predicated region
  $region14: #{_lambda_.24} parent=0 // pred_check
    _
  $region15: #{_lambda_.24} parent=0 // pred_check_branch
    %69 = sbr.rel (0) target = $region17
  $region16: #{_lambda_.24} parent=0 // pred_region
    _
  $region17: #{_lambda_.24} parent=0 // pred_fallthru
    _
  // Predicated region
  $region18: #{_lambda_.24} parent=0 // pred_check
    _
  $region19: #{_lambda_.24} parent=0 // pred_check_branch
    %71 = sbr.rel (0) target = $region21
  $region20: #{_lambda_.24} parent=0 // pred_region
    _
  $region21: #{_lambda_.24} parent=0 // pred_fallthru
    _

// kernel: _lambda_.23
$region0: #{_lambda_.23}
  #allocation0 [shape = 'u32[]', space=smem, size = 0x4, offset = 0x4, fixed_abs, tag = 'smem constant byte address 0x4 - core index']
  #allocation1 [shape = 'u32[144,128]{1,0:T(1,128)}', space=vmem, size = 0x12000, scoped, tag = 'internal scratch']
  #allocation2 [shape = 'f32[32,128]{1,0:T(8,128)}', space=vmem, size = 0x4000, scoped, tag = 'scratch operand']
  %s0 = inlined_call_operand.vmem [shape: bf16[32,128], index: 0, kind: input, shape index: {}]
  %s1 = inlined_call_operand.vmem [shape: bf16[128,128], index: 1, kind: input, shape index: {}]
  %s2 = inlined_call_operand.vmem [shape: bf16[32,128], index: 2, kind: output, shape index: {0}]
  %s3 = inlined_call_operand.vmem [shape: f32[8,128], index: 3, kind: output, shape index: {1}]
  %4 = xla_tuple %s2, %s3
  %s5 = sld [smem:[#allocation0]]
  $region34: #{_lambda_.23} parent=0
    _
  %s7 = ssub.s32 1, %s5
  %s8 = scalar_select 0, %s7, %s5
  // Predicated region
  $region2: #{_lambda_.23} parent=0 // pred_check
    _
  $region3: #{_lambda_.23} parent=0 // pred_check_branch
    %10 = sbr.rel (0) target = $region5
  $region4: #{_lambda_.23} parent=0 // pred_region
    _
  $region5: #{_lambda_.23} parent=0 // pred_fallthru
    _
  // Predicated region
  $region6: #{_lambda_.23} parent=0 // pred_check
    _
  $region7: #{_lambda_.23} parent=0 // pred_check_branch
    %12 = sbr.rel (0) target = $region9
  $region8: #{_lambda_.23} parent=0 // pred_region
    _
  $region9: #{_lambda_.23} parent=0 // pred_fallthru
    _
  %p14 = scmp.eq.s32.totalorder 0, 0
  // Predicated region
  $region10: #{_lambda_.23} parent=0 // pred_check
    %p15 = pneg %p14
  $region11: #{_lambda_.23} parent=0 // pred_check_branch
    %17 = sbr.rel (%p15) target = $region13
  $region12: #{_lambda_.23} parent=0 // pred_region
    %18 = vst [vmem:[#allocation2] sm:$0xff] 0.0
    %19 = vst [vmem:[#allocation2 + $0x8] sm:$0xff] 0.0
    %20 = vst [vmem:[#allocation2 + $0x10] sm:$0xff] 0.0
    %21 = vst [vmem:[#allocation2 + $0x18] sm:$0xff] 0.0
  $region13: #{_lambda_.23} parent=0 // pred_fallthru
    _
  %v22 = vld [vmem:[#allocation2] sm:$0xff]
  %v23 = vld [vmem:[#allocation2 + $0x8] sm:$0xff]
  %v24 = vld [vmem:[#allocation2 + $0x10] sm:$0xff]
  %v25 = vld [vmem:[#allocation2 + $0x18] sm:$0xff]
  %v26 = vld [vmem:[%s0] sm:$0xf]
  %v27 = vld [vmem:[%s0 + $0x4] sm:$0xf]
  %v28 = vld [vmem:[%s0 + $0x8] sm:$0xf]
  %v29 = vld [vmem:[%s0 + $0xc] sm:$0xf]
  %v30 = vld [vmem:[%s1] sm:$0xf]
  %v31 = vld [vmem:[%s1 + $0x4] sm:$0xf]
  %v32 = vld [vmem:[%s1 + $0x8] sm:$0xf]
  %v33 = vld [vmem:[%s1 + $0xc] sm:$0xf]
  %v34 = vld [vmem:[%s1 + $0x10] sm:$0xf]
  %v35 = vld [vmem:[%s1 + $0x14] sm:$0xf]
  %v36 = vld [vmem:[%s1 + $0x18] sm:$0xf]
  %v37 = vld [vmem:[%s1 + $0x1c] sm:$0xf]
  %v38 = vld [vmem:[%s1 + $0x20] sm:$0xf]
  %v39 = vld [vmem:[%s1 + $0x24] sm:$0xf]
  %v40 = vld [vmem:[%s1 + $0x28] sm:$0xf]
  %v41 = vld [vmem:[%s1 + $0x2c] sm:$0xf]
  %v42 = vld [vmem:[%s1 + $0x30] sm:$0xf]
  %v43 = vld [vmem:[%s1 + $0x34] sm:$0xf]
  %v44 = vld [vmem:[%s1 + $0x38] sm:$0xf]
  %v45 = vld [vmem:[%s1 + $0x3c] sm:$0xf]
  %v50 = vunpack.c.l.b16 %v26
  %v51 = vunpack.c.l.b16 %v27
  %v52 = vunpack.c.l.b16 %v28
  %v53 = vunpack.c.l.b16 %v29
  %v54 = vpack.c.b16 %v51, %v50
  %v55 = vpack.c.b16 %v53, %v52
  %v74 = vunpack.c.l.b16 %v30
  %v75 = vunpack.c.l.b16 %v31
  %v76 = vunpack.c.l.b16 %v32
  %v77 = vunpack.c.l.b16 %v33
  %v78 = vunpack.c.l.b16 %v34
  %v79 = vunpack.c.l.b16 %v35
  %v80 = vunpack.c.l.b16 %v36
  %v81 = vunpack.c.l.b16 %v37
  %v82 = vunpack.c.l.b16 %v38
  %v83 = vunpack.c.l.b16 %v39
  %v84 = vunpack.c.l.b16 %v40
  %v85 = vunpack.c.l.b16 %v41
  %v86 = vunpack.c.l.b16 %v42
  %v87 = vunpack.c.l.b16 %v43
  %v88 = vunpack.c.l.b16 %v44
  %v89 = vunpack.c.l.b16 %v45
  %v90 = vpack.c.b16 %v75, %v74
  %v91 = vpack.c.b16 %v77, %v76
  %v92 = vpack.c.b16 %v79, %v78
  %v93 = vpack.c.b16 %v81, %v80
  %v94 = vpack.c.b16 %v83, %v82
  %v95 = vpack.c.b16 %v85, %v84
  %v96 = vpack.c.b16 %v87, %v86
  %v97 = vpack.c.b16 %v89, %v88
  %106 = vmatprep.subr.bf16.mxu0 0
  %107 = vmatpush1.bf16.msra.mxu0 %v90
  %108 = vmatprep.subr.bf16.mxu0 0
  %109 = vmatpush1.bf16.msra.mxu0 %v91
  %110 = vmatprep.subr.bf16.mxu0 0
  %111 = vmatpush1.bf16.msra.mxu0 %v92
  %112 = vmatprep.subr.bf16.mxu0 0
  %113 = vmatpush1.bf16.msra.mxu0 %v93
  %114 = vmatprep.subr.bf16.mxu0 0
  %115 = vmatpush1.bf16.msra.mxu0 %v94
  %116 = vmatprep.subr.bf16.mxu0 0
  %117 = vmatpush1.bf16.msra.mxu0 %v95
  %118 = vmatprep.subr.bf16.mxu0 0
  %119 = vmatpush1.bf16.msra.mxu0 %v96
  %120 = vmatprep.subr.bf16.mxu0 0
  %121 = vmatpush1.bf16.msra.mxu0 %v97
  %122 = vmatprep.subr.bf16.mxu0 0
  %123 = vmatpush1.bf16.msra.mxu0 0
  %124 = vmatprep.subr.bf16.mxu0 0
  %125 = vmatpush1.bf16.msra.mxu0 0
  %126 = vmatprep.subr.bf16.mxu0 0
  %127 = vmatpush1.bf16.msra.mxu0 0
  %128 = vmatprep.subr.bf16.mxu0 0
  %129 = vmatpush1.bf16.msra.mxu0 0
  %130 = vmatprep.subr.bf16.mxu0 0
  %131 = vmatpush1.bf16.msra.mxu0 0
  %132 = vmatprep.subr.bf16.mxu0 0
  %133 = vmatpush1.bf16.msra.mxu0 0
  %134 = vmatprep.subr.bf16.mxu0 0
  %135 = vmatpush1.bf16.msra.mxu0 0
  %136 = vmatprep.subr.bf16.mxu0 0
  %137 = vmatpush1.bf16.msra.mxu0 0
  %138 = vmatprep.mubr.bf16.mxu0 0
  %139 = vmatmul.mubr.bf16.gmra.mrb[0].mxu0 %v54
  %v140 = vpop.f32.mrb[0].mxu0
  %v141 = vadd.f32 0.0, %v140
  %v142 = vpop.f32.mrb[0].mxu0
  %v143 = vpop.f32.mrb[0].mxu0
  %v144 = vadd.f32 0.0, %v143
  %v145 = vpop.f32.mrb[0].mxu0
  %146 = vmatprep.mubr.bf16.mxu0 0
  %147 = vmatmul.mubr.bf16.gmra.mrb[0].mxu0 %v55
  %v148 = vpop.f32.mrb[0].mxu0
  %v149 = vadd.f32 0.0, %v148
  %v150 = vpop.f32.mrb[0].mxu0
  %v151 = vpop.f32.mrb[0].mxu0
  %v152 = vadd.f32 0.0, %v151
  %v153 = vpop.f32.mrb[0].mxu0
  %154 = vdwg.mxu0
  %v155 = vadd.f32 %v22, %v141
  %v156 = vadd.f32 %v23, %v144
  %v157 = vadd.f32 %v24, %v149
  %v158 = vadd.f32 %v25, %v152
  %159 = vst [vmem:[#allocation2] sm:$0xff] %v155
  %160 = vst [vmem:[#allocation2 + $0x8] sm:$0xff] %v156
  %161 = vst [vmem:[#allocation2 + $0x10] sm:$0xff] %v157
  %162 = vst [vmem:[#allocation2 + $0x18] sm:$0xff] %v158
  // Predicated region
  $region14: #{_lambda_.23} parent=0 // pred_check
    %p163 = pneg %p14
  $region15: #{_lambda_.23} parent=0 // pred_check_branch
    %165 = sbr.rel (%p163) target = $region17
  $region16: #{_lambda_.23} parent=0 // pred_region
    %v166 = vld [vmem:[#allocation2] sm:$0xff]
    %v167 = vld [vmem:[#allocation2 + $0x8] sm:$0xff]
    %v168 = vld [vmem:[#allocation2 + $0x10] sm:$0xff]
    %v169 = vld [vmem:[#allocation2 + $0x18] sm:$0xff]
    %v170 = vpack.c.bf16 %v167, %v166
    %v171 = vpack.c.bf16 %v169, %v168
    %v174 = vunpack.c.l.b16 %v170
    %v175 = vunpack.c.h.b16 %v170
    %v176 = vunpack.c.l.b16 %v171
    %v177 = vunpack.c.h.b16 %v171
    %v178 = vpack.c.b16 %v174, %v174
    %v179 = vpack.c.b16 %v175, %v175
    %v180 = vpack.c.b16 %v176, %v176
    %v181 = vpack.c.b16 %v177, %v177
    %186 = vst [vmem:[%s2] sm:$0xf] %v178
    %187 = vst [vmem:[%s2 + $0x4] sm:$0xf] %v179
    %188 = vst [vmem:[%s2 + $0x8] sm:$0xf] %v180
    %189 = vst [vmem:[%s2 + $0xc] sm:$0xf] %v181
    %v190 = vadd.f32 %v166, %v167
    %v191 = vadd.f32 %v190, %v168
    %v192 = vadd.f32 %v191, %v169
    %v193 = vrot.slane %v192, 4
    %v194 = vadd.f32 %v192, %v193
    %v195 = vrot.slane %v194, 2
    %v196 = vadd.f32 %v194, %v195
    %v197 = vrot.slane %v196, 1
    %v198 = vadd.f32 %v196, %v197
    %v199 = vmul.f32 %v166, %v166
    %v200 = vmul.f32 %v167, %v167
    %v201 = vmul.f32 %v168, %v168
    %v202 = vmul.f32 %v169, %v169
    %v203 = vadd.f32 %v199, %v200
    %v204 = vadd.f32 %v203, %v201
    %v205 = vadd.f32 %v204, %v202
    %v206 = vrot.slane %v205, 4
    %v207 = vadd.f32 %v205, %v206
    %v208 = vrot.slane %v207, 2
    %v209 = vadd.f32 %v207, %v208
    %v210 = vrot.slane %v209, 1
    %v211 = vadd.f32 %v209, %v210
    %vm212 = vcmask 1040384
    %v213 = vsel %vm212, %v198, %v211
    %vm214 = vcmask 1041408
    %v215 = vsel %vm214, %v213, 0.0
    %216 = vst [vmem:[%s3] sm:$0xff] %v215
  $region17: #{_lambda_.23} parent=0 // pred_fallthru
    _
  // Predicated region
  $region18: #{_lambda_.23} parent=0 // pred_check
    _
  $region19: #{_lambda_.23} parent=0 // pred_check_branch
    %218 = sbr.rel (0) target = $region21
  $region20: #{_lambda_.23} parent=0 // pred_region
    _
  $region21: #{_lambda_.23} parent=0 // pred_fallthru
    _
  // Predicated region
  $region22: #{_lambda_.23} parent=0 // pred_check
    _
  $region23: #{_lambda_.23} parent=0 // pred_check_branch
    %220 = sbr.rel (0) target = $region25
  $region24: #{_lambda_.23} parent=0 // pred_region
    _
  $region25: #{_lambda_.23} parent=0 // pred_fallthru
    _
  // Predicated region
  $region26: #{_lambda_.23} parent=0 // pred_check
    _
  $region27: #{_lambda_.23} parent=0 // pred_check_branch
    %222 = sbr.rel (0) target = $region29
  $region28: #{_lambda_.23} parent=0 // pred_region
    _
  $region29: #{_lambda_.23} parent=0 // pred_fallthru
    _
  // Predicated region
  $region30: #{_lambda_.23} parent=0 // pred_check
    _
  $region31: #{_lambda_.23} parent=0 // pred_check_branch
    %224 = sbr.rel (0) target = $region33
  $region32: #{_lambda_.23} parent=0 // pred_region
    _
  $region33: #{_lambda_.23} parent=0 // pred_fallthru
    _

// kernel: _lambda_.26
$region0: #{_lambda_.26}
  #allocation0 [shape = 'u32[]', space=smem, size = 0x4, offset = 0x4, fixed_abs, tag = 'smem constant byte address 0x4 - core index']
  #allocation1 [shape = 'u32[144,128]{1,0:T(1,128)}', space=vmem, size = 0x12000, scoped, tag = 'internal scratch']
  %s0 = inlined_call_operand.vmem [shape: bf16[128,128], index: 0, kind: input, shape index: {}]
  %s1 = inlined_call_operand.vmem [shape: f32[1,128], index: 1, kind: input, shape index: {}]
  %s2 = inlined_call_operand.vmem [shape: f32[1,128], index: 2, kind: input, shape index: {}]
  %s3 = inlined_call_operand.vmem [shape: bf16[128,128], index: 3, kind: output, shape index: {}]
  %s4 = sld [smem:[#allocation0]]
  $region22: #{_lambda_.26} parent=0
    _
  %s6 = ssub.s32 1, %s4
  %s7 = scalar_select 0, %s6, %s4
  // Predicated region
  $region2: #{_lambda_.26} parent=0 // pred_check
    _
  $region3: #{_lambda_.26} parent=0 // pred_check_branch
    %9 = sbr.rel (0) target = $region5
  $region4: #{_lambda_.26} parent=0 // pred_region
    _
  $region5: #{_lambda_.26} parent=0 // pred_fallthru
    _
  // Predicated region
  $region6: #{_lambda_.26} parent=0 // pred_check
    _
  $region7: #{_lambda_.26} parent=0 // pred_check_branch
    %11 = sbr.rel (0) target = $region9
  $region8: #{_lambda_.26} parent=0 // pred_region
    _
  $region9: #{_lambda_.26} parent=0 // pred_fallthru
    _
  // Predicated region
  $region10: #{_lambda_.26} parent=0 // pred_check
    _
  $region11: #{_lambda_.26} parent=0 // pred_check_branch
    %13 = sbr.rel (0) target = $region13
  $region12: #{_lambda_.26} parent=0 // pred_region
    _
  $region13: #{_lambda_.26} parent=0 // pred_fallthru
    _
  %v14 = vld [vmem:[%s0] sm:$0xf]
  %v15 = vld [vmem:[%s0 + $0x4] sm:$0xf]
  %v16 = vld [vmem:[%s0 + $0x8] sm:$0xf]
  %v17 = vld [vmem:[%s0 + $0xc] sm:$0xf]
  %v18 = vld [vmem:[%s0 + $0x10] sm:$0xf]
  %v19 = vld [vmem:[%s0 + $0x14] sm:$0xf]
  %v20 = vld [vmem:[%s0 + $0x18] sm:$0xf]
  %v21 = vld [vmem:[%s0 + $0x1c] sm:$0xf]
  %v22 = vld [vmem:[%s0 + $0x20] sm:$0xf]
  %v23 = vld [vmem:[%s0 + $0x24] sm:$0xf]
  %v24 = vld [vmem:[%s0 + $0x28] sm:$0xf]
  %v25 = vld [vmem:[%s0 + $0x2c] sm:$0xf]
  %v26 = vld [vmem:[%s0 + $0x30] sm:$0xf]
  %v27 = vld [vmem:[%s0 + $0x34] sm:$0xf]
  %v28 = vld [vmem:[%s0 + $0x38] sm:$0xf]
  %v29 = vld [vmem:[%s0 + $0x3c] sm:$0xf]
  %v30 = vunpack.c.l.bf16 %v14
  %v31 = vunpack.c.l.bf16 %v15
  %v32 = vunpack.c.l.bf16 %v16
  %v33 = vunpack.c.l.bf16 %v17
  %v34 = vunpack.c.l.bf16 %v18
  %v35 = vunpack.c.l.bf16 %v19
  %v36 = vunpack.c.l.bf16 %v20
  %v37 = vunpack.c.l.bf16 %v21
  %v38 = vunpack.c.l.bf16 %v22
  %v39 = vunpack.c.l.bf16 %v23
  %v40 = vunpack.c.l.bf16 %v24
  %v41 = vunpack.c.l.bf16 %v25
  %v42 = vunpack.c.l.bf16 %v26
  %v43 = vunpack.c.l.bf16 %v27
  %v44 = vunpack.c.l.bf16 %v28
  %v45 = vunpack.c.l.bf16 %v29
  %v46 = vld [vmem:[%s1] sm:$0x1]
  %v48 = vlaneseq
  %v49 = vshrl.u32 %v48, 7
  %v50 = vsub.s32 0, %v49
  %v51 = vrot.slane %v46, %v50
  %v53 = vmul.f32 %v30, %v51
  %v54 = vmul.f32 %v31, %v51
  %v55 = vmul.f32 %v32, %v51
  %v56 = vmul.f32 %v33, %v51
  %v57 = vmul.f32 %v34, %v51
  %v58 = vmul.f32 %v35, %v51
  %v59 = vmul.f32 %v36, %v51
  %v60 = vmul.f32 %v37, %v51
  %v61 = vmul.f32 %v38, %v51
  %v62 = vmul.f32 %v39, %v51
  %v63 = vmul.f32 %v40, %v51
  %v64 = vmul.f32 %v41, %v51
  %v65 = vmul.f32 %v42, %v51
  %v66 = vmul.f32 %v43, %v51
  %v67 = vmul.f32 %v44, %v51
  %v68 = vmul.f32 %v45, %v51
  %v69 = vld [vmem:[%s2] sm:$0x1]
  %v71 = vlaneseq
  %v72 = vshrl.u32 %v71, 7
  %v73 = vsub.s32 0, %v72
  %v74 = vrot.slane %v69, %v73
  %v76 = vadd.f32 %v53, %v74
  %v77 = vadd.f32 %v54, %v74
  %v78 = vadd.f32 %v55, %v74
  %v79 = vadd.f32 %v56, %v74
  %v80 = vadd.f32 %v57, %v74
  %v81 = vadd.f32 %v58, %v74
  %v82 = vadd.f32 %v59, %v74
  %v83 = vadd.f32 %v60, %v74
  %v84 = vadd.f32 %v61, %v74
  %v85 = vadd.f32 %v62, %v74
  %v86 = vadd.f32 %v63, %v74
  %v87 = vadd.f32 %v64, %v74
  %v88 = vadd.f32 %v65, %v74
  %v89 = vadd.f32 %v66, %v74
  %v90 = vadd.f32 %v67, %v74
  %v91 = vadd.f32 %v68, %v74
  %v92 = vmax.f32 %v76, 0.0
  %v93 = vmax.f32 %v77, 0.0
  %v94 = vmax.f32 %v78, 0.0
  %v95 = vmax.f32 %v79, 0.0
  %v96 = vmax.f32 %v80, 0.0
  %v97 = vmax.f32 %v81, 0.0
  %v98 = vmax.f32 %v82, 0.0
  %v99 = vmax.f32 %v83, 0.0
  %v100 = vmax.f32 %v84, 0.0
  %v101 = vmax.f32 %v85, 0.0
  %v102 = vmax.f32 %v86, 0.0
  %v103 = vmax.f32 %v87, 0.0
  %v104 = vmax.f32 %v88, 0.0
  %v105 = vmax.f32 %v89, 0.0
  %v106 = vmax.f32 %v90, 0.0
  %v107 = vmax.f32 %v91, 0.0
  %v108 = vpack.c.bf16 %v93, %v92
  %v109 = vpack.c.bf16 %v95, %v94
  %v110 = vpack.c.bf16 %v97, %v96
  %v111 = vpack.c.bf16 %v99, %v98
  %v112 = vpack.c.bf16 %v101, %v100
  %v113 = vpack.c.bf16 %v103, %v102
  %v114 = vpack.c.bf16 %v105, %v104
  %v115 = vpack.c.bf16 %v107, %v106
  %v124 = vunpack.c.l.b16 %v108
  %v125 = vunpack.c.h.b16 %v108
  %v126 = vunpack.c.l.b16 %v109
  %v127 = vunpack.c.h.b16 %v109
  %v128 = vunpack.c.l.b16 %v110
  %v129 = vunpack.c.h.b16 %v110
  %v130 = vunpack.c.l.b16 %v111
  %v131 = vunpack.c.h.b16 %v111
  %v132 = vunpack.c.l.b16 %v112
  %v133 = vunpack.c.h.b16 %v112
  %v134 = vunpack.c.l.b16 %v113
  %v135 = vunpack.c.h.b16 %v113
  %v136 = vunpack.c.l.b16 %v114
  %v137 = vunpack.c.h.b16 %v114
  %v138 = vunpack.c.l.b16 %v115
  %v139 = vunpack.c.h.b16 %v115
  %v140 = vpack.c.b16 %v124, %v124
  %v141 = vpack.c.b16 %v125, %v125
  %v142 = vpack.c.b16 %v126, %v126
  %v143 = vpack.c.b16 %v127, %v127
  %v144 = vpack.c.b16 %v128, %v128
  %v145 = vpack.c.b16 %v129, %v129
  %v146 = vpack.c.b16 %v130, %v130
  %v147 = vpack.c.b16 %v131, %v131
  %v148 = vpack.c.b16 %v132, %v132
  %v149 = vpack.c.b16 %v133, %v133
  %v150 = vpack.c.b16 %v134, %v134
  %v151 = vpack.c.b16 %v135, %v135
  %v152 = vpack.c.b16 %v136, %v136
  %v153 = vpack.c.b16 %v137, %v137
  %v154 = vpack.c.b16 %v138, %v138
  %v155 = vpack.c.b16 %v139, %v139
  %172 = vst [vmem:[%s3] sm:$0xf] %v140
  %173 = vst [vmem:[%s3 + $0x4] sm:$0xf] %v141
  %174 = vst [vmem:[%s3 + $0x8] sm:$0xf] %v142
  %175 = vst [vmem:[%s3 + $0xc] sm:$0xf] %v143
  %176 = vst [vmem:[%s3 + $0x10] sm:$0xf] %v144
  %177 = vst [vmem:[%s3 + $0x14] sm:$0xf] %v145
  %178 = vst [vmem:[%s3 + $0x18] sm:$0xf] %v146
  %179 = vst [vmem:[%s3 + $0x1c] sm:$0xf] %v147
  %180 = vst [vmem:[%s3 + $0x20] sm:$0xf] %v148
  %181 = vst [vmem:[%s3 + $0x24] sm:$0xf] %v149
  %182 = vst [vmem:[%s3 + $0x28] sm:$0xf] %v150
  %183 = vst [vmem:[%s3 + $0x2c] sm:$0xf] %v151
  %184 = vst [vmem:[%s3 + $0x30] sm:$0xf] %v152
  %185 = vst [vmem:[%s3 + $0x34] sm:$0xf] %v153
  %186 = vst [vmem:[%s3 + $0x38] sm:$0xf] %v154
  %187 = vst [vmem:[%s3 + $0x3c] sm:$0xf] %v155
  // Predicated region
  $region14: #{_lambda_.26} parent=0 // pred_check
    _
  $region15: #{_lambda_.26} parent=0 // pred_check_branch
    %189 = sbr.rel (0) target = $region17
  $region16: #{_lambda_.26} parent=0 // pred_region
    _
  $region17: #{_lambda_.26} parent=0 // pred_fallthru
    _
  // Predicated region
  $region18: #{_lambda_.26} parent=0 // pred_check
    _
  $region19: #{_lambda_.26} parent=0 // pred_check_branch
    %191 = sbr.rel (0) target = $region21
  $region20: #{_lambda_.26} parent=0 // pred_region
    _
  $region21: #{_lambda_.26} parent=0 // pred_fallthru
    _

// kernel: _lambda_.25
$region0: #{_lambda_.25}
  #allocation0 [shape = 'u32[]', space=smem, size = 0x4, offset = 0x4, fixed_abs, tag = 'smem constant byte address 0x4 - core index']
  #allocation1 [shape = 'u32[144,128]{1,0:T(1,128)}', space=vmem, size = 0x12000, scoped, tag = 'internal scratch']
  #allocation2 [shape = 'f32[128,128]{1,0:T(8,128)}', space=vmem, size = 0x10000, scoped, tag = 'scratch operand']
  %s0 = inlined_call_operand.vmem [shape: bf16[128,256], index: 0, kind: input, shape index: {}]
  %s1 = inlined_call_operand.vmem [shape: bf16[256,128], index: 1, kind: input, shape index: {}]
  %s2 = inlined_call_operand.vmem [shape: bf16[128,128], index: 2, kind: output, shape index: {0}]
  %s3 = inlined_call_operand.vmem [shape: f32[8,128], index: 3, kind: output, shape index: {1}]
  %4 = xla_tuple %s2, %s3
  %s5 = sld [smem:[#allocation0]]
  $region34: #{_lambda_.25} parent=0
    _
  %s7 = ssub.s32 1, %s5
  %s8 = scalar_select 0, %s7, %s5
  // Predicated region
  $region2: #{_lambda_.25} parent=0 // pred_check
    _
  $region3: #{_lambda_.25} parent=0 // pred_check_branch
    %10 = sbr.rel (0) target = $region5
  $region4: #{_lambda_.25} parent=0 // pred_region
    _
  $region5: #{_lambda_.25} parent=0 // pred_fallthru
    _
  // Predicated region
  $region6: #{_lambda_.25} parent=0 // pred_check
    _
  $region7: #{_lambda_.25} parent=0 // pred_check_branch
    %12 = sbr.rel (0) target = $region9
  $region8: #{_lambda_.25} parent=0 // pred_region
    _
  $region9: #{_lambda_.25} parent=0 // pred_fallthru
    _
  %p14 = scmp.eq.s32.totalorder 0, 0
  // Predicated region
  $region10: #{_lambda_.25} parent=0 // pred_check
    %p15 = pneg %p14
  $region11: #{_lambda_.25} parent=0 // pred_check_branch
    %17 = sbr.rel (%p15) target = $region13
  $region12: #{_lambda_.25} parent=0 // pred_region
    %18 = vst [vmem:[#allocation2] sm:$0xff] 0.0
    %19 = vst [vmem:[#allocation2 + $0x8] sm:$0xff] 0.0
    %20 = vst [vmem:[#allocation2 + $0x10] sm:$0xff] 0.0
    %21 = vst [vmem:[#allocation2 + $0x18] sm:$0xff] 0.0
    %22 = vst [vmem:[#allocation2 + $0x20] sm:$0xff] 0.0
    %23 = vst [vmem:[#allocation2 + $0x28] sm:$0xff] 0.0
    %24 = vst [vmem:[#allocation2 + $0x30] sm:$0xff] 0.0
    %25 = vst [vmem:[#allocation2 + $0x38] sm:$0xff] 0.0
    %26 = vst [vmem:[#allocation2 + $0x40] sm:$0xff] 0.0
    %27 = vst [vmem:[#allocation2 + $0x48] sm:$0xff] 0.0
    %28 = vst [vmem:[#allocation2 + $0x50] sm:$0xff] 0.0
    %29 = vst [vmem:[#allocation2 + $0x58] sm:$0xff] 0.0
    %30 = vst [vmem:[#allocation2 + $0x60] sm:$0xff] 0.0
    %31 = vst [vmem:[#allocation2 + $0x68] sm:$0xff] 0.0
    %32 = vst [vmem:[#allocation2 + $0x70] sm:$0xff] 0.0
    %33 = vst [vmem:[#allocation2 + $0x78] sm:$0xff] 0.0
  $region13: #{_lambda_.25} parent=0 // pred_fallthru
    _
  %v34 = vld [vmem:[#allocation2] sm:$0xff]
  %v35 = vld [vmem:[#allocation2 + $0x8] sm:$0xff]
  %v36 = vld [vmem:[#allocation2 + $0x10] sm:$0xff]
  %v37 = vld [vmem:[#allocation2 + $0x18] sm:$0xff]
  %v38 = vld [vmem:[#allocation2 + $0x20] sm:$0xff]
  %v39 = vld [vmem:[#allocation2 + $0x28] sm:$0xff]
  %v40 = vld [vmem:[#allocation2 + $0x30] sm:$0xff]
  %v41 = vld [vmem:[#allocation2 + $0x38] sm:$0xff]
  %v42 = vld [vmem:[#allocation2 + $0x40] sm:$0xff]
  %v43 = vld [vmem:[#allocation2 + $0x48] sm:$0xff]
  %v44 = vld [vmem:[#allocation2 + $0x50] sm:$0xff]
  %v45 = vld [vmem:[#allocation2 + $0x58] sm:$0xff]
  %v46 = vld [vmem:[#allocation2 + $0x60] sm:$0xff]
  %v47 = vld [vmem:[#allocation2 + $0x68] sm:$0xff]
  %v48 = vld [vmem:[#allocation2 + $0x70] sm:$0xff]
  %v49 = vld [vmem:[#allocation2 + $0x78] sm:$0xff]
  %v50 = vld [vmem:[%s0] sm:$0xff]
  %v51 = vld [vmem:[%s0 + $0x8] sm:$0xff]
  %v52 = vld [vmem:[%s0 + $0x10] sm:$0xff]
  %v53 = vld [vmem:[%s0 + $0x18] sm:$0xff]
  %v54 = vld [vmem:[%s0 + $0x20] sm:$0xff]
  %v55 = vld [vmem:[%s0 + $0x28] sm:$0xff]
  %v56 = vld [vmem:[%s0 + $0x30] sm:$0xff]
  %v57 = vld [vmem:[%s0 + $0x38] sm:$0xff]
  %v58 = vld [vmem:[%s0 + $0x40] sm:$0xff]
  %v59 = vld [vmem:[%s0 + $0x48] sm:$0xff]
  %v60 = vld [vmem:[%s0 + $0x50] sm:$0xff]
  %v61 = vld [vmem:[%s0 + $0x58] sm:$0xff]
  %v62 = vld [vmem:[%s0 + $0x60] sm:$0xff]
  %v63 = vld [vmem:[%s0 + $0x68] sm:$0xff]
  %v64 = vld [vmem:[%s0 + $0x70] sm:$0xff]
  %v65 = vld [vmem:[%s0 + $0x78] sm:$0xff]
  %v66 = vld [vmem:[%s1] sm:$0xf]
  %v67 = vld [vmem:[%s1 + $0x4] sm:$0xf]
  %v68 = vld [vmem:[%s1 + $0x8] sm:$0xf]
  %v69 = vld [vmem:[%s1 + $0xc] sm:$0xf]
  %v70 = vld [vmem:[%s1 + $0x10] sm:$0xf]
  %v71 = vld [vmem:[%s1 + $0x14] sm:$0xf]
  %v72 = vld [vmem:[%s1 + $0x18] sm:$0xf]
  %v73 = vld [vmem:[%s1 + $0x1c] sm:$0xf]
  %v74 = vld [vmem:[%s1 + $0x20] sm:$0xf]
  %v75 = vld [vmem:[%s1 + $0x24] sm:$0xf]
  %v76 = vld [vmem:[%s1 + $0x28] sm:$0xf]
  %v77 = vld [vmem:[%s1 + $0x2c] sm:$0xf]
  %v78 = vld [vmem:[%s1 + $0x30] sm:$0xf]
  %v79 = vld [vmem:[%s1 + $0x34] sm:$0xf]
  %v80 = vld [vmem:[%s1 + $0x38] sm:$0xf]
  %v81 = vld [vmem:[%s1 + $0x3c] sm:$0xf]
  %v82 = vld [vmem:[%s1 + $0x40] sm:$0xf]
  %v83 = vld [vmem:[%s1 + $0x44] sm:$0xf]
  %v84 = vld [vmem:[%s1 + $0x48] sm:$0xf]
  %v85 = vld [vmem:[%s1 + $0x4c] sm:$0xf]
  %v86 = vld [vmem:[%s1 + $0x50] sm:$0xf]
  %v87 = vld [vmem:[%s1 + $0x54] sm:$0xf]
  %v88 = vld [vmem:[%s1 + $0x58] sm:$0xf]
  %v89 = vld [vmem:[%s1 + $0x5c] sm:$0xf]
  %v90 = vld [vmem:[%s1 + $0x60] sm:$0xf]
  %v91 = vld [vmem:[%s1 + $0x64] sm:$0xf]
  %v92 = vld [vmem:[%s1 + $0x68] sm:$0xf]
  %v93 = vld [vmem:[%s1 + $0x6c] sm:$0xf]
  %v94 = vld [vmem:[%s1 + $0x70] sm:$0xf]
  %v95 = vld [vmem:[%s1 + $0x74] sm:$0xf]
  %v96 = vld [vmem:[%s1 + $0x78] sm:$0xf]
  %v97 = vld [vmem:[%s1 + $0x7c] sm:$0xf]
  %v114 = vunpack.c.l.b16 %v50
  %v115 = vunpack.c.h.b16 %v50
  %v116 = vunpack.c.l.b16 %v51
  %v117 = vunpack.c.h.b16 %v51
  %v118 = vunpack.c.l.b16 %v52
  %v119 = vunpack.c.h.b16 %v52
  %v120 = vunpack.c.l.b16 %v53
  %v121 = vunpack.c.h.b16 %v53
  %v122 = vunpack.c.l.b16 %v54
  %v123 = vunpack.c.h.b16 %v54
  %v124 = vunpack.c.l.b16 %v55
  %v125 = vunpack.c.h.b16 %v55
  %v126 = vunpack.c.l.b16 %v56
  %v127 = vunpack.c.h.b16 %v56
  %v128 = vunpack.c.l.b16 %v57
  %v129 = vunpack.c.h.b16 %v57
  %v130 = vunpack.c.l.b16 %v58
  %v131 = vunpack.c.h.b16 %v58
  %v132 = vunpack.c.l.b16 %v59
  %v133 = vunpack.c.h.b16 %v59
  %v134 = vunpack.c.l.b16 %v60
  %v135 = vunpack.c.h.b16 %v60
  %v136 = vunpack.c.l.b16 %v61
  %v137 = vunpack.c.h.b16 %v61
  %v138 = vunpack.c.l.b16 %v62
  %v139 = vunpack.c.h.b16 %v62
  %v140 = vunpack.c.l.b16 %v63
  %v141 = vunpack.c.h.b16 %v63
  %v142 = vunpack.c.l.b16 %v64
  %v143 = vunpack.c.h.b16 %v64
  %v144 = vunpack.c.l.b16 %v65
  %v145 = vunpack.c.h.b16 %v65
  %v146 = vpack.c.b16 %v116, %v114
  %v147 = vpack.c.b16 %v117, %v115
  %v148 = vpack.c.b16 %v120, %v118
  %v149 = vpack.c.b16 %v121, %v119
  %v150 = vpack.c.b16 %v124, %v122
  %v151 = vpack.c.b16 %v125, %v123
  %v152 = vpack.c.b16 %v128, %v126
  %v153 = vpack.c.b16 %v129, %v127
  %v154 = vpack.c.b16 %v132, %v130
  %v155 = vpack.c.b16 %v133, %v131
  %v156 = vpack.c.b16 %v136, %v134
  %v157 = vpack.c.b16 %v137, %v135
  %v158 = vpack.c.b16 %v140, %v138
  %v159 = vpack.c.b16 %v141, %v139
  %v160 = vpack.c.b16 %v144, %v142
  %v161 = vpack.c.b16 %v145, %v143
  %v210 = vunpack.c.l.b16 %v66
  %v211 = vunpack.c.l.b16 %v67
  %v212 = vunpack.c.l.b16 %v68
  %v213 = vunpack.c.l.b16 %v69
  %v214 = vunpack.c.l.b16 %v70
  %v215 = vunpack.c.l.b16 %v71
  %v216 = vunpack.c.l.b16 %v72
  %v217 = vunpack.c.l.b16 %v73
  %v218 = vunpack.c.l.b16 %v74
  %v219 = vunpack.c.l.b16 %v75
  %v220 = vunpack.c.l.b16 %v76
  %v221 = vunpack.c.l.b16 %v77
  %v222 = vunpack.c.l.b16 %v78
  %v223 = vunpack.c.l.b16 %v79
  %v224 = vunpack.c.l.b16 %v80
  %v225 = vunpack.c.l.b16 %v81
  %v226 = vunpack.c.l.b16 %v82
  %v227 = vunpack.c.l.b16 %v83
  %v228 = vunpack.c.l.b16 %v84
  %v229 = vunpack.c.l.b16 %v85
  %v230 = vunpack.c.l.b16 %v86
  %v231 = vunpack.c.l.b16 %v87
  %v232 = vunpack.c.l.b16 %v88
  %v233 = vunpack.c.l.b16 %v89
  %v234 = vunpack.c.l.b16 %v90
  %v235 = vunpack.c.l.b16 %v91
  %v236 = vunpack.c.l.b16 %v92
  %v237 = vunpack.c.l.b16 %v93
  %v238 = vunpack.c.l.b16 %v94
  %v239 = vunpack.c.l.b16 %v95
  %v240 = vunpack.c.l.b16 %v96
  %v241 = vunpack.c.l.b16 %v97
  %v242 = vpack.c.b16 %v211, %v210
  %v243 = vpack.c.b16 %v213, %v212
  %v244 = vpack.c.b16 %v215, %v214
  %v245 = vpack.c.b16 %v217, %v216
  %v246 = vpack.c.b16 %v219, %v218
  %v247 = vpack.c.b16 %v221, %v220
  %v248 = vpack.c.b16 %v223, %v222
  %v249 = vpack.c.b16 %v225, %v224
  %v250 = vpack.c.b16 %v227, %v226
  %v251 = vpack.c.b16 %v229, %v228
  %v252 = vpack.c.b16 %v231, %v230
  %v253 = vpack.c.b16 %v233, %v232
  %v254 = vpack.c.b16 %v235, %v234
  %v255 = vpack.c.b16 %v237, %v236
  %v256 = vpack.c.b16 %v239, %v238
  %v257 = vpack.c.b16 %v241, %v240
  %274 = vmatprep.subr.bf16.mxu0 0
  %275 = vmatpush1.bf16.msra.mxu0 %v242
  %276 = vmatprep.subr.bf16.mxu0 0
  %277 = vmatpush1.bf16.msra.mxu0 %v243
  %278 = vmatprep.subr.bf16.mxu0 0
  %279 = vmatpush1.bf16.msra.mxu0 %v244
  %280 = vmatprep.subr.bf16.mxu0 0
  %281 = vmatpush1.bf16.msra.mxu0 %v245
  %282 = vmatprep.subr.bf16.mxu0 0
  %283 = vmatpush1.bf16.msra.mxu0 %v246
  %284 = vmatprep.subr.bf16.mxu0 0
  %285 = vmatpush1.bf16.msra.mxu0 %v247
  %286 = vmatprep.subr.bf16.mxu0 0
  %287 = vmatpush1.bf16.msra.mxu0 %v248
  %288 = vmatprep.subr.bf16.mxu0 0
  %289 = vmatpush1.bf16.msra.mxu0 %v249
  %290 = vmatprep.subr.bf16.mxu0 0
  %291 = vmatpush1.bf16.msra.mxu0 %v250
  %292 = vmatprep.subr.bf16.mxu0 0
  %293 = vmatpush1.bf16.msra.mxu0 %v251
  %294 = vmatprep.subr.bf16.mxu0 0
  %295 = vmatpush1.bf16.msra.mxu0 %v252
  %296 = vmatprep.subr.bf16.mxu0 0
  %297 = vmatpush1.bf16.msra.mxu0 %v253
  %298 = vmatprep.subr.bf16.mxu0 0
  %299 = vmatpush1.bf16.msra.mxu0 %v254
  %300 = vmatprep.subr.bf16.mxu0 0
  %301 = vmatpush1.bf16.msra.mxu0 %v255
  %302 = vmatprep.subr.bf16.mxu0 0
  %303 = vmatpush1.bf16.msra.mxu0 %v256
  %304 = vmatprep.subr.bf16.mxu0 0
  %305 = vmatpush1.bf16.msra.mxu0 %v257
  %306 = vmatprep.mubr.bf16.mxu0 %v147
  %307 = vmatmul.mubr.bf16.gmra.mrb[0].mxu0 %v146
  %v308 = vpop.f32.mrb[0].mxu0
  %v309 = vadd.f32 0.0, %v308
  %v310 = vpop.f32.mrb[0].mxu0
  %v311 = vpop.f32.mrb[0].mxu0
  %v312 = vadd.f32 0.0, %v311
  %v313 = vpop.f32.mrb[0].mxu0
  %314 = vmatprep.mubr.bf16.mxu0 %v149
  %315 = vmatmul.mubr.bf16.gmra.mrb[0].mxu0 %v148
  %v316 = vpop.f32.mrb[0].mxu0
  %v317 = vadd.f32 0.0, %v316
  %v318 = vpop.f32.mrb[0].mxu0
  %v319 = vpop.f32.mrb[0].mxu0
  %v320 = vadd.f32 0.0, %v319
  %v321 = vpop.f32.mrb[0].mxu0
  %322 = vmatprep.mubr.bf16.mxu0 %v151
  %323 = vmatmul.mubr.bf16.gmra.mrb[0].mxu0 %v150
  %v324 = vpop.f32.mrb[0].mxu0
  %v325 = vadd.f32 0.0, %v324
  %v326 = vpop.f32.mrb[0].mxu0
  %v327 = vpop.f32.mrb[0].mxu0
  %v328 = vadd.f32 0.0, %v327
  %v329 = vpop.f32.mrb[0].mxu0
  %330 = vmatprep.mubr.bf16.mxu0 %v153
  %331 = vmatmul.mubr.bf16.gmra.mrb[0].mxu0 %v152
  %v332 = vpop.f32.mrb[0].mxu0
  %v333 = vadd.f32 0.0, %v332
  %v334 = vpop.f32.mrb[0].mxu0
  %v335 = vpop.f32.mrb[0].mxu0
  %v336 = vadd.f32 0.0, %v335
  %v337 = vpop.f32.mrb[0].mxu0
  %338 = vmatprep.mubr.bf16.mxu0 %v155
  %339 = vmatmul.mubr.bf16.gmra.mrb[0].mxu0 %v154
  %v340 = vpop.f32.mrb[0].mxu0
  %v341 = vadd.f32 0.0, %v340
  %v342 = vpop.f32.mrb[0].mxu0
  %v343 = vpop.f32.mrb[0].mxu0
  %v344 = vadd.f32 0.0, %v343
  %v345 = vpop.f32.mrb[0].mxu0
  %346 = vmatprep.mubr.bf16.mxu0 %v157
  %347 = vmatmul.mubr.bf16.gmra.mrb[0].mxu0 %v156
  %v348 = vpop.f32.mrb[0].mxu0
  %v349 = vadd.f32 0.0, %v348
  %v350 = vpop.f32.mrb[0].mxu0
  %v351 = vpop.f32.mrb[0].mxu0
  %v352 = vadd.f32 0.0, %v351
  %v353 = vpop.f32.mrb[0].mxu0
  %354 = vmatprep.mubr.bf16.mxu0 %v159
  %355 = vmatmul.mubr.bf16.gmra.mrb[0].mxu0 %v158
  %v356 = vpop.f32.mrb[0].mxu0
  %v357 = vadd.f32 0.0, %v356
  %v358 = vpop.f32.mrb[0].mxu0
  %v359 = vpop.f32.mrb[0].mxu0
  %v360 = vadd.f32 0.0, %v359
  %v361 = vpop.f32.mrb[0].mxu0
  %362 = vmatprep.mubr.bf16.mxu0 %v161
  %363 = vmatmul.mubr.bf16.gmra.mrb[0].mxu0 %v160
  %v364 = vpop.f32.mrb[0].mxu0
  %v365 = vadd.f32 0.0, %v364
  %v366 = vpop.f32.mrb[0].mxu0
  %v367 = vpop.f32.mrb[0].mxu0
  %v368 = vadd.f32 0.0, %v367
  %v369 = vpop.f32.mrb[0].mxu0
  %370 = vdwg.mxu0
  %v371 = vadd.f32 %v34, %v309
  %v372 = vadd.f32 %v35, %v312
  %v373 = vadd.f32 %v36, %v317
  %v374 = vadd.f32 %v37, %v320
  %v375 = vadd.f32 %v38, %v325
  %v376 = vadd.f32 %v39, %v328
  %v377 = vadd.f32 %v40, %v333
  %v378 = vadd.f32 %v41, %v336
  %v379 = vadd.f32 %v42, %v341
  %v380 = vadd.f32 %v43, %v344
  %v381 = vadd.f32 %v44, %v349
  %v382 = vadd.f32 %v45, %v352
  %v383 = vadd.f32 %v46, %v357
  %v384 = vadd.f32 %v47, %v360
  %v385 = vadd.f32 %v48, %v365
  %v386 = vadd.f32 %v49, %v368
  %387 = vst [vmem:[#allocation2] sm:$0xff] %v371
  %388 = vst [vmem:[#allocation2 + $0x8] sm:$0xff] %v372
  %389 = vst [vmem:[#allocation2 + $0x10] sm:$0xff] %v373
  %390 = vst [vmem:[#allocation2 + $0x18] sm:$0xff] %v374
  %391 = vst [vmem:[#allocation2 + $0x20] sm:$0xff] %v375
  %392 = vst [vmem:[#allocation2 + $0x28] sm:$0xff] %v376
  %393 = vst [vmem:[#allocation2 + $0x30] sm:$0xff] %v377
  %394 = vst [vmem:[#allocation2 + $0x38] sm:$0xff] %v378
  %395 = vst [vmem:[#allocation2 + $0x40] sm:$0xff] %v379
  %396 = vst [vmem:[#allocation2 + $0x48] sm:$0xff] %v380
  %397 = vst [vmem:[#allocation2 + $0x50] sm:$0xff] %v381
  %398 = vst [vmem:[#allocation2 + $0x58] sm:$0xff] %v382
  %399 = vst [vmem:[#allocation2 + $0x60] sm:$0xff] %v383
  %400 = vst [vmem:[#allocation2 + $0x68] sm:$0xff] %v384
  %401 = vst [vmem:[#allocation2 + $0x70] sm:$0xff] %v385
  %402 = vst [vmem:[#allocation2 + $0x78] sm:$0xff] %v386
  // Predicated region
  $region14: #{_lambda_.25} parent=0 // pred_check
    %p403 = pneg %p14
  $region15: #{_lambda_.25} parent=0 // pred_check_branch
    %405 = sbr.rel (%p403) target = $region17
  $region16: #{_lambda_.25} parent=0 // pred_region
    %v406 = vld [vmem:[#allocation2] sm:$0xff]
    %v407 = vld [vmem:[#allocation2 + $0x8] sm:$0xff]
    %v408 = vld [vmem:[#allocation2 + $0x10] sm:$0xff]
    %v409 = vld [vmem:[#allocation2 + $0x18] sm:$0xff]
    %v410 = vld [vmem:[#allocation2 + $0x20] sm:$0xff]
    %v411 = vld [vmem:[#allocation2 + $0x28] sm:$0xff]
    %v412 = vld [vmem:[#allocation2 + $0x30] sm:$0xff]
    %v413 = vld [vmem:[#allocation2 + $0x38] sm:$0xff]
    %v414 = vld [vmem:[#allocation2 + $0x40] sm:$0xff]
    %v415 = vld [vmem:[#allocation2 + $0x48] sm:$0xff]
    %v416 = vld [vmem:[#allocation2 + $0x50] sm:$0xff]
    %v417 = vld [vmem:[#allocation2 + $0x58] sm:$0xff]
    %v418 = vld [vmem:[#allocation2 + $0x60] sm:$0xff]
    %v419 = vld [vmem:[#allocation2 + $0x68] sm:$0xff]
    %v420 = vld [vmem:[#allocation2 + $0x70] sm:$0xff]
    %v421 = vld [vmem:[#allocation2 + $0x78] sm:$0xff]
    %v422 = vpack.c.bf16 %v407, %v406
    %v423 = vpack.c.bf16 %v409, %v408
    %v424 = vpack.c.bf16 %v411, %v410
    %v425 = vpack.c.bf16 %v413, %v412
    %v426 = vpack.c.bf16 %v415, %v414
    %v427 = vpack.c.bf16 %v417, %v416
    %v428 = vpack.c.bf16 %v419, %v418
    %v429 = vpack.c.bf16 %v421, %v420
    %v438 = vunpack.c.l.b16 %v422
    %v439 = vunpack.c.h.b16 %v422
    %v440 = vunpack.c.l.b16 %v423
    %v441 = vunpack.c.h.b16 %v423
    %v442 = vunpack.c.l.b16 %v424
    %v443 = vunpack.c.h.b16 %v424
    %v444 = vunpack.c.l.b16 %v425
    %v445 = vunpack.c.h.b16 %v425
    %v446 = vunpack.c.l.b16 %v426
    %v447 = vunpack.c.h.b16 %v426
    %v448 = vunpack.c.l.b16 %v427
    %v449 = vunpack.c.h.b16 %v427
    %v450 = vunpack.c.l.b16 %v428
    %v451 = vunpack.c.h.b16 %v428
    %v452 = vunpack.c.l.b16 %v429
    %v453 = vunpack.c.h.b16 %v429
    %v454 = vpack.c.b16 %v438, %v438
    %v455 = vpack.c.b16 %v439, %v439
    %v456 = vpack.c.b16 %v440, %v440
    %v457 = vpack.c.b16 %v441, %v441
    %v458 = vpack.c.b16 %v442, %v442
    %v459 = vpack.c.b16 %v443, %v443
    %v460 = vpack.c.b16 %v444, %v444
    %v461 = vpack.c.b16 %v445, %v445
    %v462 = vpack.c.b16 %v446, %v446
    %v463 = vpack.c.b16 %v447, %v447
    %v464 = vpack.c.b16 %v448, %v448
    %v465 = vpack.c.b16 %v449, %v449
    %v466 = vpack.c.b16 %v450, %v450
    %v467 = vpack.c.b16 %v451, %v451
    %v468 = vpack.c.b16 %v452, %v452
    %v469 = vpack.c.b16 %v453, %v453
    %486 = vst [vmem:[%s2] sm:$0xf] %v454
    %487 = vst [vmem:[%s2 + $0x4] sm:$0xf] %v455
    %488 = vst [vmem:[%s2 + $0x8] sm:$0xf] %v456
    %489 = vst [vmem:[%s2 + $0xc] sm:$0xf] %v457
    %490 = vst [vmem:[%s2 + $0x10] sm:$0xf] %v458
    %491 = vst [vmem:[%s2 + $0x14] sm:$0xf] %v459
    %492 = vst [vmem:[%s2 + $0x18] sm:$0xf] %v460
    %493 = vst [vmem:[%s2 + $0x1c] sm:$0xf] %v461
    %494 = vst [vmem:[%s2 + $0x20] sm:$0xf] %v462
    %495 = vst [vmem:[%s2 + $0x24] sm:$0xf] %v463
    %496 = vst [vmem:[%s2 + $0x28] sm:$0xf] %v464
    %497 = vst [vmem:[%s2 + $0x2c] sm:$0xf] %v465
    %498 = vst [vmem:[%s2 + $0x30] sm:$0xf] %v466
    %499 = vst [vmem:[%s2 + $0x34] sm:$0xf] %v467
    %500 = vst [vmem:[%s2 + $0x38] sm:$0xf] %v468
    %501 = vst [vmem:[%s2 + $0x3c] sm:$0xf] %v469
    %v502 = vadd.f32 %v406, %v407
    %v503 = vadd.f32 %v502, %v408
    %v504 = vadd.f32 %v503, %v409
    %v505 = vadd.f32 %v504, %v410
    %v506 = vadd.f32 %v505, %v411
    %v507 = vadd.f32 %v506, %v412
    %v508 = vadd.f32 %v507, %v413
    %v509 = vadd.f32 %v508, %v414
    %v510 = vadd.f32 %v509, %v415
    %v511 = vadd.f32 %v510, %v416
    %v512 = vadd.f32 %v511, %v417
    %v513 = vadd.f32 %v512, %v418
    %v514 = vadd.f32 %v513, %v419
    %v515 = vadd.f32 %v514, %v420
    %v516 = vadd.f32 %v515, %v421
    %v517 = vrot.slane %v516, 4
    %v518 = vadd.f32 %v516, %v517
    %v519 = vrot.slane %v518, 2
    %v520 = vadd.f32 %v518, %v519
    %v521 = vrot.slane %v520, 1
    %v522 = vadd.f32 %v520, %v521
    %v523 = vmul.f32 %v406, %v406
    %v524 = vmul.f32 %v407, %v407
    %v525 = vmul.f32 %v408, %v408
    %v526 = vmul.f32 %v409, %v409
    %v527 = vmul.f32 %v410, %v410
    %v528 = vmul.f32 %v411, %v411
    %v529 = vmul.f32 %v412, %v412
    %v530 = vmul.f32 %v413, %v413
    %v531 = vmul.f32 %v414, %v414
    %v532 = vmul.f32 %v415, %v415
    %v533 = vmul.f32 %v416, %v416
    %v534 = vmul.f32 %v417, %v417
    %v535 = vmul.f32 %v418, %v418
    %v536 = vmul.f32 %v419, %v419
    %v537 = vmul.f32 %v420, %v420
    %v538 = vmul.f32 %v421, %v421
    %v539 = vadd.f32 %v523, %v524
    %v540 = vadd.f32 %v539, %v525
    %v541 = vadd.f32 %v540, %v526
    %v542 = vadd.f32 %v541, %v527
    %v543 = vadd.f32 %v542, %v528
    %v544 = vadd.f32 %v543, %v529
    %v545 = vadd.f32 %v544, %v530
    %v546 = vadd.f32 %v545, %v531
    %v547 = vadd.f32 %v546, %v532
    %v548 = vadd.f32 %v547, %v533
    %v549 = vadd.f32 %v548, %v534
    %v550 = vadd.f32 %v549, %v535
    %v551 = vadd.f32 %v550, %v536
    %v552 = vadd.f32 %v551, %v537
    %v553 = vadd.f32 %v552, %v538
    %v554 = vrot.slane %v553, 4
    %v555 = vadd.f32 %v553, %v554
    %v556 = vrot.slane %v555, 2
    %v557 = vadd.f32 %v555, %v556
    %v558 = vrot.slane %v557, 1
    %v559 = vadd.f32 %v557, %v558
    %vm560 = vcmask 1040384
    %v561 = vsel %vm560, %v522, %v559
    %vm562 = vcmask 1041408
    %v563 = vsel %vm562, %v561, 0.0
    %564 = vst [vmem:[%s3] sm:$0xff] %v563
  $region17: #{_lambda_.25} parent=0 // pred_fallthru
    _
  // Predicated region
  $region18: #{_lambda_.25} parent=0 // pred_check
    _
  $region19: #{_lambda_.25} parent=0 // pred_check_branch
    %566 = sbr.rel (0) target = $region21
  $region20: #{_lambda_.25} parent=0 // pred_region
    _
  $region21: #{_lambda_.25} parent=0 // pred_fallthru
    _
  // Predicated region
  $region22: #{_lambda_.25} parent=0 // pred_check
    _
  $region23: #{_lambda_.25} parent=0 // pred_check_branch
    %568 = sbr.rel (0) target = $region25
  $region24: #{_lambda_.25} parent=0 // pred_region
    _
  $region25: #{_lambda_.25} parent=0 // pred_fallthru
    _
  // Predicated region
  $region26: #{_lambda_.25} parent=0 // pred_check
    _
  $region27: #{_lambda_.25} parent=0 // pred_check_branch
    %570 = sbr.rel (0) target = $region29
  $region28: #{_lambda_.25} parent=0 // pred_region
    _
  $region29: #{_lambda_.25} parent=0 // pred_fallthru
    _
  // Predicated region
  $region30: #{_lambda_.25} parent=0 // pred_check
    _
  $region31: #{_lambda_.25} parent=0 // pred_check_branch
    %572 = sbr.rel (0) target = $region33
  $region32: #{_lambda_.25} parent=0 // pred_region
    _
  $region33: #{_lambda_.25} parent=0 // pred_fallthru
    _

// kernel: _lambda_.22
$region0: #{_lambda_.22}
  #allocation0 [shape = 'u32[]', space=smem, size = 0x4, offset = 0x4, fixed_abs, tag = 'smem constant byte address 0x4 - core index']
  #allocation1 [shape = 'u32[144,128]{1,0:T(1,128)}', space=vmem, size = 0x12000, scoped, tag = 'internal scratch']
  #allocation2 [shape = 'f32[32,128]{1,0:T(8,128)}', space=vmem, size = 0x4000, scoped, tag = 'scratch operand']
  %s0 = inlined_call_operand.vmem [shape: bf16[32,128], index: 0, kind: input, shape index: {}]
  %s1 = inlined_call_operand.vmem [shape: bf16[128,128], index: 1, kind: input, shape index: {}]
  %s2 = inlined_call_operand.vmem [shape: f32[32,128], index: 2, kind: input, shape index: {}]
  %s3 = inlined_call_operand.vmem [shape: bf16[32,128], index: 3, kind: output, shape index: {}]
  %s4 = sld [smem:[#allocation0]]
  $region30: #{_lambda_.22} parent=0
    _
  %s6 = ssub.s32 1, %s4
  %s7 = scalar_select 0, %s6, %s4
  // Predicated region
  $region2: #{_lambda_.22} parent=0 // pred_check
    _
  $region3: #{_lambda_.22} parent=0 // pred_check_branch
    %9 = sbr.rel (0) target = $region5
  $region4: #{_lambda_.22} parent=0 // pred_region
    _
  $region5: #{_lambda_.22} parent=0 // pred_fallthru
    _
  // Predicated region
  $region6: #{_lambda_.22} parent=0 // pred_check
    _
  $region7: #{_lambda_.22} parent=0 // pred_check_branch
    %11 = sbr.rel (0) target = $region9
  $region8: #{_lambda_.22} parent=0 // pred_region
    _
  $region9: #{_lambda_.22} parent=0 // pred_fallthru
    _
  // Predicated region
  $region10: #{_lambda_.22} parent=0 // pred_check
    _
  $region11: #{_lambda_.22} parent=0 // pred_check_branch
    %13 = sbr.rel (0) target = $region13
  $region12: #{_lambda_.22} parent=0 // pred_region
    _
  $region13: #{_lambda_.22} parent=0 // pred_fallthru
    _
  %p15 = scmp.eq.s32.totalorder 0, 0
  // Predicated region
  $region14: #{_lambda_.22} parent=0 // pred_check
    %p16 = pneg %p15
  $region15: #{_lambda_.22} parent=0 // pred_check_branch
    %18 = sbr.rel (%p16) target = $region17
  $region16: #{_lambda_.22} parent=0 // pred_region
    %19 = vst [vmem:[#allocation2] sm:$0xff] 0.0
    %20 = vst [vmem:[#allocation2 + $0x8] sm:$0xff] 0.0
    %21 = vst [vmem:[#allocation2 + $0x10] sm:$0xff] 0.0
    %22 = vst [vmem:[#allocation2 + $0x18] sm:$0xff] 0.0
  $region17: #{_lambda_.22} parent=0 // pred_fallthru
    _
  %v23 = vld [vmem:[#allocation2] sm:$0xff]
  %v24 = vld [vmem:[#allocation2 + $0x8] sm:$0xff]
  %v25 = vld [vmem:[#allocation2 + $0x10] sm:$0xff]
  %v26 = vld [vmem:[#allocation2 + $0x18] sm:$0xff]
  %v27 = vld [vmem:[%s0] sm:$0xf]
  %v28 = vld [vmem:[%s0 + $0x4] sm:$0xf]
  %v29 = vld [vmem:[%s0 + $0x8] sm:$0xf]
  %v30 = vld [vmem:[%s0 + $0xc] sm:$0xf]
  %v31 = vld [vmem:[%s1] sm:$0xf]
  %v32 = vld [vmem:[%s1 + $0x4] sm:$0xf]
  %v33 = vld [vmem:[%s1 + $0x8] sm:$0xf]
  %v34 = vld [vmem:[%s1 + $0xc] sm:$0xf]
  %v35 = vld [vmem:[%s1 + $0x10] sm:$0xf]
  %v36 = vld [vmem:[%s1 + $0x14] sm:$0xf]
  %v37 = vld [vmem:[%s1 + $0x18] sm:$0xf]
  %v38 = vld [vmem:[%s1 + $0x1c] sm:$0xf]
  %v39 = vld [vmem:[%s1 + $0x20] sm:$0xf]
  %v40 = vld [vmem:[%s1 + $0x24] sm:$0xf]
  %v41 = vld [vmem:[%s1 + $0x28] sm:$0xf]
  %v42 = vld [vmem:[%s1 + $0x2c] sm:$0xf]
  %v43 = vld [vmem:[%s1 + $0x30] sm:$0xf]
  %v44 = vld [vmem:[%s1 + $0x34] sm:$0xf]
  %v45 = vld [vmem:[%s1 + $0x38] sm:$0xf]
  %v46 = vld [vmem:[%s1 + $0x3c] sm:$0xf]
  %v51 = vunpack.c.l.b16 %v27
  %v52 = vunpack.c.l.b16 %v28
  %v53 = vunpack.c.l.b16 %v29
  %v54 = vunpack.c.l.b16 %v30
  %v55 = vpack.c.b16 %v52, %v51
  %v56 = vpack.c.b16 %v54, %v53
  %v75 = vunpack.c.l.b16 %v31
  %v76 = vunpack.c.l.b16 %v32
  %v77 = vunpack.c.l.b16 %v33
  %v78 = vunpack.c.l.b16 %v34
  %v79 = vunpack.c.l.b16 %v35
  %v80 = vunpack.c.l.b16 %v36
  %v81 = vunpack.c.l.b16 %v37
  %v82 = vunpack.c.l.b16 %v38
  %v83 = vunpack.c.l.b16 %v39
  %v84 = vunpack.c.l.b16 %v40
  %v85 = vunpack.c.l.b16 %v41
  %v86 = vunpack.c.l.b16 %v42
  %v87 = vunpack.c.l.b16 %v43
  %v88 = vunpack.c.l.b16 %v44
  %v89 = vunpack.c.l.b16 %v45
  %v90 = vunpack.c.l.b16 %v46
  %v91 = vpack.c.b16 %v76, %v75
  %v92 = vpack.c.b16 %v78, %v77
  %v93 = vpack.c.b16 %v80, %v79
  %v94 = vpack.c.b16 %v82, %v81
  %v95 = vpack.c.b16 %v84, %v83
  %v96 = vpack.c.b16 %v86, %v85
  %v97 = vpack.c.b16 %v88, %v87
  %v98 = vpack.c.b16 %v90, %v89
  %107 = vmatprep.subr.bf16.mxu0 0
  %108 = vmatpush1.bf16.msra.mxu0 %v91
  %109 = vmatprep.subr.bf16.mxu0 0
  %110 = vmatpush1.bf16.msra.mxu0 %v92
  %111 = vmatprep.subr.bf16.mxu0 0
  %112 = vmatpush1.bf16.msra.mxu0 %v93
  %113 = vmatprep.subr.bf16.mxu0 0
  %114 = vmatpush1.bf16.msra.mxu0 %v94
  %115 = vmatprep.subr.bf16.mxu0 0
  %116 = vmatpush1.bf16.msra.mxu0 %v95
  %117 = vmatprep.subr.bf16.mxu0 0
  %118 = vmatpush1.bf16.msra.mxu0 %v96
  %119 = vmatprep.subr.bf16.mxu0 0
  %120 = vmatpush1.bf16.msra.mxu0 %v97
  %121 = vmatprep.subr.bf16.mxu0 0
  %122 = vmatpush1.bf16.msra.mxu0 %v98
  %123 = vmatprep.subr.bf16.mxu0 0
  %124 = vmatpush1.bf16.msra.mxu0 0
  %125 = vmatprep.subr.bf16.mxu0 0
  %126 = vmatpush1.bf16.msra.mxu0 0
  %127 = vmatprep.subr.bf16.mxu0 0
  %128 = vmatpush1.bf16.msra.mxu0 0
  %129 = vmatprep.subr.bf16.mxu0 0
  %130 = vmatpush1.bf16.msra.mxu0 0
  %131 = vmatprep.subr.bf16.mxu0 0
  %132 = vmatpush1.bf16.msra.mxu0 0
  %133 = vmatprep.subr.bf16.mxu0 0
  %134 = vmatpush1.bf16.msra.mxu0 0
  %135 = vmatprep.subr.bf16.mxu0 0
  %136 = vmatpush1.bf16.msra.mxu0 0
  %137 = vmatprep.subr.bf16.mxu0 0
  %138 = vmatpush1.bf16.msra.mxu0 0
  %139 = vmatprep.mubr.bf16.mxu0 0
  %140 = vmatmul.mubr.bf16.gmra.mrb[0].mxu0 %v55
  %v141 = vpop.f32.mrb[0].mxu0
  %v142 = vadd.f32 0.0, %v141
  %v143 = vpop.f32.mrb[0].mxu0
  %v144 = vpop.f32.mrb[0].mxu0
  %v145 = vadd.f32 0.0, %v144
  %v146 = vpop.f32.mrb[0].mxu0
  %147 = vmatprep.mubr.bf16.mxu0 0
  %148 = vmatmul.mubr.bf16.gmra.mrb[0].mxu0 %v56
  %v149 = vpop.f32.mrb[0].mxu0
  %v150 = vadd.f32 0.0, %v149
  %v151 = vpop.f32.mrb[0].mxu0
  %v152 = vpop.f32.mrb[0].mxu0
  %v153 = vadd.f32 0.0, %v152
  %v154 = vpop.f32.mrb[0].mxu0
  %155 = vdwg.mxu0
  %v156 = vadd.f32 %v23, %v142
  %v157 = vadd.f32 %v24, %v145
  %v158 = vadd.f32 %v25, %v150
  %v159 = vadd.f32 %v26, %v153
  %160 = vst [vmem:[#allocation2] sm:$0xff] %v156
  %161 = vst [vmem:[#allocation2 + $0x8] sm:$0xff] %v157
  %162 = vst [vmem:[#allocation2 + $0x10] sm:$0xff] %v158
  %163 = vst [vmem:[#allocation2 + $0x18] sm:$0xff] %v159
  // Predicated region
  $region18: #{_lambda_.22} parent=0 // pred_check
    %p164 = pneg %p15
  $region19: #{_lambda_.22} parent=0 // pred_check_branch
    %166 = sbr.rel (%p164) target = $region21
  $region20: #{_lambda_.22} parent=0 // pred_region
    %v167 = vld [vmem:[#allocation2] sm:$0xff]
    %v168 = vld [vmem:[#allocation2 + $0x8] sm:$0xff]
    %v169 = vld [vmem:[#allocation2 + $0x10] sm:$0xff]
    %v170 = vld [vmem:[#allocation2 + $0x18] sm:$0xff]
    %v171 = vtanh.pop %v167
    %v172 = vtanh.pop %v168
    %v173 = vtanh.pop %v169
    %v174 = vtanh.pop %v170
    %v175 = vld [vmem:[%s2] sm:$0xff]
    %v176 = vld [vmem:[%s2 + $0x8] sm:$0xff]
    %v177 = vld [vmem:[%s2 + $0x10] sm:$0xff]
    %v178 = vld [vmem:[%s2 + $0x18] sm:$0xff]
    %v179 = vadd.f32 %v171, %v175
    %v180 = vadd.f32 %v172, %v176
    %v181 = vadd.f32 %v173, %v177
    %v182 = vadd.f32 %v174, %v178
    %v183 = vpack.c.bf16 %v180, %v179
    %v184 = vpack.c.bf16 %v182, %v181
    %v187 = vunpack.c.l.b16 %v183
    %v188 = vunpack.c.h.b16 %v183
    %v189 = vunpack.c.l.b16 %v184
    %v190 = vunpack.c.h.b16 %v184
    %v191 = vpack.c.b16 %v187, %v187
    %v192 = vpack.c.b16 %v188, %v188
    %v193 = vpack.c.b16 %v189, %v189
    %v194 = vpack.c.b16 %v190, %v190
    %199 = vst [vmem:[%s3] sm:$0xf] %v191
    %200 = vst [vmem:[%s3 + $0x4] sm:$0xf] %v192
    %201 = vst [vmem:[%s3 + $0x8] sm:$0xf] %v193
    %202 = vst [vmem:[%s3 + $0xc] sm:$0xf] %v194
  $region21: #{_lambda_.22} parent=0 // pred_fallthru
    _
  // Predicated region
  $region22: #{_lambda_.22} parent=0 // pred_check
    _
  $region23: #{_lambda_.22} parent=0 // pred_check_branch
    %204 = sbr.rel (0) target = $region25
  $region24: #{_lambda_.22} parent=0 // pred_region
    _
  $region25: #{_lambda_.22} parent=0 // pred_fallthru
    _
  // Predicated region
  $region26: #{_lambda_.22} parent=0 // pred_check
    _
  $region27: #{_lambda_.22} parent=0 // pred_check_branch
    %206 = sbr.rel (0) target = $region29
  $region28: #{_lambda_.22} parent=0 // pred_region
    _
  $region29: #{_lambda_.22} parent=0 // pred_fallthru
    _

// kernel: _lambda_.27
$region0: #{_lambda_.27}
  #allocation0 [shape = 'u32[]', space=smem, size = 0x4, offset = 0x4, fixed_abs, tag = 'smem constant byte address 0x4 - core index']
  #allocation1 [shape = 'u32[144,128]{1,0:T(1,128)}', space=vmem, size = 0x12000, scoped, tag = 'internal scratch']
  #allocation2 [shape = 'f32[256,128]{1,0:T(8,128)}', space=vmem, size = 0x20000, scoped, tag = 'scratch operand']
  %s0 = inlined_call_operand.vmem [shape: bf16[512,128], index: 0, kind: input, shape index: {}]
  %s1 = inlined_call_operand.vmem [shape: bf16[128,128], index: 1, kind: input, shape index: {}]
  %s2 = inlined_call_operand.vmem [shape: bf16[512,128], index: 2, kind: output, shape index: {}]
  %s3 = sld [smem:[#allocation0]]
  $region49: #{_lambda_.27} parent=0
    _
  %s5 = ssub.s32 1, %s3
  %s6 = scalar_select 0, %s5, %s3
  loop: start=0, step=1, limit=4
  $region2: #{_lambda_.27} parent=0 // loop_pre_header
    _
  $region3: #{_lambda_.27} parent=0 // loop_header
    %s8 = sphi 0, %s12
    %p9 = scmp.ge.s32.totalorder %s8, 4
    %s15 = sphi 0, %s34
    %s16 = sphi 0, %s30
    %s17 = sphi 0, %s26
    %s18 = sphi 0, %s15
    %s19 = sphi 0, %s16
    %s20 = sphi 0, %s17
    %s21 = sphi 0, %s18
    %s22 = sphi 0, %s19
    %s23 = sphi 0, %s20
    %s39 = sphi 0, %s41
    %s42 = sphi 0, %s39
    %s43 = sphi 0, %s42
    %s59 = sphi 0, %s43
    %s67 = sphi 0, %s69
    %s70 = sphi 0, %s67
    %s71 = sphi 0, %s70
    %s87 = sphi 0, %s71
    %s95 = sphi 0, %s97
    %s98 = sphi 0, %s95
    %s99 = sphi 0, %s98
    %s115 = sphi 0, %s99
  $region4: #{_lambda_.27} parent=0 // loop_header_branch
    %11 = sbr.rel (%p9) target = $region8
  $region5: #{_lambda_.27} parent=0 // loop_body
    %s13 = ssub.s32 %s8, 1
    %s14 = ssub.s32 %s8, 2
    %s24 = sadd.s32 1, %s17
    %p25 = scmp.ge.s32.totalorder %s24, 1
    %s26 = scalar_select %p25, 0, %s24
    %s27 = sadd.s32 1, %s16
    %s28 = scalar_select %p25, %s27, %s16
    %p29 = scmp.ge.s32.totalorder %s28, 1
    %s30 = scalar_select %p29, 0, %s28
    %s31 = sadd.s32 1, %s15
    %s32 = scalar_select %p29, %s31, %s15
    %p33 = scmp.ge.s32.totalorder %s32, 2
    %s34 = scalar_select %p33, 0, %s32
    %s35 = ssub.s32 %s15, %s34
    %s36 = ssub.s32 %s17, %s26
    %s37 = sor.u32 %s35, %s36
    %p38 = scmp.eq.s32.totalorder %s37, 0
    %s40 = sadd.s32 %s39, 1
    %s41 = scalar_select %p38, %s39, %s40
    %p44 = pneg %p38
    %p45 = scmp.eq.s32.totalorder %s8, 1
    %p46 = por %p44, %p45
    %p47 = scmp.ne.s32.totalorder %s39, %s42
    %p48 = scmp.eq.s32.totalorder %s8, 0
    %p49 = por %p47, %p48
    %p50 = scmp.ne.s32.totalorder %s39, %s42
    %p51 = scmp.eq.s32.totalorder %s13, 1
    %p52 = por %p50, %p51
    %p53 = scmp.ne.s32.totalorder %s42, %s43
    %p54 = scmp.eq.s32.totalorder %s13, 0
    %p55 = por %p53, %p54
    %p56 = scmp.ne.s32.totalorder %s42, %s43
    %p57 = scmp.eq.s32.totalorder %s14, 1
    %p58 = por %p56, %p57
    %p60 = scmp.ne.s32.totalorder %s43, %s59
    %p61 = scmp.eq.s32.totalorder %s14, 0
    %p62 = por %p60, %p61
    %s63 = ssub.s32 %s17, %s26
    %s64 = ssub.s32 %s16, %s30
    %s65 = sor.u32 %s63, %s64
    %p66 = scmp.eq.s32.totalorder %s65, 0
    %s68 = sadd.s32 %s67, 1
    %s69 = scalar_select %p66, %s67, %s68
    %p72 = pneg %p66
    %p73 = scmp.eq.s32.totalorder %s8, 1
    %p74 = por %p72, %p73
    %p75 = scmp.ne.s32.totalorder %s67, %s70
    %p76 = scmp.eq.s32.totalorder %s8, 0
    %p77 = por %p75, %p76
    %p78 = scmp.ne.s32.totalorder %s67, %s70
    %p79 = scmp.eq.s32.totalorder %s13, 1
    %p80 = por %p78, %p79
    %p81 = scmp.ne.s32.totalorder %s70, %s71
    %p82 = scmp.eq.s32.totalorder %s13, 0
    %p83 = por %p81, %p82
    %p84 = scmp.ne.s32.totalorder %s70, %s71
    %p85 = scmp.eq.s32.totalorder %s14, 1
    %p86 = por %p84, %p85
    %p88 = scmp.ne.s32.totalorder %s71, %s87
    %p89 = scmp.eq.s32.totalorder %s14, 0
    %p90 = por %p88, %p89
    %s91 = ssub.s32 %s15, %s34
    %s92 = ssub.s32 %s16, %s30
    %s93 = sor.u32 %s91, %s92
    %p94 = scmp.eq.s32.totalorder %s93, 0
    %s96 = sadd.s32 %s95, 1
    %s97 = scalar_select %p94, %s95, %s96
    %p100 = pneg %p94
    %p101 = scmp.eq.s32.totalorder %s8, 1
    %p102 = por %p100, %p101
    %p103 = scmp.ne.s32.totalorder %s95, %s98
    %p104 = scmp.eq.s32.totalorder %s8, 0
    %p105 = por %p103, %p104
    %p106 = scmp.ne.s32.totalorder %s95, %s98
    %p107 = scmp.eq.s32.totalorder %s13, 1
    %p108 = por %p106, %p107
    %p109 = scmp.ne.s32.totalorder %s98, %s99
    %p110 = scmp.eq.s32.totalorder %s13, 0
    %p111 = por %p109, %p110
    %p112 = scmp.ne.s32.totalorder %s98, %s99
    %p113 = scmp.eq.s32.totalorder %s14, 1
    %p114 = por %p112, %p113
    %p116 = scmp.ne.s32.totalorder %s99, %s115
    %p117 = scmp.eq.s32.totalorder %s14, 0
    %p118 = por %p116, %p117
    %p119 = scmp.le.s32.totalorder 1, %s8
    %p120 = scmp.lt.s32.totalorder %s8, 3
    %p121 = pnand %p119, %p120
    %p122 = pneg %p121
    // Predicated region
    $region9: #{_lambda_.27} parent=5 // pred_check
      _
    $region10: #{_lambda_.27} parent=5 // pred_check_branch
      %124 = sbr.rel (%p121) target = $region12
    $region11: #{_lambda_.27} parent=5 // pred_region
      %s125 = ssub.s32 %s8, 1
      // Predicated region
      $region13: #{_lambda_.27} parent=11 // pred_check
        %p126 = pneg %p83
      $region14: #{_lambda_.27} parent=11 // pred_check_branch
        %128 = sbr.rel (%p126) target = $region16
      $region15: #{_lambda_.27} parent=11 // pred_region
        %s129 = smul.u32 16, %s20
        %p130 = scmp.lt.s32.totalorder %s129, 15
        %s131 = scalar_select %p130, %s129, 15
        %p132 = scmp.lt.s32.totalorder %s19, 0
        %s133 = scalar_select %p132, %s19, 0
        %s134 = sadd.s32 %s133, %s131
        %s135 = smul.addr %s134, 4
        %s136 = scalar_lea.vmem %s1, %s135
        %s137 = smul.u32 16, %s20
      $region16: #{_lambda_.27} parent=11 // pred_fallthru
        _
    $region12: #{_lambda_.27} parent=5 // pred_fallthru
      _
    %p138 = scmp.lt.s32.totalorder %s8, 2
    // Predicated region
    $region17: #{_lambda_.27} parent=5 // pred_check
      %p139 = pneg %p138
    $region18: #{_lambda_.27} parent=5 // pred_check_branch
      %141 = sbr.rel (%p139) target = $region20
    $region19: #{_lambda_.27} parent=5 // pred_region
      // Predicated region
      $region21: #{_lambda_.27} parent=19 // pred_check
        %p142 = pneg %p49
      $region22: #{_lambda_.27} parent=19 // pred_check_branch
        %144 = sbr.rel (%p142) target = $region24
      $region23: #{_lambda_.27} parent=19 // pred_region
        %s145 = smul.u32 32, %s15
        %p146 = scmp.lt.s32.totalorder %s145, 63
        %s147 = scalar_select %p146, %s145, 63
        %p148 = scmp.lt.s32.totalorder %s17, 0
        %s149 = scalar_select %p148, %s17, 0
        %s150 = sadd.s32 %s149, %s147
        %s151 = smul.addr %s150, 4
        %s152 = scalar_lea.vmem %s0, %s151
        %s153 = smul.u32 32, %s15
      $region24: #{_lambda_.27} parent=19 // pred_fallthru
        _
    $region20: #{_lambda_.27} parent=5 // pred_fallthru
      _
    %p154 = scmp.le.s32.totalorder 1, %s8
    %p155 = scmp.lt.s32.totalorder %s8, 3
    %p156 = pnand %p154, %p155
    %p157 = pneg %p156
    // Predicated region
    $region25: #{_lambda_.27} parent=5 // pred_check
      _
    $region26: #{_lambda_.27} parent=5 // pred_check_branch
      %159 = sbr.rel (%p156) target = $region28
    $region27: #{_lambda_.27} parent=5 // pred_region
      %s160 = ssub.s32 %s8, 1
      %s161 = smul.u32 32, %s18
      %p162 = scmp.lt.s32.totalorder %s161, 63
      %s163 = scalar_select %p162, %s161, 63
      %p164 = scmp.lt.s32.totalorder %s20, 0
      %s165 = scalar_select %p164, %s20, 0
      %s166 = sadd.s32 %s165, %s163
      %s167 = smul.addr %s166, 4
      %s168 = scalar_lea.vmem %s0, %s167
      %p169 = pneg %p55
      %p170 = pneg %p52
      %s171 = smul.u32 16, %s20
      %p172 = scmp.lt.s32.totalorder %s171, 15
      %s173 = scalar_select %p172, %s171, 15
      %p174 = scmp.lt.s32.totalorder %s19, 0
      %s175 = scalar_select %p174, %s19, 0
      %s176 = sadd.s32 %s175, %s173
      %s177 = smul.addr %s176, 4
      %s178 = scalar_lea.vmem %s1, %s177
      %p179 = pneg %p83
      %p180 = pneg %p80
      %p181 = pneg %p111
      %p182 = pneg %p108
      %s183 = smul.u32 32, %s18
      %p184 = scmp.lt.s32.totalorder %s183, 63
      %s185 = scalar_select %p184, %s183, 63
      %p186 = scmp.lt.s32.totalorder %s19, 0
      %s187 = scalar_select %p186, %s19, 0
      %s188 = sadd.s32 %s187, %s185
      %s189 = smul.addr %s188, 4
      %s190 = scalar_lea.vmem %s2, %s189
      %s191 = smul.u32 32, %s18
      %p192 = scmp.lt.s32.totalorder %s191, 63
      %s193 = scalar_select %p192, %s191, 63
      %p194 = scmp.lt.s32.totalorder %s20, 0
      %s195 = scalar_select %p194, %s20, 0
      %s196 = sadd.s32 %s195, %s193
      %s197 = smul.addr %s196, 4
      %s198 = scalar_lea.vmem %s0, %s197
      %s199 = smul.u32 32, %s18
      %s200 = smul.u32 16, %s20
      %p201 = scmp.lt.s32.totalorder %s200, 15
      %s202 = scalar_select %p201, %s200, 15
      %p203 = scmp.lt.s32.totalorder %s19, 0
      %s204 = scalar_select %p203, %s19, 0
      %s205 = sadd.s32 %s204, %s202
      %s206 = smul.addr %s205, 4
      %s207 = scalar_lea.vmem %s1, %s206
      %s208 = smul.u32 16, %s20
      %s209 = smul.u32 32, %s18
      %p210 = scmp.lt.s32.totalorder %s209, 63
      %s211 = scalar_select %p210, %s209, 63
      %p212 = scmp.lt.s32.totalorder %s19, 0
      %s213 = scalar_select %p212, %s19, 0
      %s214 = sadd.s32 %s213, %s211
      %s215 = smul.addr %s214, 4
      %s216 = scalar_lea.vmem %s2, %s215
      %s217 = smul.u32 32, %s18
      %p219 = scmp.eq.s32.totalorder %s20, 0
      // Predicated region
      $region29: #{_lambda_.27} parent=27 // pred_check
        %p220 = pneg %p219
      $region30: #{_lambda_.27} parent=27 // pred_check_branch
        %222 = sbr.rel (%p220) target = $region32
      $region31: #{_lambda_.27} parent=27 // pred_region
        %223 = vst [vmem:[#allocation2] sm:$0xff] 0.0
        %224 = vst [vmem:[#allocation2 + $0x8] sm:$0xff] 0.0
        %225 = vst [vmem:[#allocation2 + $0x10] sm:$0xff] 0.0
        %226 = vst [vmem:[#allocation2 + $0x18] sm:$0xff] 0.0
        %227 = vst [vmem:[#allocation2 + $0x20] sm:$0xff] 0.0
        %228 = vst [vmem:[#allocation2 + $0x28] sm:$0xff] 0.0
        %229 = vst [vmem:[#allocation2 + $0x30] sm:$0xff] 0.0
        %230 = vst [vmem:[#allocation2 + $0x38] sm:$0xff] 0.0
        %231 = vst [vmem:[#allocation2 + $0x40] sm:$0xff] 0.0
        %232 = vst [vmem:[#allocation2 + $0x48] sm:$0xff] 0.0
        %233 = vst [vmem:[#allocation2 + $0x50] sm:$0xff] 0.0
        %234 = vst [vmem:[#allocation2 + $0x58] sm:$0xff] 0.0
        %235 = vst [vmem:[#allocation2 + $0x60] sm:$0xff] 0.0
        %236 = vst [vmem:[#allocation2 + $0x68] sm:$0xff] 0.0
        %237 = vst [vmem:[#allocation2 + $0x70] sm:$0xff] 0.0
        %238 = vst [vmem:[#allocation2 + $0x78] sm:$0xff] 0.0
        %239 = vst [vmem:[#allocation2 + $0x80] sm:$0xff] 0.0
        %240 = vst [vmem:[#allocation2 + $0x88] sm:$0xff] 0.0
        %241 = vst [vmem:[#allocation2 + $0x90] sm:$0xff] 0.0
        %242 = vst [vmem:[#allocation2 + $0x98] sm:$0xff] 0.0
        %243 = vst [vmem:[#allocation2 + $0xa0] sm:$0xff] 0.0
        %244 = vst [vmem:[#allocation2 + $0xa8] sm:$0xff] 0.0
        %245 = vst [vmem:[#allocation2 + $0xb0] sm:$0xff] 0.0
        %246 = vst [vmem:[#allocation2 + $0xb8] sm:$0xff] 0.0
        %247 = vst [vmem:[#allocation2 + $0xc0] sm:$0xff] 0.0
        %248 = vst [vmem:[#allocation2 + $0xc8] sm:$0xff] 0.0
        %249 = vst [vmem:[#allocation2 + $0xd0] sm:$0xff] 0.0
        %250 = vst [vmem:[#allocation2 + $0xd8] sm:$0xff] 0.0
        %251 = vst [vmem:[#allocation2 + $0xe0] sm:$0xff] 0.0
        %252 = vst [vmem:[#allocation2 + $0xe8] sm:$0xff] 0.0
        %253 = vst [vmem:[#allocation2 + $0xf0] sm:$0xff] 0.0
        %254 = vst [vmem:[#allocation2 + $0xf8] sm:$0xff] 0.0
      $region32: #{_lambda_.27} parent=27 // pred_fallthru
        _
      %v255 = vld [vmem:[#allocation2] sm:$0xff]
      %v256 = vld [vmem:[#allocation2 + $0x8] sm:$0xff]
      %v257 = vld [vmem:[#allocation2 + $0x10] sm:$0xff]
      %v258 = vld [vmem:[#allocation2 + $0x18] sm:$0xff]
      %v259 = vld [vmem:[#allocation2 + $0x20] sm:$0xff]
      %v260 = vld [vmem:[#allocation2 + $0x28] sm:$0xff]
      %v261 = vld [vmem:[#allocation2 + $0x30] sm:$0xff]
      %v262 = vld [vmem:[#allocation2 + $0x38] sm:$0xff]
      %v263 = vld [vmem:[#allocation2 + $0x40] sm:$0xff]
      %v264 = vld [vmem:[#allocation2 + $0x48] sm:$0xff]
      %v265 = vld [vmem:[#allocation2 + $0x50] sm:$0xff]
      %v266 = vld [vmem:[#allocation2 + $0x58] sm:$0xff]
      %v267 = vld [vmem:[#allocation2 + $0x60] sm:$0xff]
      %v268 = vld [vmem:[#allocation2 + $0x68] sm:$0xff]
      %v269 = vld [vmem:[#allocation2 + $0x70] sm:$0xff]
      %v270 = vld [vmem:[#allocation2 + $0x78] sm:$0xff]
      %v271 = vld [vmem:[#allocation2 + $0x80] sm:$0xff]
      %v272 = vld [vmem:[#allocation2 + $0x88] sm:$0xff]
      %v273 = vld [vmem:[#allocation2 + $0x90] sm:$0xff]
      %v274 = vld [vmem:[#allocation2 + $0x98] sm:$0xff]
      %v275 = vld [vmem:[#allocation2 + $0xa0] sm:$0xff]
      %v276 = vld [vmem:[#allocation2 + $0xa8] sm:$0xff]
      %v277 = vld [vmem:[#allocation2 + $0xb0] sm:$0xff]
      %v278 = vld [vmem:[#allocation2 + $0xb8] sm:$0xff]
      %v279 = vld [vmem:[#allocation2 + $0xc0] sm:$0xff]
      %v280 = vld [vmem:[#allocation2 + $0xc8] sm:$0xff]
      %v281 = vld [vmem:[#allocation2 + $0xd0] sm:$0xff]
      %v282 = vld [vmem:[#allocation2 + $0xd8] sm:$0xff]
      %v283 = vld [vmem:[#allocation2 + $0xe0] sm:$0xff]
      %v284 = vld [vmem:[#allocation2 + $0xe8] sm:$0xff]
      %v285 = vld [vmem:[#allocation2 + $0xf0] sm:$0xff]
      %v286 = vld [vmem:[#allocation2 + $0xf8] sm:$0xff]
      %v287 = vld [vmem:[%s198] sm:$0xf]
      %v288 = vld [vmem:[%s198 + $0x4] sm:$0xf]
      %v289 = vld [vmem:[%s198 + $0x8] sm:$0xf]
      %v290 = vld [vmem:[%s198 + $0xc] sm:$0xf]
      %v291 = vld [vmem:[%s198 + $0x10] sm:$0xf]
      %v292 = vld [vmem:[%s198 + $0x14] sm:$0xf]
      %v293 = vld [vmem:[%s198 + $0x18] sm:$0xf]
      %v294 = vld [vmem:[%s198 + $0x1c] sm:$0xf]
      %v295 = vld [vmem:[%s198 + $0x20] sm:$0xf]
      %v296 = vld [vmem:[%s198 + $0x24] sm:$0xf]
      %v297 = vld [vmem:[%s198 + $0x28] sm:$0xf]
      %v298 = vld [vmem:[%s198 + $0x2c] sm:$0xf]
      %v299 = vld [vmem:[%s198 + $0x30] sm:$0xf]
      %v300 = vld [vmem:[%s198 + $0x34] sm:$0xf]
      %v301 = vld [vmem:[%s198 + $0x38] sm:$0xf]
      %v302 = vld [vmem:[%s198 + $0x3c] sm:$0xf]
      %v303 = vld [vmem:[%s198 + $0x40] sm:$0xf]
      %v304 = vld [vmem:[%s198 + $0x44] sm:$0xf]
      %v305 = vld [vmem:[%s198 + $0x48] sm:$0xf]
      %v306 = vld [vmem:[%s198 + $0x4c] sm:$0xf]
      %v307 = vld [vmem:[%s198 + $0x50] sm:$0xf]
      %v308 = vld [vmem:[%s198 + $0x54] sm:$0xf]
      %v309 = vld [vmem:[%s198 + $0x58] sm:$0xf]
      %v310 = vld [vmem:[%s198 + $0x5c] sm:$0xf]
      %v311 = vld [vmem:[%s198 + $0x60] sm:$0xf]
      %v312 = vld [vmem:[%s198 + $0x64] sm:$0xf]
      %v313 = vld [vmem:[%s198 + $0x68] sm:$0xf]
      %v314 = vld [vmem:[%s198 + $0x6c] sm:$0xf]
      %v315 = vld [vmem:[%s198 + $0x70] sm:$0xf]
      %v316 = vld [vmem:[%s198 + $0x74] sm:$0xf]
      %v317 = vld [vmem:[%s198 + $0x78] sm:$0xf]
      %v318 = vld [vmem:[%s198 + $0x7c] sm:$0xf]
      %v319 = vld [vmem:[%s207] sm:$0xf]
      %v320 = vld [vmem:[%s207 + $0x4] sm:$0xf]
      %v321 = vld [vmem:[%s207 + $0x8] sm:$0xf]
      %v322 = vld [vmem:[%s207 + $0xc] sm:$0xf]
      %v323 = vld [vmem:[%s207 + $0x10] sm:$0xf]
      %v324 = vld [vmem:[%s207 + $0x14] sm:$0xf]
      %v325 = vld [vmem:[%s207 + $0x18] sm:$0xf]
      %v326 = vld [vmem:[%s207 + $0x1c] sm:$0xf]
      %v327 = vld [vmem:[%s207 + $0x20] sm:$0xf]
      %v328 = vld [vmem:[%s207 + $0x24] sm:$0xf]
      %v329 = vld [vmem:[%s207 + $0x28] sm:$0xf]
      %v330 = vld [vmem:[%s207 + $0x2c] sm:$0xf]
      %v331 = vld [vmem:[%s207 + $0x30] sm:$0xf]
      %v332 = vld [vmem:[%s207 + $0x34] sm:$0xf]
      %v333 = vld [vmem:[%s207 + $0x38] sm:$0xf]
      %v334 = vld [vmem:[%s207 + $0x3c] sm:$0xf]
      %v367 = vunpack.c.l.b16 %v287
      %v368 = vunpack.c.l.b16 %v288
      %v369 = vunpack.c.l.b16 %v289
      %v370 = vunpack.c.l.b16 %v290
      %v371 = vunpack.c.l.b16 %v291
      %v372 = vunpack.c.l.b16 %v292
      %v373 = vunpack.c.l.b16 %v293
      %v374 = vunpack.c.l.b16 %v294
      %v375 = vunpack.c.l.b16 %v295
      %v376 = vunpack.c.l.b16 %v296
      %v377 = vunpack.c.l.b16 %v297
      %v378 = vunpack.c.l.b16 %v298
      %v379 = vunpack.c.l.b16 %v299
      %v380 = vunpack.c.l.b16 %v300
      %v381 = vunpack.c.l.b16 %v301
      %v382 = vunpack.c.l.b16 %v302
      %v383 = vunpack.c.l.b16 %v303
      %v384 = vunpack.c.l.b16 %v304
      %v385 = vunpack.c.l.b16 %v305
      %v386 = vunpack.c.l.b16 %v306
      %v387 = vunpack.c.l.b16 %v307
      %v388 = vunpack.c.l.b16 %v308
      %v389 = vunpack.c.l.b16 %v309
      %v390 = vunpack.c.l.b16 %v310
      %v391 = vunpack.c.l.b16 %v311
      %v392 = vunpack.c.l.b16 %v312
      %v393 = vunpack.c.l.b16 %v313
      %v394 = vunpack.c.l.b16 %v314
      %v395 = vunpack.c.l.b16 %v315
      %v396 = vunpack.c.l.b16 %v316
      %v397 = vunpack.c.l.b16 %v317
      %v398 = vunpack.c.l.b16 %v318
      %v399 = vpack.c.b16 %v368, %v367
      %v400 = vpack.c.b16 %v370, %v369
      %v401 = vpack.c.b16 %v372, %v371
      %v402 = vpack.c.b16 %v374, %v373
      %v403 = vpack.c.b16 %v376, %v375
      %v404 = vpack.c.b16 %v378, %v377
      %v405 = vpack.c.b16 %v380, %v379
      %v406 = vpack.c.b16 %v382, %v381
      %v407 = vpack.c.b16 %v384, %v383
      %v408 = vpack.c.b16 %v386, %v385
      %v409 = vpack.c.b16 %v388, %v387
      %v410 = vpack.c.b16 %v390, %v389
      %v411 = vpack.c.b16 %v392, %v391
      %v412 = vpack.c.b16 %v394, %v393
      %v413 = vpack.c.b16 %v396, %v395
      %v414 = vpack.c.b16 %v398, %v397
      %v447 = vunpack.c.l.b16 %v319
      %v448 = vunpack.c.l.b16 %v320
      %v449 = vunpack.c.l.b16 %v321
      %v450 = vunpack.c.l.b16 %v322
      %v451 = vunpack.c.l.b16 %v323
      %v452 = vunpack.c.l.b16 %v324
      %v453 = vunpack.c.l.b16 %v325
      %v454 = vunpack.c.l.b16 %v326
      %v455 = vunpack.c.l.b16 %v327
      %v456 = vunpack.c.l.b16 %v328
      %v457 = vunpack.c.l.b16 %v329
      %v458 = vunpack.c.l.b16 %v330
      %v459 = vunpack.c.l.b16 %v331
      %v460 = vunpack.c.l.b16 %v332
      %v461 = vunpack.c.l.b16 %v333
      %v462 = vunpack.c.l.b16 %v334
      %v463 = vpack.c.b16 %v448, %v447
      %v464 = vpack.c.b16 %v450, %v449
      %v465 = vpack.c.b16 %v452, %v451
      %v466 = vpack.c.b16 %v454, %v453
      %v467 = vpack.c.b16 %v456, %v455
      %v468 = vpack.c.b16 %v458, %v457
      %v469 = vpack.c.b16 %v460, %v459
      %v470 = vpack.c.b16 %v462, %v461
      %479 = vmatprep.subr.bf16.mxu0 0
      %480 = vmatpush1.bf16.msra.mxu0 %v463
      %481 = vmatprep.subr.bf16.mxu0 0
      %482 = vmatpush1.bf16.msra.mxu0 %v464
      %483 = vmatprep.subr.bf16.mxu0 0
      %484 = vmatpush1.bf16.msra.mxu0 %v465
      %485 = vmatprep.subr.bf16.mxu0 0
      %486 = vmatpush1.bf16.msra.mxu0 %v466
      %487 = vmatprep.subr.bf16.mxu0 0
      %488 = vmatpush1.bf16.msra.mxu0 %v467
      %489 = vmatprep.subr.bf16.mxu0 0
      %490 = vmatpush1.bf16.msra.mxu0 %v468
      %491 = vmatprep.subr.bf16.mxu0 0
      %492 = vmatpush1.bf16.msra.mxu0 %v469
      %493 = vmatprep.subr.bf16.mxu0 0
      %494 = vmatpush1.bf16.msra.mxu0 %v470
      %495 = vmatprep.subr.bf16.mxu0 0
      %496 = vmatpush1.bf16.msra.mxu0 0
      %497 = vmatprep.subr.bf16.mxu0 0
      %498 = vmatpush1.bf16.msra.mxu0 0
      %499 = vmatprep.subr.bf16.mxu0 0
      %500 = vmatpush1.bf16.msra.mxu0 0
      %501 = vmatprep.subr.bf16.mxu0 0
      %502 = vmatpush1.bf16.msra.mxu0 0
      %503 = vmatprep.subr.bf16.mxu0 0
      %504 = vmatpush1.bf16.msra.mxu0 0
      %505 = vmatprep.subr.bf16.mxu0 0
      %506 = vmatpush1.bf16.msra.mxu0 0
      %507 = vmatprep.subr.bf16.mxu0 0
      %508 = vmatpush1.bf16.msra.mxu0 0
      %509 = vmatprep.subr.bf16.mxu0 0
      %510 = vmatpush1.bf16.msra.mxu0 0
      %511 = vmatprep.mubr.bf16.mxu0 0
      %512 = vmatmul.mubr.bf16.gmra.mrb[0].mxu0 %v399
      %v513 = vpop.f32.mrb[0].mxu0
      %v514 = vadd.f32 0.0, %v513
      %v515 = vpop.f32.mrb[0].mxu0
      %v516 = vpop.f32.mrb[0].mxu0
      %v517 = vadd.f32 0.0, %v516
      %v518 = vpop.f32.mrb[0].mxu0
      %519 = vmatprep.mubr.bf16.mxu0 0
      %520 = vmatmul.mubr.bf16.gmra.mrb[0].mxu0 %v400
      %v521 = vpop.f32.mrb[0].mxu0
      %v522 = vadd.f32 0.0, %v521
      %v523 = vpop.f32.mrb[0].mxu0
      %v524 = vpop.f32.mrb[0].mxu0
      %v525 = vadd.f32 0.0, %v524
      %v526 = vpop.f32.mrb[0].mxu0
      %527 = vmatprep.mubr.bf16.mxu0 0
      %528 = vmatmul.mubr.bf16.gmra.mrb[0].mxu0 %v401
      %v529 = vpop.f32.mrb[0].mxu0
      %v530 = vadd.f32 0.0, %v529
      %v531 = vpop.f32.mrb[0].mxu0
      %v532 = vpop.f32.mrb[0].mxu0
      %v533 = vadd.f32 0.0, %v532
      %v534 = vpop.f32.mrb[0].mxu0
      %535 = vmatprep.mubr.bf16.mxu0 0
      %536 = vmatmul.mubr.bf16.gmra.mrb[0].mxu0 %v402
      %v537 = vpop.f32.mrb[0].mxu0
      %v538 = vadd.f32 0.0, %v537
      %v539 = vpop.f32.mrb[0].mxu0
      %v540 = vpop.f32.mrb[0].mxu0
      %v541 = vadd.f32 0.0, %v540
      %v542 = vpop.f32.mrb[0].mxu0
      %543 = vmatprep.mubr.bf16.mxu0 0
      %544 = vmatmul.mubr.bf16.gmra.mrb[0].mxu0 %v403
      %v545 = vpop.f32.mrb[0].mxu0
      %v546 = vadd.f32 0.0, %v545
      %v547 = vpop.f32.mrb[0].mxu0
      %v548 = vpop.f32.mrb[0].mxu0
      %v549 = vadd.f32 0.0, %v548
      %v550 = vpop.f32.mrb[0].mxu0
      %551 = vmatprep.mubr.bf16.mxu0 0
      %552 = vmatmul.mubr.bf16.gmra.mrb[0].mxu0 %v404
      %v553 = vpop.f32.mrb[0].mxu0
      %v554 = vadd.f32 0.0, %v553
      %v555 = vpop.f32.mrb[0].mxu0
      %v556 = vpop.f32.mrb[0].mxu0
      %v557 = vadd.f32 0.0, %v556
      %v558 = vpop.f32.mrb[0].mxu0
      %559 = vmatprep.mubr.bf16.mxu0 0
      %560 = vmatmul.mubr.bf16.gmra.mrb[0].mxu0 %v405
      %v561 = vpop.f32.mrb[0].mxu0
      %v562 = vadd.f32 0.0, %v561
      %v563 = vpop.f32.mrb[0].mxu0
      %v564 = vpop.f32.mrb[0].mxu0
      %v565 = vadd.f32 0.0, %v564
      %v566 = vpop.f32.mrb[0].mxu0
      %567 = vmatprep.mubr.bf16.mxu0 0
      %568 = vmatmul.mubr.bf16.gmra.mrb[0].mxu0 %v406
      %v569 = vpop.f32.mrb[0].mxu0
      %v570 = vadd.f32 0.0, %v569
      %v571 = vpop.f32.mrb[0].mxu0
      %v572 = vpop.f32.mrb[0].mxu0
      %v573 = vadd.f32 0.0, %v572
      %v574 = vpop.f32.mrb[0].mxu0
      %575 = vmatprep.mubr.bf16.mxu0 0
      %576 = vmatmul.mubr.bf16.gmra.mrb[0].mxu0 %v407
      %v577 = vpop.f32.mrb[0].mxu0
      %v578 = vadd.f32 0.0, %v577
      %v579 = vpop.f32.mrb[0].mxu0
      %v580 = vpop.f32.mrb[0].mxu0
      %v581 = vadd.f32 0.0, %v580
      %v582 = vpop.f32.mrb[0].mxu0
      %583 = vmatprep.mubr.bf16.mxu0 0
      %584 = vmatmul.mubr.bf16.gmra.mrb[0].mxu0 %v408
      %v585 = vpop.f32.mrb[0].mxu0
      %v586 = vadd.f32 0.0, %v585
      %v587 = vpop.f32.mrb[0].mxu0
      %v588 = vpop.f32.mrb[0].mxu0
      %v589 = vadd.f32 0.0, %v588
      %v590 = vpop.f32.mrb[0].mxu0
      %591 = vmatprep.mubr.bf16.mxu0 0
      %592 = vmatmul.mubr.bf16.gmra.mrb[0].mxu0 %v409
      %v593 = vpop.f32.mrb[0].mxu0
      %v594 = vadd.f32 0.0, %v593
      %v595 = vpop.f32.mrb[0].mxu0
      %v596 = vpop.f32.mrb[0].mxu0
      %v597 = vadd.f32 0.0, %v596
      %v598 = vpop.f32.mrb[0].mxu0
      %599 = vmatprep.mubr.bf16.mxu0 0
      %600 = vmatmul.mubr.bf16.gmra.mrb[0].mxu0 %v410
      %v601 = vpop.f32.mrb[0].mxu0
      %v602 = vadd.f32 0.0, %v601
      %v603 = vpop.f32.mrb[0].mxu0
      %v604 = vpop.f32.mrb[0].mxu0
      %v605 = vadd.f32 0.0, %v604
      %v606 = vpop.f32.mrb[0].mxu0
      %607 = vmatprep.mubr.bf16.mxu0 0
      %608 = vmatmul.mubr.bf16.gmra.mrb[0].mxu0 %v411
      %v609 = vpop.f32.mrb[0].mxu0
      %v610 = vadd.f32 0.0, %v609
      %v611 = vpop.f32.mrb[0].mxu0
      %v612 = vpop.f32.mrb[0].mxu0
      %v613 = vadd.f32 0.0, %v612
      %v614 = vpop.f32.mrb[0].mxu0
      %615 = vmatprep.mubr.bf16.mxu0 0
      %616 = vmatmul.mubr.bf16.gmra.mrb[0].mxu0 %v412
      %v617 = vpop.f32.mrb[0].mxu0
      %v618 = vadd.f32 0.0, %v617
      %v619 = vpop.f32.mrb[0].mxu0
      %v620 = vpop.f32.mrb[0].mxu0
      %v621 = vadd.f32 0.0, %v620
      %v622 = vpop.f32.mrb[0].mxu0
      %623 = vmatprep.mubr.bf16.mxu0 0
      %624 = vmatmul.mubr.bf16.gmra.mrb[0].mxu0 %v413
      %v625 = vpop.f32.mrb[0].mxu0
      %v626 = vadd.f32 0.0, %v625
      %v627 = vpop.f32.mrb[0].mxu0
      %v628 = vpop.f32.mrb[0].mxu0
      %v629 = vadd.f32 0.0, %v628
      %v630 = vpop.f32.mrb[0].mxu0
      %631 = vmatprep.mubr.bf16.mxu0 0
      %632 = vmatmul.mubr.bf16.gmra.mrb[0].mxu0 %v414
      %v633 = vpop.f32.mrb[0].mxu0
      %v634 = vadd.f32 0.0, %v633
      %v635 = vpop.f32.mrb[0].mxu0
      %v636 = vpop.f32.mrb[0].mxu0
      %v637 = vadd.f32 0.0, %v636
      %v638 = vpop.f32.mrb[0].mxu0
      %639 = vdwg.mxu0
      %v640 = vadd.f32 %v255, %v514
      %v641 = vadd.f32 %v256, %v517
      %v642 = vadd.f32 %v257, %v522
      %v643 = vadd.f32 %v258, %v525
      %v644 = vadd.f32 %v259, %v530
      %v645 = vadd.f32 %v260, %v533
      %v646 = vadd.f32 %v261, %v538
      %v647 = vadd.f32 %v262, %v541
      %v648 = vadd.f32 %v263, %v546
      %v649 = vadd.f32 %v264, %v549
      %v650 = vadd.f32 %v265, %v554
      %v651 = vadd.f32 %v266, %v557
      %v652 = vadd.f32 %v267, %v562
      %v653 = vadd.f32 %v268, %v565
      %v654 = vadd.f32 %v269, %v570
      %v655 = vadd.f32 %v270, %v573
      %v656 = vadd.f32 %v271, %v578
      %v657 = vadd.f32 %v272, %v581
      %v658 = vadd.f32 %v273, %v586
      %v659 = vadd.f32 %v274, %v589
      %v660 = vadd.f32 %v275, %v594
      %v661 = vadd.f32 %v276, %v597
      %v662 = vadd.f32 %v277, %v602
      %v663 = vadd.f32 %v278, %v605
      %v664 = vadd.f32 %v279, %v610
      %v665 = vadd.f32 %v280, %v613
      %v666 = vadd.f32 %v281, %v618
      %v667 = vadd.f32 %v282, %v621
      %v668 = vadd.f32 %v283, %v626
      %v669 = vadd.f32 %v284, %v629
      %v670 = vadd.f32 %v285, %v634
      %v671 = vadd.f32 %v286, %v637
      %672 = vst [vmem:[#allocation2] sm:$0xff] %v640
      %673 = vst [vmem:[#allocation2 + $0x8] sm:$0xff] %v641
      %674 = vst [vmem:[#allocation2 + $0x10] sm:$0xff] %v642
      %675 = vst [vmem:[#allocation2 + $0x18] sm:$0xff] %v643
      %676 = vst [vmem:[#allocation2 + $0x20] sm:$0xff] %v644
      %677 = vst [vmem:[#allocation2 + $0x28] sm:$0xff] %v645
      %678 = vst [vmem:[#allocation2 + $0x30] sm:$0xff] %v646
      %679 = vst [vmem:[#allocation2 + $0x38] sm:$0xff] %v647
      %680 = vst [vmem:[#allocation2 + $0x40] sm:$0xff] %v648
      %681 = vst [vmem:[#allocation2 + $0x48] sm:$0xff] %v649
      %682 = vst [vmem:[#allocation2 + $0x50] sm:$0xff] %v650
      %683 = vst [vmem:[#allocation2 + $0x58] sm:$0xff] %v651
      %684 = vst [vmem:[#allocation2 + $0x60] sm:$0xff] %v652
      %685 = vst [vmem:[#allocation2 + $0x68] sm:$0xff] %v653
      %686 = vst [vmem:[#allocation2 + $0x70] sm:$0xff] %v654
      %687 = vst [vmem:[#allocation2 + $0x78] sm:$0xff] %v655
      %688 = vst [vmem:[#allocation2 + $0x80] sm:$0xff] %v656
      %689 = vst [vmem:[#allocation2 + $0x88] sm:$0xff] %v657
      %690 = vst [vmem:[#allocation2 + $0x90] sm:$0xff] %v658
      %691 = vst [vmem:[#allocation2 + $0x98] sm:$0xff] %v659
      %692 = vst [vmem:[#allocation2 + $0xa0] sm:$0xff] %v660
      %693 = vst [vmem:[#allocation2 + $0xa8] sm:$0xff] %v661
      %694 = vst [vmem:[#allocation2 + $0xb0] sm:$0xff] %v662
      %695 = vst [vmem:[#allocation2 + $0xb8] sm:$0xff] %v663
      %696 = vst [vmem:[#allocation2 + $0xc0] sm:$0xff] %v664
      %697 = vst [vmem:[#allocation2 + $0xc8] sm:$0xff] %v665
      %698 = vst [vmem:[#allocation2 + $0xd0] sm:$0xff] %v666
      %699 = vst [vmem:[#allocation2 + $0xd8] sm:$0xff] %v667
      %700 = vst [vmem:[#allocation2 + $0xe0] sm:$0xff] %v668
      %701 = vst [vmem:[#allocation2 + $0xe8] sm:$0xff] %v669
      %702 = vst [vmem:[#allocation2 + $0xf0] sm:$0xff] %v670
      %703 = vst [vmem:[#allocation2 + $0xf8] sm:$0xff] %v671
      // Predicated region
      $region33: #{_lambda_.27} parent=27 // pred_check
        %p704 = pneg %p219
      $region34: #{_lambda_.27} parent=27 // pred_check_branch
        %706 = sbr.rel (%p704) target = $region36
      $region35: #{_lambda_.27} parent=27 // pred_region
        %v707 = vld [vmem:[#allocation2] sm:$0xff]
        %v708 = vld [vmem:[#allocation2 + $0x8] sm:$0xff]
        %v709 = vld [vmem:[#allocation2 + $0x10] sm:$0xff]
        %v710 = vld [vmem:[#allocation2 + $0x18] sm:$0xff]
        %v711 = vld [vmem:[#allocation2 + $0x20] sm:$0xff]
        %v712 = vld [vmem:[#allocation2 + $0x28] sm:$0xff]
        %v713 = vld [vmem:[#allocation2 + $0x30] sm:$0xff]
        %v714 = vld [vmem:[#allocation2 + $0x38] sm:$0xff]
        %v715 = vld [vmem:[#allocation2 + $0x40] sm:$0xff]
        %v716 = vld [vmem:[#allocation2 + $0x48] sm:$0xff]
        %v717 = vld [vmem:[#allocation2 + $0x50] sm:$0xff]
        %v718 = vld [vmem:[#allocation2 + $0x58] sm:$0xff]
        %v719 = vld [vmem:[#allocation2 + $0x60] sm:$0xff]
        %v720 = vld [vmem:[#allocation2 + $0x68] sm:$0xff]
        %v721 = vld [vmem:[#allocation2 + $0x70] sm:$0xff]
        %v722 = vld [vmem:[#allocation2 + $0x78] sm:$0xff]
        %v723 = vld [vmem:[#allocation2 + $0x80] sm:$0xff]
        %v724 = vld [vmem:[#allocation2 + $0x88] sm:$0xff]
        %v725 = vld [vmem:[#allocation2 + $0x90] sm:$0xff]
        %v726 = vld [vmem:[#allocation2 + $0x98] sm:$0xff]
        %v727 = vld [vmem:[#allocation2 + $0xa0] sm:$0xff]
        %v728 = vld [vmem:[#allocation2 + $0xa8] sm:$0xff]
        %v729 = vld [vmem:[#allocation2 + $0xb0] sm:$0xff]
        %v730 = vld [vmem:[#allocation2 + $0xb8] sm:$0xff]
        %v731 = vld [vmem:[#allocation2 + $0xc0] sm:$0xff]
        %v732 = vld [vmem:[#allocation2 + $0xc8] sm:$0xff]
        %v733 = vld [vmem:[#allocation2 + $0xd0] sm:$0xff]
        %v734 = vld [vmem:[#allocation2 + $0xd8] sm:$0xff]
        %v735 = vld [vmem:[#allocation2 + $0xe0] sm:$0xff]
        %v736 = vld [vmem:[#allocation2 + $0xe8] sm:$0xff]
        %v737 = vld [vmem:[#allocation2 + $0xf0] sm:$0xff]
        %v738 = vld [vmem:[#allocation2 + $0xf8] sm:$0xff]
        %v739 = vtanh.pop %v707
        %v740 = vtanh.pop %v708
        %v741 = vtanh.pop %v709
        %v742 = vtanh.pop %v710
        %v743 = vtanh.pop %v711
        %v744 = vtanh.pop %v712
        %v745 = vtanh.pop %v713
        %v746 = vtanh.pop %v714
        %v747 = vtanh.pop %v715
        %v748 = vtanh.pop %v716
        %v749 = vtanh.pop %v717
        %v750 = vtanh.pop %v718
        %v751 = vtanh.pop %v719
        %v752 = vtanh.pop %v720
        %v753 = vtanh.pop %v721
        %v754 = vtanh.pop %v722
        %v755 = vtanh.pop %v723
        %v756 = vtanh.pop %v724
        %v757 = vtanh.pop %v725
        %v758 = vtanh.pop %v726
        %v759 = vtanh.pop %v727
        %v760 = vtanh.pop %v728
        %v761 = vtanh.pop %v729
        %v762 = vtanh.pop %v730
        %v763 = vtanh.pop %v731
        %v764 = vtanh.pop %v732
        %v765 = vtanh.pop %v733
        %v766 = vtanh.pop %v734
        %v767 = vtanh.pop %v735
        %v768 = vtanh.pop %v736
        %v769 = vtanh.pop %v737
        %v770 = vtanh.pop %v738
        %v771 = vpack.c.bf16 %v740, %v739
        %v772 = vpack.c.bf16 %v742, %v741
        %v773 = vpack.c.bf16 %v744, %v743
        %v774 = vpack.c.bf16 %v746, %v745
        %v775 = vpack.c.bf16 %v748, %v747
        %v776 = vpack.c.bf16 %v750, %v749
        %v777 = vpack.c.bf16 %v752, %v751
        %v778 = vpack.c.bf16 %v754, %v753
        %v779 = vpack.c.bf16 %v756, %v755
        %v780 = vpack.c.bf16 %v758, %v757
        %v781 = vpack.c.bf16 %v760, %v759
        %v782 = vpack.c.bf16 %v762, %v761
        %v783 = vpack.c.bf16 %v764, %v763
        %v784 = vpack.c.bf16 %v766, %v765
        %v785 = vpack.c.bf16 %v768, %v767
        %v786 = vpack.c.bf16 %v770, %v769
        %v803 = vunpack.c.l.b16 %v771
        %v804 = vunpack.c.h.b16 %v771
        %v805 = vunpack.c.l.b16 %v772
        %v806 = vunpack.c.h.b16 %v772
        %v807 = vunpack.c.l.b16 %v773
        %v808 = vunpack.c.h.b16 %v773
        %v809 = vunpack.c.l.b16 %v774
        %v810 = vunpack.c.h.b16 %v774
        %v811 = vunpack.c.l.b16 %v775
        %v812 = vunpack.c.h.b16 %v775
        %v813 = vunpack.c.l.b16 %v776
        %v814 = vunpack.c.h.b16 %v776
        %v815 = vunpack.c.l.b16 %v777
        %v816 = vunpack.c.h.b16 %v777
        %v817 = vunpack.c.l.b16 %v778
        %v818 = vunpack.c.h.b16 %v778
        %v819 = vunpack.c.l.b16 %v779
        %v820 = vunpack.c.h.b16 %v779
        %v821 = vunpack.c.l.b16 %v780
        %v822 = vunpack.c.h.b16 %v780
        %v823 = vunpack.c.l.b16 %v781
        %v824 = vunpack.c.h.b16 %v781
        %v825 = vunpack.c.l.b16 %v782
        %v826 = vunpack.c.h.b16 %v782
        %v827 = vunpack.c.l.b16 %v783
        %v828 = vunpack.c.h.b16 %v783
        %v829 = vunpack.c.l.b16 %v784
        %v830 = vunpack.c.h.b16 %v784
        %v831 = vunpack.c.l.b16 %v785
        %v832 = vunpack.c.h.b16 %v785
        %v833 = vunpack.c.l.b16 %v786
        %v834 = vunpack.c.h.b16 %v786
        %v835 = vpack.c.b16 %v803, %v803
        %v836 = vpack.c.b16 %v804, %v804
        %v837 = vpack.c.b16 %v805, %v805
        %v838 = vpack.c.b16 %v806, %v806
        %v839 = vpack.c.b16 %v807, %v807
        %v840 = vpack.c.b16 %v808, %v808
        %v841 = vpack.c.b16 %v809, %v809
        %v842 = vpack.c.b16 %v810, %v810
        %v843 = vpack.c.b16 %v811, %v811
        %v844 = vpack.c.b16 %v812, %v812
        %v845 = vpack.c.b16 %v813, %v813
        %v846 = vpack.c.b16 %v814, %v814
        %v847 = vpack.c.b16 %v815, %v815
        %v848 = vpack.c.b16 %v816, %v816
        %v849 = vpack.c.b16 %v817, %v817
        %v850 = vpack.c.b16 %v818, %v818
        %v851 = vpack.c.b16 %v819, %v819
        %v852 = vpack.c.b16 %v820, %v820
        %v853 = vpack.c.b16 %v821, %v821
        %v854 = vpack.c.b16 %v822, %v822
        %v855 = vpack.c.b16 %v823, %v823
        %v856 = vpack.c.b16 %v824, %v824
        %v857 = vpack.c.b16 %v825, %v825
        %v858 = vpack.c.b16 %v826, %v826
        %v859 = vpack.c.b16 %v827, %v827
        %v860 = vpack.c.b16 %v828, %v828
        %v861 = vpack.c.b16 %v829, %v829
        %v862 = vpack.c.b16 %v830, %v830
        %v863 = vpack.c.b16 %v831, %v831
        %v864 = vpack.c.b16 %v832, %v832
        %v865 = vpack.c.b16 %v833, %v833
        %v866 = vpack.c.b16 %v834, %v834
        %899 = vst [vmem:[%s216] sm:$0xf] %v835
        %900 = vst [vmem:[%s216 + $0x4] sm:$0xf] %v836
        %901 = vst [vmem:[%s216 + $0x8] sm:$0xf] %v837
        %902 = vst [vmem:[%s216 + $0xc] sm:$0xf] %v838
        %903 = vst [vmem:[%s216 + $0x10] sm:$0xf] %v839
        %904 = vst [vmem:[%s216 + $0x14] sm:$0xf] %v840
        %905 = vst [vmem:[%s216 + $0x18] sm:$0xf] %v841
        %906 = vst [vmem:[%s216 + $0x1c] sm:$0xf] %v842
        %907 = vst [vmem:[%s216 + $0x20] sm:$0xf] %v843
        %908 = vst [vmem:[%s216 + $0x24] sm:$0xf] %v844
        %909 = vst [vmem:[%s216 + $0x28] sm:$0xf] %v845
        %910 = vst [vmem:[%s216 + $0x2c] sm:$0xf] %v846
        %911 = vst [vmem:[%s216 + $0x30] sm:$0xf] %v847
        %912 = vst [vmem:[%s216 + $0x34] sm:$0xf] %v848
        %913 = vst [vmem:[%s216 + $0x38] sm:$0xf] %v849
        %914 = vst [vmem:[%s216 + $0x3c] sm:$0xf] %v850
        %915 = vst [vmem:[%s216 + $0x40] sm:$0xf] %v851
        %916 = vst [vmem:[%s216 + $0x44] sm:$0xf] %v852
        %917 = vst [vmem:[%s216 + $0x48] sm:$0xf] %v853
        %918 = vst [vmem:[%s216 + $0x4c] sm:$0xf] %v854
        %919 = vst [vmem:[%s216 + $0x50] sm:$0xf] %v855
        %920 = vst [vmem:[%s216 + $0x54] sm:$0xf] %v856
        %921 = vst [vmem:[%s216 + $0x58] sm:$0xf] %v857
        %922 = vst [vmem:[%s216 + $0x5c] sm:$0xf] %v858
        %923 = vst [vmem:[%s216 + $0x60] sm:$0xf] %v859
        %924 = vst [vmem:[%s216 + $0x64] sm:$0xf] %v860
        %925 = vst [vmem:[%s216 + $0x68] sm:$0xf] %v861
        %926 = vst [vmem:[%s216 + $0x6c] sm:$0xf] %v862
        %927 = vst [vmem:[%s216 + $0x70] sm:$0xf] %v863
        %928 = vst [vmem:[%s216 + $0x74] sm:$0xf] %v864
        %929 = vst [vmem:[%s216 + $0x78] sm:$0xf] %v865
        %930 = vst [vmem:[%s216 + $0x7c] sm:$0xf] %v866
      $region36: #{_lambda_.27} parent=27 // pred_fallthru
        _
      %s931 = smul.u32 32, %s18
      %p932 = scmp.lt.s32.totalorder %s931, 63
      %s933 = scalar_select %p932, %s931, 63
      %p934 = scmp.lt.s32.totalorder %s19, 0
      %s935 = scalar_select %p934, %s19, 0
      %s936 = sadd.s32 %s935, %s933
      %s937 = smul.addr %s936, 4
      %s938 = scalar_lea.vmem %s2, %s937
      // Predicated region
      $region37: #{_lambda_.27} parent=27 // pred_check
        %p939 = pneg %p108
      $region38: #{_lambda_.27} parent=27 // pred_check_branch
        %941 = sbr.rel (%p939) target = $region40
      $region39: #{_lambda_.27} parent=27 // pred_region
        %s942 = smul.u32 32, %s18
      $region40: #{_lambda_.27} parent=27 // pred_fallthru
        _
    $region28: #{_lambda_.27} parent=5 // pred_fallthru
      _
    %p943 = scmp.le.s32.totalorder 2, %s8
    // Predicated region
    $region41: #{_lambda_.27} parent=5 // pred_check
      %p944 = pneg %p943
    $region42: #{_lambda_.27} parent=5 // pred_check_branch
      %946 = sbr.rel (%p944) target = $region44
    $region43: #{_lambda_.27} parent=5 // pred_region
      %s947 = ssub.s32 %s8, 2
      // Predicated region
      $region45: #{_lambda_.27} parent=43 // pred_check
        %p948 = pneg %p114
      $region46: #{_lambda_.27} parent=43 // pred_check_branch
        %950 = sbr.rel (%p948) target = $region48
      $region47: #{_lambda_.27} parent=43 // pred_region
        %s951 = smul.u32 32, %s21
        %p952 = scmp.lt.s32.totalorder %s951, 63
        %s953 = scalar_select %p952, %s951, 63
        %p954 = scmp.lt.s32.totalorder %s22, 0
        %s955 = scalar_select %p954, %s22, 0
        %s956 = sadd.s32 %s955, %s953
        %s957 = smul.addr %s956, 4
        %s958 = scalar_lea.vmem %s2, %s957
      $region48: #{_lambda_.27} parent=43 // pred_fallthru
        _
    $region44: #{_lambda_.27} parent=5 // pred_fallthru
      _
  $region6: #{_lambda_.27} parent=0 // loop_footer
    %s12 = sadd.s32 1, %s8
  $region7: #{_lambda_.27} parent=0 // loop_footer_branch
    %7 = sbr.rel target = $region3
  $region8: #{_lambda_.27} parent=0 // loop_exit
    _

</llo_original>
